<compile_context>
chip_gen: v6e
topology: v6e:2x2x1
jax: 0.10.0
libtpu: 0.0.40
codegen_flags: <defaults>
</compile_context>

<pallas_src>
import jax
import jax.numpy as jnp
from jax.experimental import pallas as pl
from jax.experimental.pallas import tpu as pltpu

# The PyTorch forward hardcodes mask.reshape(16, 1, 100), i.e. B=16, T=100.
BLOCK_SIZE = 100   # T
N_EMBD = 50        # C
HEAD_SIZE = 16     # H
BATCH = 16         # B
DROPOUT = 0.2      # eval mode -> identity

MASK_NEG = -1e30   # large finite negative instead of -inf (NaN-safe)


def encoder_head_kernel(x_ref, wqkv_ref, bias_ref, o_ref, q_scr, k_scr, v_scr):
    """x_ref:    (b_blk*T_pad, C) flat slab of b_blk batch elements (row-padded)
       wqkv_ref: (C, 3H)          fused [q*scale | k | v] projection
       bias_ref: (b_blk, 1, T)    additive padding mask (0 / -1e30)
       o_ref:    (b_blk, T, H)
       q/k/v_scr:(b_blk*T_pad, H) VMEM scratch."""
    rows = x_ref.shape[0]
    b_blk, _, T = bias_ref.shape
    H = o_ref.shape[-1]
    T_pad = rows // b_blk

    # One fused QKV matmul for the entire slab (hoisted out of the batch loop),
    # split once into three scratch buffers so the loop only does row slices.
    qkv = jnp.dot(x_ref[...], wqkv_ref[...],
                  preferred_element_type=jnp.float32)           # (rows, 3H)
    q_scr[...] = qkv[:, 0:H]           # 1/sqrt(H) already folded into q cols
    k_scr[...] = qkv[:, H:2 * H]
    v_scr[...] = qkv[:, 2 * H:3 * H]

    def process(i):
        off = pl.multiple_of(i * T_pad, 8)                      # sublane-aligned
        q = q_scr[pl.ds(off, T), :]                             # (T, H)
        k = k_scr[pl.ds(off, T), :]
        v = v_scr[pl.ds(off, T), :]

        # att = (q * H^-0.5) @ k^T via a contraction over the head dim
        # (no explicit transpose -> stays on the MXU path).
        att = jax.lax.dot_general(q, k, (((1,), (1,)), ((), ())),
                                  preferred_element_type=jnp.float32)  # (T, T)
        att = att + bias_ref[i]                                 # (1, T) bcast

        # Softmax numerator; normalization deferred past the PV matmul.
        m = jnp.max(att, axis=-1, keepdims=True)
        e = jnp.exp(att - m)                                    # (T, T)
        denom = jnp.sum(e, axis=-1, keepdims=True)              # (T, 1)

        # TODO(synk): nn.Dropout(0.2) is the identity in eval mode; training-
        # mode dropout (pltpu.prng_seed + prng_random_bits) is not implemented.

        ev = jnp.dot(e, v, preferred_element_type=jnp.float32)  # (T, H)
        out_i = ev * pl.reciprocal(denom, approx=False)         # exact 1/denom
        o_ref[i] = out_i.astype(o_ref.dtype)

    # 2-way interleave: element 2j's softmax (VPU/EUP) overlaps element 2j+1's
    # attention matmuls (MXU) without blowing up vreg pressure.
    def body(j, carry):
        process(2 * j)
        process(2 * j + 1)
        return carry

    jax.lax.fori_loop(0, b_blk // 2, body, 0)
    if b_blk % 2:                       # static tail (b_blk is a Python int)
        process(b_blk - 1)


def _num_blocks(B):
    """Grid steps: single-TC chips (v5e/v6e) -> 1; v7x (2 TCs) -> 4."""
    kind = ""
    try:
        kind = jax.devices()[0].device_kind.lower()
    except Exception:
        pass
    if "v7" in kind:
        for n in (4, 2):
            if B % n == 0:
                return n
    return 1


def encoder_head(x, wk, wq, wv, mask):
    """x: (B, T, C) f32; wk/wq/wv: (C, H) f32; mask: (B, T) int32."""
    B, T, C = x.shape
    H = wk.shape[1]

    # Fold the attention scale into the q projection and fuse q/k/v weights.
    scale = jnp.float32(H) ** jnp.float32(-0.5)
    wqkv = jnp.concatenate([wq * scale, wk, wv], axis=1)        # (C, 3H)

    # Additive mask bias: 0 where valid, -1e30 where padded (NaN-safe).
    bias = jnp.where(mask == 0, jnp.float32(MASK_NEG),
                     jnp.float32(0.0)).reshape(B, 1, T)

    # Pad the sequence length to a multiple of 8 so per-batch row offsets in
    # the kernel are sublane-aligned, and pass a flat (B*T_pad, C) slab.
    T_pad = ((T + 7) // 8) * 8
    x_p = x if T_pad == T else jnp.pad(x, ((0, 0), (0, T_pad - T), (0, 0)))
    x2d = x_p.reshape(B * T_pad, C)

    n_blocks = _num_blocks(B)
    b_blk = B // n_blocks
    rows_blk = b_blk * T_pad

    return pl.pallas_call(
        encoder_head_kernel,
        out_shape=jax.ShapeDtypeStruct((B, T, H), x.dtype),
        grid=(n_blocks,),
        in_specs=[
            pl.BlockSpec((rows_blk, C), lambda b: (b, 0)),      # x slab (flat)
            pl.BlockSpec((C, 3 * H), lambda b: (0, 0)),         # fused Wqkv
            pl.BlockSpec((b_blk, 1, T), lambda b: (b, 0, 0)),   # additive mask
        ],
        out_specs=pl.BlockSpec((b_blk, T, H), lambda b: (b, 0, 0)),
        scratch_shapes=[pltpu.VMEM((rows_blk, H), jnp.float32)] * 3,
        compiler_params=pltpu.CompilerParams(
            dimension_semantics=("parallel",)),
    )(x2d, wqkv, bias)


def reference(x, wk, wq, wv, mask):
    """Pure-JAX reference mirroring the PyTorch forward (eval mode)."""
    B, T, C = x.shape
    k = x @ wk
    q = x @ wq
    v = x @ wv
    att = (q @ jnp.swapaxes(k, -2, -1)) * (k.shape[-1] ** -0.5)
    att = jnp.where(mask.reshape(B, 1, T) == 0, -jnp.inf, att)
    att = jax.nn.softmax(att, axis=-1)
    return att @ v


if __name__ == "__main__":
    key = jax.random.PRNGKey(0)
    kx, kk, kq, kv, km = jax.random.split(key, 5)

    B, T, C, H = BATCH, BLOCK_SIZE, N_EMBD, HEAD_SIZE

    x = jax.random.normal(kx, (B, T, C), dtype=jnp.float32)
    # Deterministic parameter init (synthetic weights, Linear bias=False).
    wk = jax.random.normal(kk, (C, H), dtype=jnp.float32) * (C ** -0.5)
    wq = jax.random.normal(kq, (C, H), dtype=jnp.float32) * (C ** -0.5)
    wv = jax.random.normal(kv, (C, H), dtype=jnp.float32) * (C ** -0.5)

    # Padding-style mask: each batch element has a random valid prefix length.
    lengths = jax.random.randint(km, (B,), minval=1, maxval=T + 1)
    mask = (jnp.arange(T)[None, :] < lengths[:, None]).astype(jnp.int32)  # (B, T)

    out = encoder_head(x, wk, wq, wv, mask)
    out = jax.block_until_ready(out)

    ref = reference(x, wk, wq, wv, mask)
    assert out.shape == (B, T, H)
    assert jnp.allclose(out, ref, atol=1e-4, rtol=1e-4), "mismatch vs reference"

    print("KERNEL_OK")
</pallas_src>

<mosaic_0001>
module attributes {stable_mosaic.version = 11 : i64} {
  func.func @encoder_head_kernel(%arg0: i32, %arg1: memref<1664x50xf32, #tpu.memory_space<vmem>>, %arg2: memref<50x48xf32, #tpu.memory_space<vmem>>, %arg3: memref<16x1x100xf32, #tpu.memory_space<vmem>>, %arg4: memref<16x100x16xf32, #tpu.memory_space<vmem>>, %arg5: memref<1664x16xf32, #tpu.memory_space<vmem>>, %arg6: memref<1664x16xf32, #tpu.memory_space<vmem>>, %arg7: memref<1664x16xf32, #tpu.memory_space<vmem>>) attributes {dimension_semantics = [#tpu.dimension_semantics<parallel>], iteration_bounds = array<i64: 1>, scalar_prefetch = 0 : i64, scratch_operands = 3 : i64, tpu.core_type = #tpu.core_type<tc>, window_params = [{transform_indices = @transform_0, window_bounds = array<i64: 1664, 50>}, {pipeline_mode = #tpu.pipeline_mode<synchronous>, transform_indices = @transform_1, window_bounds = array<i64: 50, 48>}, {transform_indices = @transform_2, window_bounds = array<i64: 16, 1, 100>}, {transform_indices = @transform_3, window_bounds = array<i64: 16, 100, 16>}]} {
    %c0 = arith.constant 0 : index
    %c0_0 = arith.constant 0 : index
    %0 = vector.load %arg1[%c0, %c0_0] : memref<1664x50xf32, #tpu.memory_space<vmem>>, vector<1664x50xf32>
    %c0_1 = arith.constant 0 : index
    %c0_2 = arith.constant 0 : index
    %1 = vector.load %arg2[%c0_1, %c0_2] : memref<50x48xf32, #tpu.memory_space<vmem>>, vector<50x48xf32>
    %cst = arith.constant dense<0.000000e+00> : vector<1664x48xf32>
    %2 = tpu.matmul %0, %1, %cst {dimension_numbers = #tpu.dot_dimension_numbers<[1], [0], [0], [1], [0, 0, 1, 1], [], []>} : vector<1664x50xf32>, vector<50x48xf32>, vector<1664x48xf32> -> vector<1664x48xf32>
    %3 = vector.extract_strided_slice %2 {offsets = [0, 0], sizes = [1664, 16], strides = [1, 1]} : vector<1664x48xf32> to vector<1664x16xf32>
    %c0_3 = arith.constant 0 : index
    %c0_4 = arith.constant 0 : index
    %4 = vector.load %arg5[%c0_3, %c0_4] : memref<1664x16xf32, #tpu.memory_space<vmem>>, vector<1664x16xf32>
    tpu.vector_store %arg5[%c0_3, %c0_4], %3 {strides = array<i32>} : memref<1664x16xf32, #tpu.memory_space<vmem>>, vector<1664x16xf32>,
    %5 = vector.extract_strided_slice %2 {offsets = [0, 16], sizes = [1664, 16], strides = [1, 1]} : vector<1664x48xf32> to vector<1664x16xf32>
    %c0_5 = arith.constant 0 : index
    %c0_6 = arith.constant 0 : index
    %6 = vector.load %arg6[%c0_5, %c0_6] : memref<1664x16xf32, #tpu.memory_space<vmem>>, vector<1664x16xf32>
    tpu.vector_store %arg6[%c0_5, %c0_6], %5 {strides = array<i32>} : memref<1664x16xf32, #tpu.memory_space<vmem>>, vector<1664x16xf32>,
    %7 = vector.extract_strided_slice %2 {offsets = [0, 32], sizes = [1664, 16], strides = [1, 1]} : vector<1664x48xf32> to vector<1664x16xf32>
    %c0_7 = arith.constant 0 : index
    %c0_8 = arith.constant 0 : index
    %8 = vector.load %arg7[%c0_7, %c0_8] : memref<1664x16xf32, #tpu.memory_space<vmem>>, vector<1664x16xf32>
    tpu.vector_store %arg7[%c0_7, %c0_8], %7 {strides = array<i32>} : memref<1664x16xf32, #tpu.memory_space<vmem>>, vector<1664x16xf32>,
    %c0_i32 = arith.constant 0 : i32
    %c8_i32 = arith.constant 8 : i32
    %9 = arith.addi %c0_i32, %c8_i32 : i32
    %c1_i32 = arith.constant 1 : i32
    scf.for %arg8 = %c0_i32 to %9 step %c1_i32  : i32 {
      %c2_i32 = arith.constant 2 : i32
      %10 = arith.muli %c2_i32, %arg8 : i32
      %c104_i32 = arith.constant 104 : i32
      %11 = arith.muli %10, %c104_i32 : i32
      %12 = tpu.assume_multiple %11, 8 : i32
      %13 = arith.index_cast %12 : i32 to index
      %c0_10 = arith.constant 0 : index
      %14 = vector.load %arg5[%13, %c0_10] : memref<1664x16xf32, #tpu.memory_space<vmem>>, vector<100x16xf32>
      %15 = arith.index_cast %12 : i32 to index
      %c0_11 = arith.constant 0 : index
      %16 = vector.load %arg6[%15, %c0_11] : memref<1664x16xf32, #tpu.memory_space<vmem>>, vector<100x16xf32>
      %17 = arith.index_cast %12 : i32 to index
      %c0_12 = arith.constant 0 : index
      %18 = vector.load %arg7[%17, %c0_12] : memref<1664x16xf32, #tpu.memory_space<vmem>>, vector<100x16xf32>
      %cst_13 = arith.constant dense<0.000000e+00> : vector<100x100xf32>
      %19 = tpu.matmul %14, %16, %cst_13 {dimension_numbers = #tpu.dot_dimension_numbers<[1], [1], [0], [0], [0, 0, 1, 0], [], []>} : vector<100x16xf32>, vector<100x16xf32>, vector<100x100xf32> -> vector<100x100xf32>
      %20 = arith.index_cast %10 : i32 to index
      %c0_14 = arith.constant 0 : index
      %c0_15 = arith.constant 0 : index
      %21 = vector.load %arg3[%20, %c0_14, %c0_15] : memref<16x1x100xf32, #tpu.memory_space<vmem>>, vector<1x1x100xf32>
      %22 = vector.shape_cast %21 : vector<1x1x100xf32> to vector<1x100xf32>
      %23 = vector.broadcast %22 : vector<1x100xf32> to vector<100x100xf32>
      %24 = arith.addf %19, %23 : vector<100x100xf32>
      %cst_16 = arith.constant dense<0xFF800000> : vector<100xf32>
      %25 = vector.multi_reduction <maximumf>, %24, %cst_16 [1] : vector<100x100xf32> to vector<100xf32>
      %26 = vector.shape_cast %25 : vector<100xf32> to vector<100x1xf32>
      %27 = vector.broadcast %26 : vector<100x1xf32> to vector<100x100xf32>
      %28 = arith.subf %24, %27 : vector<100x100xf32>
      %29 = math.exp %28 : vector<100x100xf32>
      %cst_17 = arith.constant dense<0.000000e+00> : vector<100xf32>
      %30 = vector.multi_reduction <add>, %29, %cst_17 [1] : vector<100x100xf32> to vector<100xf32>
      %31 = vector.shape_cast %30 : vector<100xf32> to vector<100x1xf32>
      %cst_18 = arith.constant dense<0.000000e+00> : vector<100x16xf32>
      %32 = tpu.matmul %29, %18, %cst_18 {dimension_numbers = #tpu.dot_dimension_numbers<[1], [0], [0], [1], [0, 0, 1, 1], [], []>} : vector<100x100xf32>, vector<100x16xf32>, vector<100x16xf32> -> vector<100x16xf32>
      %33 = tpu.reciprocal %31 : vector<100x1xf32> -> vector<100x1xf32>
      %34 = vector.broadcast %33 : vector<100x1xf32> to vector<100x16xf32>
      %35 = arith.mulf %32, %34 : vector<100x16xf32>
      %36 = arith.index_cast %10 : i32 to index
      %c0_19 = arith.constant 0 : index
      %c0_20 = arith.constant 0 : index
      %37 = vector.load %arg4[%36, %c0_19, %c0_20] : memref<16x100x16xf32, #tpu.memory_space<vmem>>, vector<1x100x16xf32>
      %38 = vector.shape_cast %37 : vector<1x100x16xf32> to vector<100x16xf32>
      %39 = vector.shape_cast %35 : vector<100x16xf32> to vector<1x100x16xf32>
      tpu.vector_store %arg4[%36, %c0_19, %c0_20], %39 {strides = array<i32>} : memref<16x100x16xf32, #tpu.memory_space<vmem>>, vector<1x100x16xf32>,
      %c2_i32_21 = arith.constant 2 : i32
      %40 = arith.muli %c2_i32_21, %arg8 : i32
      %c1_i32_22 = arith.constant 1 : i32
      %41 = arith.addi %40, %c1_i32_22 : i32
      %c104_i32_23 = arith.constant 104 : i32
      %42 = arith.muli %41, %c104_i32_23 : i32
      %43 = tpu.assume_multiple %42, 8 : i32
      %44 = arith.index_cast %43 : i32 to index
      %c0_24 = arith.constant 0 : index
      %45 = vector.load %arg5[%44, %c0_24] : memref<1664x16xf32, #tpu.memory_space<vmem>>, vector<100x16xf32>
      %46 = arith.index_cast %43 : i32 to index
      %c0_25 = arith.constant 0 : index
      %47 = vector.load %arg6[%46, %c0_25] : memref<1664x16xf32, #tpu.memory_space<vmem>>, vector<100x16xf32>
      %48 = arith.index_cast %43 : i32 to index
      %c0_26 = arith.constant 0 : index
      %49 = vector.load %arg7[%48, %c0_26] : memref<1664x16xf32, #tpu.memory_space<vmem>>, vector<100x16xf32>
      %cst_27 = arith.constant dense<0.000000e+00> : vector<100x100xf32>
      %50 = tpu.matmul %45, %47, %cst_27 {dimension_numbers = #tpu.dot_dimension_numbers<[1], [1], [0], [0], [0, 0, 1, 0], [], []>} : vector<100x16xf32>, vector<100x16xf32>, vector<100x100xf32> -> vector<100x100xf32>
      %51 = arith.index_cast %41 : i32 to index
      %c0_28 = arith.constant 0 : index
      %c0_29 = arith.constant 0 : index
      %52 = vector.load %arg3[%51, %c0_28, %c0_29] : memref<16x1x100xf32, #tpu.memory_space<vmem>>, vector<1x1x100xf32>
      %53 = vector.shape_cast %52 : vector<1x1x100xf32> to vector<1x100xf32>
      %54 = vector.broadcast %53 : vector<1x100xf32> to vector<100x100xf32>
      %55 = arith.addf %50, %54 : vector<100x100xf32>
      %cst_30 = arith.constant dense<0xFF800000> : vector<100xf32>
      %56 = vector.multi_reduction <maximumf>, %55, %cst_30 [1] : vector<100x100xf32> to vector<100xf32>
      %57 = vector.shape_cast %56 : vector<100xf32> to vector<100x1xf32>
      %58 = vector.broadcast %57 : vector<100x1xf32> to vector<100x100xf32>
      %59 = arith.subf %55, %58 : vector<100x100xf32>
      %60 = math.exp %59 : vector<100x100xf32>
      %cst_31 = arith.constant dense<0.000000e+00> : vector<100xf32>
      %61 = vector.multi_reduction <add>, %60, %cst_31 [1] : vector<100x100xf32> to vector<100xf32>
      %62 = vector.shape_cast %61 : vector<100xf32> to vector<100x1xf32>
      %cst_32 = arith.constant dense<0.000000e+00> : vector<100x16xf32>
      %63 = tpu.matmul %60, %49, %cst_32 {dimension_numbers = #tpu.dot_dimension_numbers<[1], [0], [0], [1], [0, 0, 1, 1], [], []>} : vector<100x100xf32>, vector<100x16xf32>, vector<100x16xf32> -> vector<100x16xf32>
      %64 = tpu.reciprocal %62 : vector<100x1xf32> -> vector<100x1xf32>
      %65 = vector.broadcast %64 : vector<100x1xf32> to vector<100x16xf32>
      %66 = arith.mulf %63, %65 : vector<100x16xf32>
      %67 = arith.index_cast %41 : i32 to index
      %c0_33 = arith.constant 0 : index
      %c0_34 = arith.constant 0 : index
      %68 = vector.load %arg4[%67, %c0_33, %c0_34] : memref<16x100x16xf32, #tpu.memory_space<vmem>>, vector<1x100x16xf32>
      %69 = vector.shape_cast %68 : vector<1x100x16xf32> to vector<100x16xf32>
      %70 = vector.shape_cast %66 : vector<100x16xf32> to vector<1x100x16xf32>
      tpu.vector_store %arg4[%67, %c0_33, %c0_34], %70 {strides = array<i32>} : memref<16x100x16xf32, #tpu.memory_space<vmem>>, vector<1x100x16xf32>,
    }
    %c8_i32_9 = arith.constant 8 : i32
    return
  }
  func.func @transform_0(%arg0: i32) -> (i32, i32) {
    %c0_i32 = arith.constant 0 : i32
    %c0_i32_0 = arith.constant 0 : i32
    return %arg0, %c0_i32 : i32, i32
  }
  func.func @transform_1(%arg0: i32) -> (i32, i32) {
    %c0_i32 = arith.constant 0 : i32
    %c0_i32_0 = arith.constant 0 : i32
    %c0_i32_1 = arith.constant 0 : i32
    return %c0_i32, %c0_i32_0 : i32, i32
  }
  func.func @transform_2(%arg0: i32) -> (i32, i32, i32) {
    %c0_i32 = arith.constant 0 : i32
    %c0_i32_0 = arith.constant 0 : i32
    %c0_i32_1 = arith.constant 0 : i32
    return %arg0, %c0_i32, %c0_i32_0 : i32, i32, i32
  }
  func.func @transform_3(%arg0: i32) -> (i32, i32, i32) {
    %c0_i32 = arith.constant 0 : i32
    %c0_i32_0 = arith.constant 0 : i32
    %c0_i32_1 = arith.constant 0 : i32
    return %arg0, %c0_i32, %c0_i32_0 : i32, i32, i32
  }
}

</mosaic_0001>

<llo_original>
// kernel: tpu_custom_call.1
$region0: #{tpu_custom_call.1}
  #allocation0 [shape = 'u32[]', space=smem, size = 0x4, offset = 0x4, fixed_abs, tag = 'smem constant byte address 0x4 - core index']
  #allocation1 [shape = 'u32[144,128]{1,0:T(1,128)}', space=vmem, size = 0x12000, scoped, tag = 'internal scratch']
  #allocation2 [shape = 'f32[1664,16]{1,0:T(8,128)}', space=vmem, size = 0xd0000, scoped, tag = 'scratch operand']
  #allocation3 [shape = 'f32[1664,16]{1,0:T(8,128)}', space=vmem, size = 0xd0000, scoped, tag = 'scratch operand']
  #allocation4 [shape = 'f32[1664,16]{1,0:T(8,128)}', space=vmem, size = 0xd0000, scoped, tag = 'scratch operand']
  %s0 = inlined_call_operand.vmem [shape: f32[1664,50], index: 0, kind: input, shape index: {}]
  %s1 = inlined_call_operand.vmem [shape: f32[50,48], index: 1, kind: input, shape index: {}]
  %s2 = inlined_call_operand.vmem [shape: f32[16,1,100], index: 2, kind: input, shape index: {}]
  %s3 = inlined_call_operand.vmem [shape: f32[16,100,16], index: 3, kind: output, shape index: {}]
  %s4 = sld [smem:[#allocation0]]
  $region29: #{tpu_custom_call.1} parent=0
    _
  %s6 = ssub.s32 1, %s4
  %s7 = scalar_select 0, %s6, %s4
  // Predicated region
  $region2: #{tpu_custom_call.1} parent=0 // pred_check
    _
  $region3: #{tpu_custom_call.1} parent=0 // pred_check_branch
    %9 = sbr.rel (0) target = $region5
  $region4: #{tpu_custom_call.1} parent=0 // pred_region
    _
  $region5: #{tpu_custom_call.1} parent=0 // pred_fallthru
    _
  // Predicated region
  $region6: #{tpu_custom_call.1} parent=0 // pred_check
    _
  $region7: #{tpu_custom_call.1} parent=0 // pred_check_branch
    %11 = sbr.rel (0) target = $region9
  $region8: #{tpu_custom_call.1} parent=0 // pred_region
    _
  $region9: #{tpu_custom_call.1} parent=0 // pred_fallthru
    _
  // Predicated region
  $region10: #{tpu_custom_call.1} parent=0 // pred_check
    _
  $region11: #{tpu_custom_call.1} parent=0 // pred_check_branch
    %13 = sbr.rel (0) target = $region13
  $region12: #{tpu_custom_call.1} parent=0 // pred_region
    _
  $region13: #{tpu_custom_call.1} parent=0 // pred_fallthru
    _
  %v14 = vld [vmem:[%s0] sm:$0xff]
  %v15 = vld [vmem:[%s0 + $0x8] sm:$0xff]
  %v16 = vld [vmem:[%s0 + $0x10] sm:$0xff]
  %v17 = vld [vmem:[%s0 + $0x18] sm:$0xff]
  %v18 = vld [vmem:[%s0 + $0x20] sm:$0xff]
  %v19 = vld [vmem:[%s0 + $0x28] sm:$0xff]
  %v20 = vld [vmem:[%s0 + $0x30] sm:$0xff]
  %v21 = vld [vmem:[%s0 + $0x38] sm:$0xff]
  %v22 = vld [vmem:[%s0 + $0x40] sm:$0xff]
  %v23 = vld [vmem:[%s0 + $0x48] sm:$0xff]
  %v24 = vld [vmem:[%s0 + $0x50] sm:$0xff]
  %v25 = vld [vmem:[%s0 + $0x58] sm:$0xff]
  %v26 = vld [vmem:[%s0 + $0x60] sm:$0xff]
  %v27 = vld [vmem:[%s0 + $0x68] sm:$0xff]
  %v28 = vld [vmem:[%s0 + $0x70] sm:$0xff]
  %v29 = vld [vmem:[%s0 + $0x78] sm:$0xff]
  %v30 = vld [vmem:[%s0 + $0x80] sm:$0xff]
  %v31 = vld [vmem:[%s0 + $0x88] sm:$0xff]
  %v32 = vld [vmem:[%s0 + $0x90] sm:$0xff]
  %v33 = vld [vmem:[%s0 + $0x98] sm:$0xff]
  %v34 = vld [vmem:[%s0 + $0xa0] sm:$0xff]
  %v35 = vld [vmem:[%s0 + $0xa8] sm:$0xff]
  %v36 = vld [vmem:[%s0 + $0xb0] sm:$0xff]
  %v37 = vld [vmem:[%s0 + $0xb8] sm:$0xff]
  %v38 = vld [vmem:[%s0 + $0xc0] sm:$0xff]
  %v39 = vld [vmem:[%s0 + $0xc8] sm:$0xff]
  %v40 = vld [vmem:[%s0 + $0xd0] sm:$0xff]
  %v41 = vld [vmem:[%s0 + $0xd8] sm:$0xff]
  %v42 = vld [vmem:[%s0 + $0xe0] sm:$0xff]
  %v43 = vld [vmem:[%s0 + $0xe8] sm:$0xff]
  %v44 = vld [vmem:[%s0 + $0xf0] sm:$0xff]
  %v45 = vld [vmem:[%s0 + $0xf8] sm:$0xff]
  %v46 = vld [vmem:[%s0 + $0x100] sm:$0xff]
  %v47 = vld [vmem:[%s0 + $0x108] sm:$0xff]
  %v48 = vld [vmem:[%s0 + $0x110] sm:$0xff]
  %v49 = vld [vmem:[%s0 + $0x118] sm:$0xff]
  %v50 = vld [vmem:[%s0 + $0x120] sm:$0xff]
  %v51 = vld [vmem:[%s0 + $0x128] sm:$0xff]
  %v52 = vld [vmem:[%s0 + $0x130] sm:$0xff]
  %v53 = vld [vmem:[%s0 + $0x138] sm:$0xff]
  %v54 = vld [vmem:[%s0 + $0x140] sm:$0xff]
  %v55 = vld [vmem:[%s0 + $0x148] sm:$0xff]
  %v56 = vld [vmem:[%s0 + $0x150] sm:$0xff]
  %v57 = vld [vmem:[%s0 + $0x158] sm:$0xff]
  %v58 = vld [vmem:[%s0 + $0x160] sm:$0xff]
  %v59 = vld [vmem:[%s0 + $0x168] sm:$0xff]
  %v60 = vld [vmem:[%s0 + $0x170] sm:$0xff]
  %v61 = vld [vmem:[%s0 + $0x178] sm:$0xff]
  %v62 = vld [vmem:[%s0 + $0x180] sm:$0xff]
  %v63 = vld [vmem:[%s0 + $0x188] sm:$0xff]
  %v64 = vld [vmem:[%s0 + $0x190] sm:$0xff]
  %v65 = vld [vmem:[%s0 + $0x198] sm:$0xff]
  %v66 = vld [vmem:[%s0 + $0x1a0] sm:$0xff]
  %v67 = vld [vmem:[%s0 + $0x1a8] sm:$0xff]
  %v68 = vld [vmem:[%s0 + $0x1b0] sm:$0xff]
  %v69 = vld [vmem:[%s0 + $0x1b8] sm:$0xff]
  %v70 = vld [vmem:[%s0 + $0x1c0] sm:$0xff]
  %v71 = vld [vmem:[%s0 + $0x1c8] sm:$0xff]
  %v72 = vld [vmem:[%s0 + $0x1d0] sm:$0xff]
  %v73 = vld [vmem:[%s0 + $0x1d8] sm:$0xff]
  %v74 = vld [vmem:[%s0 + $0x1e0] sm:$0xff]
  %v75 = vld [vmem:[%s0 + $0x1e8] sm:$0xff]
  %v76 = vld [vmem:[%s0 + $0x1f0] sm:$0xff]
  %v77 = vld [vmem:[%s0 + $0x1f8] sm:$0xff]
  %v78 = vld [vmem:[%s0 + $0x200] sm:$0xff]
  %v79 = vld [vmem:[%s0 + $0x208] sm:$0xff]
  %v80 = vld [vmem:[%s0 + $0x210] sm:$0xff]
  %v81 = vld [vmem:[%s0 + $0x218] sm:$0xff]
  %v82 = vld [vmem:[%s0 + $0x220] sm:$0xff]
  %v83 = vld [vmem:[%s0 + $0x228] sm:$0xff]
  %v84 = vld [vmem:[%s0 + $0x230] sm:$0xff]
  %v85 = vld [vmem:[%s0 + $0x238] sm:$0xff]
  %v86 = vld [vmem:[%s0 + $0x240] sm:$0xff]
  %v87 = vld [vmem:[%s0 + $0x248] sm:$0xff]
  %v88 = vld [vmem:[%s0 + $0x250] sm:$0xff]
  %v89 = vld [vmem:[%s0 + $0x258] sm:$0xff]
  %v90 = vld [vmem:[%s0 + $0x260] sm:$0xff]
  %v91 = vld [vmem:[%s0 + $0x268] sm:$0xff]
  %v92 = vld [vmem:[%s0 + $0x270] sm:$0xff]
  %v93 = vld [vmem:[%s0 + $0x278] sm:$0xff]
  %v94 = vld [vmem:[%s0 + $0x280] sm:$0xff]
  %v95 = vld [vmem:[%s0 + $0x288] sm:$0xff]
  %v96 = vld [vmem:[%s0 + $0x290] sm:$0xff]
  %v97 = vld [vmem:[%s0 + $0x298] sm:$0xff]
  %v98 = vld [vmem:[%s0 + $0x2a0] sm:$0xff]
  %v99 = vld [vmem:[%s0 + $0x2a8] sm:$0xff]
  %v100 = vld [vmem:[%s0 + $0x2b0] sm:$0xff]
  %v101 = vld [vmem:[%s0 + $0x2b8] sm:$0xff]
  %v102 = vld [vmem:[%s0 + $0x2c0] sm:$0xff]
  %v103 = vld [vmem:[%s0 + $0x2c8] sm:$0xff]
  %v104 = vld [vmem:[%s0 + $0x2d0] sm:$0xff]
  %v105 = vld [vmem:[%s0 + $0x2d8] sm:$0xff]
  %v106 = vld [vmem:[%s0 + $0x2e0] sm:$0xff]
  %v107 = vld [vmem:[%s0 + $0x2e8] sm:$0xff]
  %v108 = vld [vmem:[%s0 + $0x2f0] sm:$0xff]
  %v109 = vld [vmem:[%s0 + $0x2f8] sm:$0xff]
  %v110 = vld [vmem:[%s0 + $0x300] sm:$0xff]
  %v111 = vld [vmem:[%s0 + $0x308] sm:$0xff]
  %v112 = vld [vmem:[%s0 + $0x310] sm:$0xff]
  %v113 = vld [vmem:[%s0 + $0x318] sm:$0xff]
  %v114 = vld [vmem:[%s0 + $0x320] sm:$0xff]
  %v115 = vld [vmem:[%s0 + $0x328] sm:$0xff]
  %v116 = vld [vmem:[%s0 + $0x330] sm:$0xff]
  %v117 = vld [vmem:[%s0 + $0x338] sm:$0xff]
  %v118 = vld [vmem:[%s0 + $0x340] sm:$0xff]
  %v119 = vld [vmem:[%s0 + $0x348] sm:$0xff]
  %v120 = vld [vmem:[%s0 + $0x350] sm:$0xff]
  %v121 = vld [vmem:[%s0 + $0x358] sm:$0xff]
  %v122 = vld [vmem:[%s0 + $0x360] sm:$0xff]
  %v123 = vld [vmem:[%s0 + $0x368] sm:$0xff]
  %v124 = vld [vmem:[%s0 + $0x370] sm:$0xff]
  %v125 = vld [vmem:[%s0 + $0x378] sm:$0xff]
  %v126 = vld [vmem:[%s0 + $0x380] sm:$0xff]
  %v127 = vld [vmem:[%s0 + $0x388] sm:$0xff]
  %v128 = vld [vmem:[%s0 + $0x390] sm:$0xff]
  %v129 = vld [vmem:[%s0 + $0x398] sm:$0xff]
  %v130 = vld [vmem:[%s0 + $0x3a0] sm:$0xff]
  %v131 = vld [vmem:[%s0 + $0x3a8] sm:$0xff]
  %v132 = vld [vmem:[%s0 + $0x3b0] sm:$0xff]
  %v133 = vld [vmem:[%s0 + $0x3b8] sm:$0xff]
  %v134 = vld [vmem:[%s0 + $0x3c0] sm:$0xff]
  %v135 = vld [vmem:[%s0 + $0x3c8] sm:$0xff]
  %v136 = vld [vmem:[%s0 + $0x3d0] sm:$0xff]
  %v137 = vld [vmem:[%s0 + $0x3d8] sm:$0xff]
  %v138 = vld [vmem:[%s0 + $0x3e0] sm:$0xff]
  %v139 = vld [vmem:[%s0 + $0x3e8] sm:$0xff]
  %v140 = vld [vmem:[%s0 + $0x3f0] sm:$0xff]
  %v141 = vld [vmem:[%s0 + $0x3f8] sm:$0xff]
  %v142 = vld [vmem:[%s0 + $0x400] sm:$0xff]
  %v143 = vld [vmem:[%s0 + $0x408] sm:$0xff]
  %v144 = vld [vmem:[%s0 + $0x410] sm:$0xff]
  %v145 = vld [vmem:[%s0 + $0x418] sm:$0xff]
  %v146 = vld [vmem:[%s0 + $0x420] sm:$0xff]
  %v147 = vld [vmem:[%s0 + $0x428] sm:$0xff]
  %v148 = vld [vmem:[%s0 + $0x430] sm:$0xff]
  %v149 = vld [vmem:[%s0 + $0x438] sm:$0xff]
  %v150 = vld [vmem:[%s0 + $0x440] sm:$0xff]
  %v151 = vld [vmem:[%s0 + $0x448] sm:$0xff]
  %v152 = vld [vmem:[%s0 + $0x450] sm:$0xff]
  %v153 = vld [vmem:[%s0 + $0x458] sm:$0xff]
  %v154 = vld [vmem:[%s0 + $0x460] sm:$0xff]
  %v155 = vld [vmem:[%s0 + $0x468] sm:$0xff]
  %v156 = vld [vmem:[%s0 + $0x470] sm:$0xff]
  %v157 = vld [vmem:[%s0 + $0x478] sm:$0xff]
  %v158 = vld [vmem:[%s0 + $0x480] sm:$0xff]
  %v159 = vld [vmem:[%s0 + $0x488] sm:$0xff]
  %v160 = vld [vmem:[%s0 + $0x490] sm:$0xff]
  %v161 = vld [vmem:[%s0 + $0x498] sm:$0xff]
  %v162 = vld [vmem:[%s0 + $0x4a0] sm:$0xff]
  %v163 = vld [vmem:[%s0 + $0x4a8] sm:$0xff]
  %v164 = vld [vmem:[%s0 + $0x4b0] sm:$0xff]
  %v165 = vld [vmem:[%s0 + $0x4b8] sm:$0xff]
  %v166 = vld [vmem:[%s0 + $0x4c0] sm:$0xff]
  %v167 = vld [vmem:[%s0 + $0x4c8] sm:$0xff]
  %v168 = vld [vmem:[%s0 + $0x4d0] sm:$0xff]
  %v169 = vld [vmem:[%s0 + $0x4d8] sm:$0xff]
  %v170 = vld [vmem:[%s0 + $0x4e0] sm:$0xff]
  %v171 = vld [vmem:[%s0 + $0x4e8] sm:$0xff]
  %v172 = vld [vmem:[%s0 + $0x4f0] sm:$0xff]
  %v173 = vld [vmem:[%s0 + $0x4f8] sm:$0xff]
  %v174 = vld [vmem:[%s0 + $0x500] sm:$0xff]
  %v175 = vld [vmem:[%s0 + $0x508] sm:$0xff]
  %v176 = vld [vmem:[%s0 + $0x510] sm:$0xff]
  %v177 = vld [vmem:[%s0 + $0x518] sm:$0xff]
  %v178 = vld [vmem:[%s0 + $0x520] sm:$0xff]
  %v179 = vld [vmem:[%s0 + $0x528] sm:$0xff]
  %v180 = vld [vmem:[%s0 + $0x530] sm:$0xff]
  %v181 = vld [vmem:[%s0 + $0x538] sm:$0xff]
  %v182 = vld [vmem:[%s0 + $0x540] sm:$0xff]
  %v183 = vld [vmem:[%s0 + $0x548] sm:$0xff]
  %v184 = vld [vmem:[%s0 + $0x550] sm:$0xff]
  %v185 = vld [vmem:[%s0 + $0x558] sm:$0xff]
  %v186 = vld [vmem:[%s0 + $0x560] sm:$0xff]
  %v187 = vld [vmem:[%s0 + $0x568] sm:$0xff]
  %v188 = vld [vmem:[%s0 + $0x570] sm:$0xff]
  %v189 = vld [vmem:[%s0 + $0x578] sm:$0xff]
  %v190 = vld [vmem:[%s0 + $0x580] sm:$0xff]
  %v191 = vld [vmem:[%s0 + $0x588] sm:$0xff]
  %v192 = vld [vmem:[%s0 + $0x590] sm:$0xff]
  %v193 = vld [vmem:[%s0 + $0x598] sm:$0xff]
  %v194 = vld [vmem:[%s0 + $0x5a0] sm:$0xff]
  %v195 = vld [vmem:[%s0 + $0x5a8] sm:$0xff]
  %v196 = vld [vmem:[%s0 + $0x5b0] sm:$0xff]
  %v197 = vld [vmem:[%s0 + $0x5b8] sm:$0xff]
  %v198 = vld [vmem:[%s0 + $0x5c0] sm:$0xff]
  %v199 = vld [vmem:[%s0 + $0x5c8] sm:$0xff]
  %v200 = vld [vmem:[%s0 + $0x5d0] sm:$0xff]
  %v201 = vld [vmem:[%s0 + $0x5d8] sm:$0xff]
  %v202 = vld [vmem:[%s0 + $0x5e0] sm:$0xff]
  %v203 = vld [vmem:[%s0 + $0x5e8] sm:$0xff]
  %v204 = vld [vmem:[%s0 + $0x5f0] sm:$0xff]
  %v205 = vld [vmem:[%s0 + $0x5f8] sm:$0xff]
  %v206 = vld [vmem:[%s0 + $0x600] sm:$0xff]
  %v207 = vld [vmem:[%s0 + $0x608] sm:$0xff]
  %v208 = vld [vmem:[%s0 + $0x610] sm:$0xff]
  %v209 = vld [vmem:[%s0 + $0x618] sm:$0xff]
  %v210 = vld [vmem:[%s0 + $0x620] sm:$0xff]
  %v211 = vld [vmem:[%s0 + $0x628] sm:$0xff]
  %v212 = vld [vmem:[%s0 + $0x630] sm:$0xff]
  %v213 = vld [vmem:[%s0 + $0x638] sm:$0xff]
  %v214 = vld [vmem:[%s0 + $0x640] sm:$0xff]
  %v215 = vld [vmem:[%s0 + $0x648] sm:$0xff]
  %v216 = vld [vmem:[%s0 + $0x650] sm:$0xff]
  %v217 = vld [vmem:[%s0 + $0x658] sm:$0xff]
  %v218 = vld [vmem:[%s0 + $0x660] sm:$0xff]
  %v219 = vld [vmem:[%s0 + $0x668] sm:$0xff]
  %v220 = vld [vmem:[%s0 + $0x670] sm:$0xff]
  %v221 = vld [vmem:[%s0 + $0x678] sm:$0xff]
  %v222 = vld [vmem:[%s1] sm:$0xff]
  %v223 = vld [vmem:[%s1 + $0x8] sm:$0xff]
  %v224 = vld [vmem:[%s1 + $0x10] sm:$0xff]
  %v225 = vld [vmem:[%s1 + $0x18] sm:$0xff]
  %v226 = vld [vmem:[%s1 + $0x20] sm:$0xff]
  %v227 = vld [vmem:[%s1 + $0x28] sm:$0xff]
  %v228 = vld [vmem:[%s1 + $0x30] sm:$0x3]
  %vm229 = vcmask 408576
  %v231 = vsel %vm229, %v14, 0
  %v234 = vsel %vm229, %v15, 0
  %v237 = vsel %vm229, %v16, 0
  %v240 = vsel %vm229, %v17, 0
  %v243 = vsel %vm229, %v18, 0
  %v246 = vsel %vm229, %v19, 0
  %v249 = vsel %vm229, %v20, 0
  %v252 = vsel %vm229, %v21, 0
  %v255 = vsel %vm229, %v22, 0
  %v258 = vsel %vm229, %v23, 0
  %v261 = vsel %vm229, %v24, 0
  %v264 = vsel %vm229, %v25, 0
  %v267 = vsel %vm229, %v26, 0
  %v270 = vsel %vm229, %v27, 0
  %v273 = vsel %vm229, %v28, 0
  %v276 = vsel %vm229, %v29, 0
  %v279 = vsel %vm229, %v30, 0
  %v282 = vsel %vm229, %v31, 0
  %v285 = vsel %vm229, %v32, 0
  %v288 = vsel %vm229, %v33, 0
  %v291 = vsel %vm229, %v34, 0
  %v294 = vsel %vm229, %v35, 0
  %v297 = vsel %vm229, %v36, 0
  %v300 = vsel %vm229, %v37, 0
  %v303 = vsel %vm229, %v38, 0
  %v306 = vsel %vm229, %v39, 0
  %v309 = vsel %vm229, %v40, 0
  %v312 = vsel %vm229, %v41, 0
  %v315 = vsel %vm229, %v42, 0
  %v318 = vsel %vm229, %v43, 0
  %v321 = vsel %vm229, %v44, 0
  %v324 = vsel %vm229, %v45, 0
  %v327 = vsel %vm229, %v46, 0
  %v330 = vsel %vm229, %v47, 0
  %v333 = vsel %vm229, %v48, 0
  %v336 = vsel %vm229, %v49, 0
  %v339 = vsel %vm229, %v50, 0
  %v342 = vsel %vm229, %v51, 0
  %v345 = vsel %vm229, %v52, 0
  %v348 = vsel %vm229, %v53, 0
  %v351 = vsel %vm229, %v54, 0
  %v354 = vsel %vm229, %v55, 0
  %v357 = vsel %vm229, %v56, 0
  %v360 = vsel %vm229, %v57, 0
  %v363 = vsel %vm229, %v58, 0
  %v366 = vsel %vm229, %v59, 0
  %v369 = vsel %vm229, %v60, 0
  %v372 = vsel %vm229, %v61, 0
  %v375 = vsel %vm229, %v62, 0
  %v378 = vsel %vm229, %v63, 0
  %v381 = vsel %vm229, %v64, 0
  %v384 = vsel %vm229, %v65, 0
  %v387 = vsel %vm229, %v66, 0
  %v390 = vsel %vm229, %v67, 0
  %v393 = vsel %vm229, %v68, 0
  %v396 = vsel %vm229, %v69, 0
  %v399 = vsel %vm229, %v70, 0
  %v402 = vsel %vm229, %v71, 0
  %v405 = vsel %vm229, %v72, 0
  %v408 = vsel %vm229, %v73, 0
  %v411 = vsel %vm229, %v74, 0
  %v414 = vsel %vm229, %v75, 0
  %v417 = vsel %vm229, %v76, 0
  %v420 = vsel %vm229, %v77, 0
  %v423 = vsel %vm229, %v78, 0
  %v426 = vsel %vm229, %v79, 0
  %v429 = vsel %vm229, %v80, 0
  %v432 = vsel %vm229, %v81, 0
  %v435 = vsel %vm229, %v82, 0
  %v438 = vsel %vm229, %v83, 0
  %v441 = vsel %vm229, %v84, 0
  %v444 = vsel %vm229, %v85, 0
  %v447 = vsel %vm229, %v86, 0
  %v450 = vsel %vm229, %v87, 0
  %v453 = vsel %vm229, %v88, 0
  %v456 = vsel %vm229, %v89, 0
  %v459 = vsel %vm229, %v90, 0
  %v462 = vsel %vm229, %v91, 0
  %v465 = vsel %vm229, %v92, 0
  %v468 = vsel %vm229, %v93, 0
  %v471 = vsel %vm229, %v94, 0
  %v474 = vsel %vm229, %v95, 0
  %v477 = vsel %vm229, %v96, 0
  %v480 = vsel %vm229, %v97, 0
  %v483 = vsel %vm229, %v98, 0
  %v486 = vsel %vm229, %v99, 0
  %v489 = vsel %vm229, %v100, 0
  %v492 = vsel %vm229, %v101, 0
  %v495 = vsel %vm229, %v102, 0
  %v498 = vsel %vm229, %v103, 0
  %v501 = vsel %vm229, %v104, 0
  %v504 = vsel %vm229, %v105, 0
  %v507 = vsel %vm229, %v106, 0
  %v510 = vsel %vm229, %v107, 0
  %v513 = vsel %vm229, %v108, 0
  %v516 = vsel %vm229, %v109, 0
  %v519 = vsel %vm229, %v110, 0
  %v522 = vsel %vm229, %v111, 0
  %v525 = vsel %vm229, %v112, 0
  %v528 = vsel %vm229, %v113, 0
  %v531 = vsel %vm229, %v114, 0
  %v534 = vsel %vm229, %v115, 0
  %v537 = vsel %vm229, %v116, 0
  %v540 = vsel %vm229, %v117, 0
  %v543 = vsel %vm229, %v118, 0
  %v546 = vsel %vm229, %v119, 0
  %v549 = vsel %vm229, %v120, 0
  %v552 = vsel %vm229, %v121, 0
  %v555 = vsel %vm229, %v122, 0
  %v558 = vsel %vm229, %v123, 0
  %v561 = vsel %vm229, %v124, 0
  %v564 = vsel %vm229, %v125, 0
  %v567 = vsel %vm229, %v126, 0
  %v570 = vsel %vm229, %v127, 0
  %v573 = vsel %vm229, %v128, 0
  %v576 = vsel %vm229, %v129, 0
  %v579 = vsel %vm229, %v130, 0
  %v582 = vsel %vm229, %v131, 0
  %v585 = vsel %vm229, %v132, 0
  %v588 = vsel %vm229, %v133, 0
  %v591 = vsel %vm229, %v134, 0
  %v594 = vsel %vm229, %v135, 0
  %v597 = vsel %vm229, %v136, 0
  %v600 = vsel %vm229, %v137, 0
  %v603 = vsel %vm229, %v138, 0
  %v606 = vsel %vm229, %v139, 0
  %v609 = vsel %vm229, %v140, 0
  %v612 = vsel %vm229, %v141, 0
  %v615 = vsel %vm229, %v142, 0
  %v618 = vsel %vm229, %v143, 0
  %v621 = vsel %vm229, %v144, 0
  %v624 = vsel %vm229, %v145, 0
  %v627 = vsel %vm229, %v146, 0
  %v630 = vsel %vm229, %v147, 0
  %v633 = vsel %vm229, %v148, 0
  %v636 = vsel %vm229, %v149, 0
  %v639 = vsel %vm229, %v150, 0
  %v642 = vsel %vm229, %v151, 0
  %v645 = vsel %vm229, %v152, 0
  %v648 = vsel %vm229, %v153, 0
  %v651 = vsel %vm229, %v154, 0
  %v654 = vsel %vm229, %v155, 0
  %v657 = vsel %vm229, %v156, 0
  %v660 = vsel %vm229, %v157, 0
  %v663 = vsel %vm229, %v158, 0
  %v666 = vsel %vm229, %v159, 0
  %v669 = vsel %vm229, %v160, 0
  %v672 = vsel %vm229, %v161, 0
  %v675 = vsel %vm229, %v162, 0
  %v678 = vsel %vm229, %v163, 0
  %v681 = vsel %vm229, %v164, 0
  %v684 = vsel %vm229, %v165, 0
  %v687 = vsel %vm229, %v166, 0
  %v690 = vsel %vm229, %v167, 0
  %v693 = vsel %vm229, %v168, 0
  %v696 = vsel %vm229, %v169, 0
  %v699 = vsel %vm229, %v170, 0
  %v702 = vsel %vm229, %v171, 0
  %v705 = vsel %vm229, %v172, 0
  %v708 = vsel %vm229, %v173, 0
  %v711 = vsel %vm229, %v174, 0
  %v714 = vsel %vm229, %v175, 0
  %v717 = vsel %vm229, %v176, 0
  %v720 = vsel %vm229, %v177, 0
  %v723 = vsel %vm229, %v178, 0
  %v726 = vsel %vm229, %v179, 0
  %v729 = vsel %vm229, %v180, 0
  %v732 = vsel %vm229, %v181, 0
  %v735 = vsel %vm229, %v182, 0
  %v738 = vsel %vm229, %v183, 0
  %v741 = vsel %vm229, %v184, 0
  %v744 = vsel %vm229, %v185, 0
  %v747 = vsel %vm229, %v186, 0
  %v750 = vsel %vm229, %v187, 0
  %v753 = vsel %vm229, %v188, 0
  %v756 = vsel %vm229, %v189, 0
  %v759 = vsel %vm229, %v190, 0
  %v762 = vsel %vm229, %v191, 0
  %v765 = vsel %vm229, %v192, 0
  %v768 = vsel %vm229, %v193, 0
  %v771 = vsel %vm229, %v194, 0
  %v774 = vsel %vm229, %v195, 0
  %v777 = vsel %vm229, %v196, 0
  %v780 = vsel %vm229, %v197, 0
  %v783 = vsel %vm229, %v198, 0
  %v786 = vsel %vm229, %v199, 0
  %v789 = vsel %vm229, %v200, 0
  %v792 = vsel %vm229, %v201, 0
  %v795 = vsel %vm229, %v202, 0
  %v798 = vsel %vm229, %v203, 0
  %v801 = vsel %vm229, %v204, 0
  %v804 = vsel %vm229, %v205, 0
  %v807 = vsel %vm229, %v206, 0
  %v810 = vsel %vm229, %v207, 0
  %v813 = vsel %vm229, %v208, 0
  %v816 = vsel %vm229, %v209, 0
  %v819 = vsel %vm229, %v210, 0
  %v822 = vsel %vm229, %v211, 0
  %v825 = vsel %vm229, %v212, 0
  %v828 = vsel %vm229, %v213, 0
  %v831 = vsel %vm229, %v214, 0
  %v834 = vsel %vm229, %v215, 0
  %v837 = vsel %vm229, %v216, 0
  %v840 = vsel %vm229, %v217, 0
  %v843 = vsel %vm229, %v218, 0
  %v846 = vsel %vm229, %v219, 0
  %v849 = vsel %vm229, %v220, 0
  %v852 = vsel %vm229, %v221, 0
  %vm854 = vcmask 1041408
  %v856 = vsel %vm854, %v228, 0
  %858 = vmatprep.subr.mxu0 0.0
  %859 = vmatpush1.msra.mxu0 0.0
  %860 = vmatprep.subr.mxu0 0.0
  %861 = vmatpush1.msra.mxu0 0.0
  %862 = vmatprep.subr.mxu0 0.0
  %863 = vmatpush1.msra.mxu0 0.0
  %864 = vmatprep.subr.mxu0 0.0
  %865 = vmatpush1.msra.mxu0 0.0
  %866 = vmatprep.subr.mxu0 0.0
  %867 = vmatpush1.msra.mxu0 0.0
  %868 = vmatprep.subr.mxu0 0.0
  %869 = vmatpush1.msra.mxu0 0.0
  %870 = vmatprep.subr.mxu0 0.0
  %871 = vmatpush1.msra.mxu0 0.0
  %872 = vmatprep.subr.mxu0 0.0
  %873 = vmatpush1.msra.mxu0 0.0
  %874 = vmatprep.subr.mxu0 0.0
  %875 = vmatpush1.msra.mxu0 0.0
  %876 = vmatprep.subr.mxu0 0.0
  %877 = vmatpush1.msra.mxu0 %v856
  %878 = vmatprep.subr.mxu0 0.0
  %879 = vmatpush1.msra.mxu0 %v227
  %880 = vmatprep.subr.mxu0 0.0
  %881 = vmatpush1.msra.mxu0 %v226
  %882 = vmatprep.subr.mxu0 0.0
  %883 = vmatpush1.msra.mxu0 %v225
  %884 = vmatprep.subr.mxu0 0.0
  %885 = vmatpush1.msra.mxu0 %v224
  %886 = vmatprep.subr.mxu0 0.0
  %887 = vmatpush1.msra.mxu0 %v223
  %888 = vmatprep.subr.mxu0 0.0
  %889 = vmatpush1.msra.mxu0 %v222
  %890 = vmatprep.subr.mxu0 0.0
  %891 = vmatpush2.msra.mxu0 0.0
  %892 = vmatprep.subr.mxu0 0.0
  %893 = vmatpush2.msra.mxu0 0.0
  %894 = vmatprep.subr.mxu0 0.0
  %895 = vmatpush2.msra.mxu0 0.0
  %896 = vmatprep.subr.mxu0 0.0
  %897 = vmatpush2.msra.mxu0 0.0
  %898 = vmatprep.subr.mxu0 0.0
  %899 = vmatpush2.msra.mxu0 0.0
  %900 = vmatprep.subr.mxu0 0.0
  %901 = vmatpush2.msra.mxu0 0.0
  %902 = vmatprep.subr.mxu0 0.0
  %903 = vmatpush2.msra.mxu0 0.0
  %904 = vmatprep.subr.mxu0 0.0
  %905 = vmatpush2.msra.mxu0 0.0
  %906 = vmatprep.subr.mxu0 0.0
  %907 = vmatpush2.msra.mxu0 0.0
  %908 = vmatprep.subr.mxu0 0.0
  %909 = vmatpush2.msra.mxu0 0.0
  %910 = vmatprep.subr.mxu0 0.0
  %911 = vmatpush2.msra.mxu0 0.0
  %912 = vmatprep.subr.mxu0 0.0
  %913 = vmatpush2.msra.mxu0 0.0
  %914 = vmatprep.subr.mxu0 0.0
  %915 = vmatpush2.msra.mxu0 0.0
  %916 = vmatprep.subr.mxu0 0.0
  %917 = vmatpush2.msra.mxu0 0.0
  %918 = vmatprep.subr.mxu0 0.0
  %919 = vmatpush2.msra.mxu0 0.0
  %920 = vmatprep.subr.mxu0 0.0
  %921 = vmatpush2.msra.mxu0 0.0
  %922 = vmatprep.mubr.f32.mxu0 0.0
  %923 = vmatmul.mubr.f32.gmra.mxu0 %v231
  %v924 = vpop.f32.mrf.mxu0
  %v925 = vadd.f32 0.0, %v924
  %v926 = vpop.f32.mrf.mxu0
  %927 = vmatprep.mubr.f32.mxu0 0.0
  %928 = vmatmul.mubr.f32.gmra.mxu0 %v234
  %v929 = vpop.f32.mrf.mxu0
  %v930 = vadd.f32 0.0, %v929
  %v931 = vpop.f32.mrf.mxu0
  %932 = vmatprep.mubr.f32.mxu0 0.0
  %933 = vmatmul.mubr.f32.gmra.mxu0 %v237
  %v934 = vpop.f32.mrf.mxu0
  %v935 = vadd.f32 0.0, %v934
  %v936 = vpop.f32.mrf.mxu0
  %937 = vmatprep.mubr.f32.mxu0 0.0
  %938 = vmatmul.mubr.f32.gmra.mxu0 %v240
  %v939 = vpop.f32.mrf.mxu0
  %v940 = vadd.f32 0.0, %v939
  %v941 = vpop.f32.mrf.mxu0
  %942 = vmatprep.mubr.f32.mxu0 0.0
  %943 = vmatmul.mubr.f32.gmra.mxu0 %v243
  %v944 = vpop.f32.mrf.mxu0
  %v945 = vadd.f32 0.0, %v944
  %v946 = vpop.f32.mrf.mxu0
  %947 = vmatprep.mubr.f32.mxu0 0.0
  %948 = vmatmul.mubr.f32.gmra.mxu0 %v246
  %v949 = vpop.f32.mrf.mxu0
  %v950 = vadd.f32 0.0, %v949
  %v951 = vpop.f32.mrf.mxu0
  %952 = vmatprep.mubr.f32.mxu0 0.0
  %953 = vmatmul.mubr.f32.gmra.mxu0 %v249
  %v954 = vpop.f32.mrf.mxu0
  %v955 = vadd.f32 0.0, %v954
  %v956 = vpop.f32.mrf.mxu0
  %957 = vmatprep.mubr.f32.mxu0 0.0
  %958 = vmatmul.mubr.f32.gmra.mxu0 %v252
  %v959 = vpop.f32.mrf.mxu0
  %v960 = vadd.f32 0.0, %v959
  %v961 = vpop.f32.mrf.mxu0
  %962 = vmatprep.mubr.f32.mxu0 0.0
  %963 = vmatmul.mubr.f32.gmra.mxu0 %v255
  %v964 = vpop.f32.mrf.mxu0
  %v965 = vadd.f32 0.0, %v964
  %v966 = vpop.f32.mrf.mxu0
  %967 = vmatprep.mubr.f32.mxu0 0.0
  %968 = vmatmul.mubr.f32.gmra.mxu0 %v258
  %v969 = vpop.f32.mrf.mxu0
  %v970 = vadd.f32 0.0, %v969
  %v971 = vpop.f32.mrf.mxu0
  %972 = vmatprep.mubr.f32.mxu0 0.0
  %973 = vmatmul.mubr.f32.gmra.mxu0 %v261
  %v974 = vpop.f32.mrf.mxu0
  %v975 = vadd.f32 0.0, %v974
  %v976 = vpop.f32.mrf.mxu0
  %977 = vmatprep.mubr.f32.mxu0 0.0
  %978 = vmatmul.mubr.f32.gmra.mxu0 %v264
  %v979 = vpop.f32.mrf.mxu0
  %v980 = vadd.f32 0.0, %v979
  %v981 = vpop.f32.mrf.mxu0
  %982 = vmatprep.mubr.f32.mxu0 0.0
  %983 = vmatmul.mubr.f32.gmra.mxu0 %v267
  %v984 = vpop.f32.mrf.mxu0
  %v985 = vadd.f32 0.0, %v984
  %v986 = vpop.f32.mrf.mxu0
  %987 = vmatprep.mubr.f32.mxu0 0.0
  %988 = vmatmul.mubr.f32.gmra.mxu0 %v270
  %v989 = vpop.f32.mrf.mxu0
  %v990 = vadd.f32 0.0, %v989
  %v991 = vpop.f32.mrf.mxu0
  %992 = vmatprep.mubr.f32.mxu0 0.0
  %993 = vmatmul.mubr.f32.gmra.mxu0 %v273
  %v994 = vpop.f32.mrf.mxu0
  %v995 = vadd.f32 0.0, %v994
  %v996 = vpop.f32.mrf.mxu0
  %997 = vmatprep.mubr.f32.mxu0 0.0
  %998 = vmatmul.mubr.f32.gmra.mxu0 %v276
  %v999 = vpop.f32.mrf.mxu0
  %v1000 = vadd.f32 0.0, %v999
  %v1001 = vpop.f32.mrf.mxu0
  %1002 = vmatprep.mubr.f32.mxu0 0.0
  %1003 = vmatmul.mubr.f32.gmra.mxu0 %v279
  %v1004 = vpop.f32.mrf.mxu0
  %v1005 = vadd.f32 0.0, %v1004
  %v1006 = vpop.f32.mrf.mxu0
  %1007 = vmatprep.mubr.f32.mxu0 0.0
  %1008 = vmatmul.mubr.f32.gmra.mxu0 %v282
  %v1009 = vpop.f32.mrf.mxu0
  %v1010 = vadd.f32 0.0, %v1009
  %v1011 = vpop.f32.mrf.mxu0
  %1012 = vmatprep.mubr.f32.mxu0 0.0
  %1013 = vmatmul.mubr.f32.gmra.mxu0 %v285
  %v1014 = vpop.f32.mrf.mxu0
  %v1015 = vadd.f32 0.0, %v1014
  %v1016 = vpop.f32.mrf.mxu0
  %1017 = vmatprep.mubr.f32.mxu0 0.0
  %1018 = vmatmul.mubr.f32.gmra.mxu0 %v288
  %v1019 = vpop.f32.mrf.mxu0
  %v1020 = vadd.f32 0.0, %v1019
  %v1021 = vpop.f32.mrf.mxu0
  %1022 = vmatprep.mubr.f32.mxu0 0.0
  %1023 = vmatmul.mubr.f32.gmra.mxu0 %v291
  %v1024 = vpop.f32.mrf.mxu0
  %v1025 = vadd.f32 0.0, %v1024
  %v1026 = vpop.f32.mrf.mxu0
  %1027 = vmatprep.mubr.f32.mxu0 0.0
  %1028 = vmatmul.mubr.f32.gmra.mxu0 %v294
  %v1029 = vpop.f32.mrf.mxu0
  %v1030 = vadd.f32 0.0, %v1029
  %v1031 = vpop.f32.mrf.mxu0
  %1032 = vmatprep.mubr.f32.mxu0 0.0
  %1033 = vmatmul.mubr.f32.gmra.mxu0 %v297
  %v1034 = vpop.f32.mrf.mxu0
  %v1035 = vadd.f32 0.0, %v1034
  %v1036 = vpop.f32.mrf.mxu0
  %1037 = vmatprep.mubr.f32.mxu0 0.0
  %1038 = vmatmul.mubr.f32.gmra.mxu0 %v300
  %v1039 = vpop.f32.mrf.mxu0
  %v1040 = vadd.f32 0.0, %v1039
  %v1041 = vpop.f32.mrf.mxu0
  %1042 = vmatprep.mubr.f32.mxu0 0.0
  %1043 = vmatmul.mubr.f32.gmra.mxu0 %v303
  %v1044 = vpop.f32.mrf.mxu0
  %v1045 = vadd.f32 0.0, %v1044
  %v1046 = vpop.f32.mrf.mxu0
  %1047 = vmatprep.mubr.f32.mxu0 0.0
  %1048 = vmatmul.mubr.f32.gmra.mxu0 %v306
  %v1049 = vpop.f32.mrf.mxu0
  %v1050 = vadd.f32 0.0, %v1049
  %v1051 = vpop.f32.mrf.mxu0
  %1052 = vmatprep.mubr.f32.mxu0 0.0
  %1053 = vmatmul.mubr.f32.gmra.mxu0 %v309
  %v1054 = vpop.f32.mrf.mxu0
  %v1055 = vadd.f32 0.0, %v1054
  %v1056 = vpop.f32.mrf.mxu0
  %1057 = vmatprep.mubr.f32.mxu0 0.0
  %1058 = vmatmul.mubr.f32.gmra.mxu0 %v312
  %v1059 = vpop.f32.mrf.mxu0
  %v1060 = vadd.f32 0.0, %v1059
  %v1061 = vpop.f32.mrf.mxu0
  %1062 = vmatprep.mubr.f32.mxu0 0.0
  %1063 = vmatmul.mubr.f32.gmra.mxu0 %v315
  %v1064 = vpop.f32.mrf.mxu0
  %v1065 = vadd.f32 0.0, %v1064
  %v1066 = vpop.f32.mrf.mxu0
  %1067 = vmatprep.mubr.f32.mxu0 0.0
  %1068 = vmatmul.mubr.f32.gmra.mxu0 %v318
  %v1069 = vpop.f32.mrf.mxu0
  %v1070 = vadd.f32 0.0, %v1069
  %v1071 = vpop.f32.mrf.mxu0
  %1072 = vmatprep.mubr.f32.mxu0 0.0
  %1073 = vmatmul.mubr.f32.gmra.mxu0 %v321
  %v1074 = vpop.f32.mrf.mxu0
  %v1075 = vadd.f32 0.0, %v1074
  %v1076 = vpop.f32.mrf.mxu0
  %1077 = vmatprep.mubr.f32.mxu0 0.0
  %1078 = vmatmul.mubr.f32.gmra.mxu0 %v324
  %v1079 = vpop.f32.mrf.mxu0
  %v1080 = vadd.f32 0.0, %v1079
  %v1081 = vpop.f32.mrf.mxu0
  %1082 = vmatprep.mubr.f32.mxu0 0.0
  %1083 = vmatmul.mubr.f32.gmra.mxu0 %v327
  %v1084 = vpop.f32.mrf.mxu0
  %v1085 = vadd.f32 0.0, %v1084
  %v1086 = vpop.f32.mrf.mxu0
  %1087 = vmatprep.mubr.f32.mxu0 0.0
  %1088 = vmatmul.mubr.f32.gmra.mxu0 %v330
  %v1089 = vpop.f32.mrf.mxu0
  %v1090 = vadd.f32 0.0, %v1089
  %v1091 = vpop.f32.mrf.mxu0
  %1092 = vmatprep.mubr.f32.mxu0 0.0
  %1093 = vmatmul.mubr.f32.gmra.mxu0 %v333
  %v1094 = vpop.f32.mrf.mxu0
  %v1095 = vadd.f32 0.0, %v1094
  %v1096 = vpop.f32.mrf.mxu0
  %1097 = vmatprep.mubr.f32.mxu0 0.0
  %1098 = vmatmul.mubr.f32.gmra.mxu0 %v336
  %v1099 = vpop.f32.mrf.mxu0
  %v1100 = vadd.f32 0.0, %v1099
  %v1101 = vpop.f32.mrf.mxu0
  %1102 = vmatprep.mubr.f32.mxu0 0.0
  %1103 = vmatmul.mubr.f32.gmra.mxu0 %v339
  %v1104 = vpop.f32.mrf.mxu0
  %v1105 = vadd.f32 0.0, %v1104
  %v1106 = vpop.f32.mrf.mxu0
  %1107 = vmatprep.mubr.f32.mxu0 0.0
  %1108 = vmatmul.mubr.f32.gmra.mxu0 %v342
  %v1109 = vpop.f32.mrf.mxu0
  %v1110 = vadd.f32 0.0, %v1109
  %v1111 = vpop.f32.mrf.mxu0
  %1112 = vmatprep.mubr.f32.mxu0 0.0
  %1113 = vmatmul.mubr.f32.gmra.mxu0 %v345
  %v1114 = vpop.f32.mrf.mxu0
  %v1115 = vadd.f32 0.0, %v1114
  %v1116 = vpop.f32.mrf.mxu0
  %1117 = vmatprep.mubr.f32.mxu0 0.0
  %1118 = vmatmul.mubr.f32.gmra.mxu0 %v348
  %v1119 = vpop.f32.mrf.mxu0
  %v1120 = vadd.f32 0.0, %v1119
  %v1121 = vpop.f32.mrf.mxu0
  %1122 = vmatprep.mubr.f32.mxu0 0.0
  %1123 = vmatmul.mubr.f32.gmra.mxu0 %v351
  %v1124 = vpop.f32.mrf.mxu0
  %v1125 = vadd.f32 0.0, %v1124
  %v1126 = vpop.f32.mrf.mxu0
  %1127 = vmatprep.mubr.f32.mxu0 0.0
  %1128 = vmatmul.mubr.f32.gmra.mxu0 %v354
  %v1129 = vpop.f32.mrf.mxu0
  %v1130 = vadd.f32 0.0, %v1129
  %v1131 = vpop.f32.mrf.mxu0
  %1132 = vmatprep.mubr.f32.mxu0 0.0
  %1133 = vmatmul.mubr.f32.gmra.mxu0 %v357
  %v1134 = vpop.f32.mrf.mxu0
  %v1135 = vadd.f32 0.0, %v1134
  %v1136 = vpop.f32.mrf.mxu0
  %1137 = vmatprep.mubr.f32.mxu0 0.0
  %1138 = vmatmul.mubr.f32.gmra.mxu0 %v360
  %v1139 = vpop.f32.mrf.mxu0
  %v1140 = vadd.f32 0.0, %v1139
  %v1141 = vpop.f32.mrf.mxu0
  %1142 = vmatprep.mubr.f32.mxu0 0.0
  %1143 = vmatmul.mubr.f32.gmra.mxu0 %v363
  %v1144 = vpop.f32.mrf.mxu0
  %v1145 = vadd.f32 0.0, %v1144
  %v1146 = vpop.f32.mrf.mxu0
  %1147 = vmatprep.mubr.f32.mxu0 0.0
  %1148 = vmatmul.mubr.f32.gmra.mxu0 %v366
  %v1149 = vpop.f32.mrf.mxu0
  %v1150 = vadd.f32 0.0, %v1149
  %v1151 = vpop.f32.mrf.mxu0
  %1152 = vmatprep.mubr.f32.mxu0 0.0
  %1153 = vmatmul.mubr.f32.gmra.mxu0 %v369
  %v1154 = vpop.f32.mrf.mxu0
  %v1155 = vadd.f32 0.0, %v1154
  %v1156 = vpop.f32.mrf.mxu0
  %1157 = vmatprep.mubr.f32.mxu0 0.0
  %1158 = vmatmul.mubr.f32.gmra.mxu0 %v372
  %v1159 = vpop.f32.mrf.mxu0
  %v1160 = vadd.f32 0.0, %v1159
  %v1161 = vpop.f32.mrf.mxu0
  %1162 = vmatprep.mubr.f32.mxu0 0.0
  %1163 = vmatmul.mubr.f32.gmra.mxu0 %v375
  %v1164 = vpop.f32.mrf.mxu0
  %v1165 = vadd.f32 0.0, %v1164
  %v1166 = vpop.f32.mrf.mxu0
  %1167 = vmatprep.mubr.f32.mxu0 0.0
  %1168 = vmatmul.mubr.f32.gmra.mxu0 %v378
  %v1169 = vpop.f32.mrf.mxu0
  %v1170 = vadd.f32 0.0, %v1169
  %v1171 = vpop.f32.mrf.mxu0
  %1172 = vmatprep.mubr.f32.mxu0 0.0
  %1173 = vmatmul.mubr.f32.gmra.mxu0 %v381
  %v1174 = vpop.f32.mrf.mxu0
  %v1175 = vadd.f32 0.0, %v1174
  %v1176 = vpop.f32.mrf.mxu0
  %1177 = vmatprep.mubr.f32.mxu0 0.0
  %1178 = vmatmul.mubr.f32.gmra.mxu0 %v384
  %v1179 = vpop.f32.mrf.mxu0
  %v1180 = vadd.f32 0.0, %v1179
  %v1181 = vpop.f32.mrf.mxu0
  %1182 = vmatprep.mubr.f32.mxu0 0.0
  %1183 = vmatmul.mubr.f32.gmra.mxu0 %v387
  %v1184 = vpop.f32.mrf.mxu0
  %v1185 = vadd.f32 0.0, %v1184
  %v1186 = vpop.f32.mrf.mxu0
  %1187 = vmatprep.mubr.f32.mxu0 0.0
  %1188 = vmatmul.mubr.f32.gmra.mxu0 %v390
  %v1189 = vpop.f32.mrf.mxu0
  %v1190 = vadd.f32 0.0, %v1189
  %v1191 = vpop.f32.mrf.mxu0
  %1192 = vmatprep.mubr.f32.mxu0 0.0
  %1193 = vmatmul.mubr.f32.gmra.mxu0 %v393
  %v1194 = vpop.f32.mrf.mxu0
  %v1195 = vadd.f32 0.0, %v1194
  %v1196 = vpop.f32.mrf.mxu0
  %1197 = vmatprep.mubr.f32.mxu0 0.0
  %1198 = vmatmul.mubr.f32.gmra.mxu0 %v396
  %v1199 = vpop.f32.mrf.mxu0
  %v1200 = vadd.f32 0.0, %v1199
  %v1201 = vpop.f32.mrf.mxu0
  %1202 = vmatprep.mubr.f32.mxu0 0.0
  %1203 = vmatmul.mubr.f32.gmra.mxu0 %v399
  %v1204 = vpop.f32.mrf.mxu0
  %v1205 = vadd.f32 0.0, %v1204
  %v1206 = vpop.f32.mrf.mxu0
  %1207 = vmatprep.mubr.f32.mxu0 0.0
  %1208 = vmatmul.mubr.f32.gmra.mxu0 %v402
  %v1209 = vpop.f32.mrf.mxu0
  %v1210 = vadd.f32 0.0, %v1209
  %v1211 = vpop.f32.mrf.mxu0
  %1212 = vmatprep.mubr.f32.mxu0 0.0
  %1213 = vmatmul.mubr.f32.gmra.mxu0 %v405
  %v1214 = vpop.f32.mrf.mxu0
  %v1215 = vadd.f32 0.0, %v1214
  %v1216 = vpop.f32.mrf.mxu0
  %1217 = vmatprep.mubr.f32.mxu0 0.0
  %1218 = vmatmul.mubr.f32.gmra.mxu0 %v408
  %v1219 = vpop.f32.mrf.mxu0
  %v1220 = vadd.f32 0.0, %v1219
  %v1221 = vpop.f32.mrf.mxu0
  %1222 = vmatprep.mubr.f32.mxu0 0.0
  %1223 = vmatmul.mubr.f32.gmra.mxu0 %v411
  %v1224 = vpop.f32.mrf.mxu0
  %v1225 = vadd.f32 0.0, %v1224
  %v1226 = vpop.f32.mrf.mxu0
  %1227 = vmatprep.mubr.f32.mxu0 0.0
  %1228 = vmatmul.mubr.f32.gmra.mxu0 %v414
  %v1229 = vpop.f32.mrf.mxu0
  %v1230 = vadd.f32 0.0, %v1229
  %v1231 = vpop.f32.mrf.mxu0
  %1232 = vmatprep.mubr.f32.mxu0 0.0
  %1233 = vmatmul.mubr.f32.gmra.mxu0 %v417
  %v1234 = vpop.f32.mrf.mxu0
  %v1235 = vadd.f32 0.0, %v1234
  %v1236 = vpop.f32.mrf.mxu0
  %1237 = vmatprep.mubr.f32.mxu0 0.0
  %1238 = vmatmul.mubr.f32.gmra.mxu0 %v420
  %v1239 = vpop.f32.mrf.mxu0
  %v1240 = vadd.f32 0.0, %v1239
  %v1241 = vpop.f32.mrf.mxu0
  %1242 = vmatprep.mubr.f32.mxu0 0.0
  %1243 = vmatmul.mubr.f32.gmra.mxu0 %v423
  %v1244 = vpop.f32.mrf.mxu0
  %v1245 = vadd.f32 0.0, %v1244
  %v1246 = vpop.f32.mrf.mxu0
  %1247 = vmatprep.mubr.f32.mxu0 0.0
  %1248 = vmatmul.mubr.f32.gmra.mxu0 %v426
  %v1249 = vpop.f32.mrf.mxu0
  %v1250 = vadd.f32 0.0, %v1249
  %v1251 = vpop.f32.mrf.mxu0
  %1252 = vmatprep.mubr.f32.mxu0 0.0
  %1253 = vmatmul.mubr.f32.gmra.mxu0 %v429
  %v1254 = vpop.f32.mrf.mxu0
  %v1255 = vadd.f32 0.0, %v1254
  %v1256 = vpop.f32.mrf.mxu0
  %1257 = vmatprep.mubr.f32.mxu0 0.0
  %1258 = vmatmul.mubr.f32.gmra.mxu0 %v432
  %v1259 = vpop.f32.mrf.mxu0
  %v1260 = vadd.f32 0.0, %v1259
  %v1261 = vpop.f32.mrf.mxu0
  %1262 = vmatprep.mubr.f32.mxu0 0.0
  %1263 = vmatmul.mubr.f32.gmra.mxu0 %v435
  %v1264 = vpop.f32.mrf.mxu0
  %v1265 = vadd.f32 0.0, %v1264
  %v1266 = vpop.f32.mrf.mxu0
  %1267 = vmatprep.mubr.f32.mxu0 0.0
  %1268 = vmatmul.mubr.f32.gmra.mxu0 %v438
  %v1269 = vpop.f32.mrf.mxu0
  %v1270 = vadd.f32 0.0, %v1269
  %v1271 = vpop.f32.mrf.mxu0
  %1272 = vmatprep.mubr.f32.mxu0 0.0
  %1273 = vmatmul.mubr.f32.gmra.mxu0 %v441
  %v1274 = vpop.f32.mrf.mxu0
  %v1275 = vadd.f32 0.0, %v1274
  %v1276 = vpop.f32.mrf.mxu0
  %1277 = vmatprep.mubr.f32.mxu0 0.0
  %1278 = vmatmul.mubr.f32.gmra.mxu0 %v444
  %v1279 = vpop.f32.mrf.mxu0
  %v1280 = vadd.f32 0.0, %v1279
  %v1281 = vpop.f32.mrf.mxu0
  %1282 = vmatprep.mubr.f32.mxu0 0.0
  %1283 = vmatmul.mubr.f32.gmra.mxu0 %v447
  %v1284 = vpop.f32.mrf.mxu0
  %v1285 = vadd.f32 0.0, %v1284
  %v1286 = vpop.f32.mrf.mxu0
  %1287 = vmatprep.mubr.f32.mxu0 0.0
  %1288 = vmatmul.mubr.f32.gmra.mxu0 %v450
  %v1289 = vpop.f32.mrf.mxu0
  %v1290 = vadd.f32 0.0, %v1289
  %v1291 = vpop.f32.mrf.mxu0
  %1292 = vmatprep.mubr.f32.mxu0 0.0
  %1293 = vmatmul.mubr.f32.gmra.mxu0 %v453
  %v1294 = vpop.f32.mrf.mxu0
  %v1295 = vadd.f32 0.0, %v1294
  %v1296 = vpop.f32.mrf.mxu0
  %1297 = vmatprep.mubr.f32.mxu0 0.0
  %1298 = vmatmul.mubr.f32.gmra.mxu0 %v456
  %v1299 = vpop.f32.mrf.mxu0
  %v1300 = vadd.f32 0.0, %v1299
  %v1301 = vpop.f32.mrf.mxu0
  %1302 = vmatprep.mubr.f32.mxu0 0.0
  %1303 = vmatmul.mubr.f32.gmra.mxu0 %v459
  %v1304 = vpop.f32.mrf.mxu0
  %v1305 = vadd.f32 0.0, %v1304
  %v1306 = vpop.f32.mrf.mxu0
  %1307 = vmatprep.mubr.f32.mxu0 0.0
  %1308 = vmatmul.mubr.f32.gmra.mxu0 %v462
  %v1309 = vpop.f32.mrf.mxu0
  %v1310 = vadd.f32 0.0, %v1309
  %v1311 = vpop.f32.mrf.mxu0
  %1312 = vmatprep.mubr.f32.mxu0 0.0
  %1313 = vmatmul.mubr.f32.gmra.mxu0 %v465
  %v1314 = vpop.f32.mrf.mxu0
  %v1315 = vadd.f32 0.0, %v1314
  %v1316 = vpop.f32.mrf.mxu0
  %1317 = vmatprep.mubr.f32.mxu0 0.0
  %1318 = vmatmul.mubr.f32.gmra.mxu0 %v468
  %v1319 = vpop.f32.mrf.mxu0
  %v1320 = vadd.f32 0.0, %v1319
  %v1321 = vpop.f32.mrf.mxu0
  %1322 = vmatprep.mubr.f32.mxu0 0.0
  %1323 = vmatmul.mubr.f32.gmra.mxu0 %v471
  %v1324 = vpop.f32.mrf.mxu0
  %v1325 = vadd.f32 0.0, %v1324
  %v1326 = vpop.f32.mrf.mxu0
  %1327 = vmatprep.mubr.f32.mxu0 0.0
  %1328 = vmatmul.mubr.f32.gmra.mxu0 %v474
  %v1329 = vpop.f32.mrf.mxu0
  %v1330 = vadd.f32 0.0, %v1329
  %v1331 = vpop.f32.mrf.mxu0
  %1332 = vmatprep.mubr.f32.mxu0 0.0
  %1333 = vmatmul.mubr.f32.gmra.mxu0 %v477
  %v1334 = vpop.f32.mrf.mxu0
  %v1335 = vadd.f32 0.0, %v1334
  %v1336 = vpop.f32.mrf.mxu0
  %1337 = vmatprep.mubr.f32.mxu0 0.0
  %1338 = vmatmul.mubr.f32.gmra.mxu0 %v480
  %v1339 = vpop.f32.mrf.mxu0
  %v1340 = vadd.f32 0.0, %v1339
  %v1341 = vpop.f32.mrf.mxu0
  %1342 = vmatprep.mubr.f32.mxu0 0.0
  %1343 = vmatmul.mubr.f32.gmra.mxu0 %v483
  %v1344 = vpop.f32.mrf.mxu0
  %v1345 = vadd.f32 0.0, %v1344
  %v1346 = vpop.f32.mrf.mxu0
  %1347 = vmatprep.mubr.f32.mxu0 0.0
  %1348 = vmatmul.mubr.f32.gmra.mxu0 %v486
  %v1349 = vpop.f32.mrf.mxu0
  %v1350 = vadd.f32 0.0, %v1349
  %v1351 = vpop.f32.mrf.mxu0
  %1352 = vmatprep.mubr.f32.mxu0 0.0
  %1353 = vmatmul.mubr.f32.gmra.mxu0 %v489
  %v1354 = vpop.f32.mrf.mxu0
  %v1355 = vadd.f32 0.0, %v1354
  %v1356 = vpop.f32.mrf.mxu0
  %1357 = vmatprep.mubr.f32.mxu0 0.0
  %1358 = vmatmul.mubr.f32.gmra.mxu0 %v492
  %v1359 = vpop.f32.mrf.mxu0
  %v1360 = vadd.f32 0.0, %v1359
  %v1361 = vpop.f32.mrf.mxu0
  %1362 = vmatprep.mubr.f32.mxu0 0.0
  %1363 = vmatmul.mubr.f32.gmra.mxu0 %v495
  %v1364 = vpop.f32.mrf.mxu0
  %v1365 = vadd.f32 0.0, %v1364
  %v1366 = vpop.f32.mrf.mxu0
  %1367 = vmatprep.mubr.f32.mxu0 0.0
  %1368 = vmatmul.mubr.f32.gmra.mxu0 %v498
  %v1369 = vpop.f32.mrf.mxu0
  %v1370 = vadd.f32 0.0, %v1369
  %v1371 = vpop.f32.mrf.mxu0
  %1372 = vmatprep.mubr.f32.mxu0 0.0
  %1373 = vmatmul.mubr.f32.gmra.mxu0 %v501
  %v1374 = vpop.f32.mrf.mxu0
  %v1375 = vadd.f32 0.0, %v1374
  %v1376 = vpop.f32.mrf.mxu0
  %1377 = vmatprep.mubr.f32.mxu0 0.0
  %1378 = vmatmul.mubr.f32.gmra.mxu0 %v504
  %v1379 = vpop.f32.mrf.mxu0
  %v1380 = vadd.f32 0.0, %v1379
  %v1381 = vpop.f32.mrf.mxu0
  %1382 = vmatprep.mubr.f32.mxu0 0.0
  %1383 = vmatmul.mubr.f32.gmra.mxu0 %v507
  %v1384 = vpop.f32.mrf.mxu0
  %v1385 = vadd.f32 0.0, %v1384
  %v1386 = vpop.f32.mrf.mxu0
  %1387 = vmatprep.mubr.f32.mxu0 0.0
  %1388 = vmatmul.mubr.f32.gmra.mxu0 %v510
  %v1389 = vpop.f32.mrf.mxu0
  %v1390 = vadd.f32 0.0, %v1389
  %v1391 = vpop.f32.mrf.mxu0
  %1392 = vmatprep.mubr.f32.mxu0 0.0
  %1393 = vmatmul.mubr.f32.gmra.mxu0 %v513
  %v1394 = vpop.f32.mrf.mxu0
  %v1395 = vadd.f32 0.0, %v1394
  %v1396 = vpop.f32.mrf.mxu0
  %1397 = vmatprep.mubr.f32.mxu0 0.0
  %1398 = vmatmul.mubr.f32.gmra.mxu0 %v516
  %v1399 = vpop.f32.mrf.mxu0
  %v1400 = vadd.f32 0.0, %v1399
  %v1401 = vpop.f32.mrf.mxu0
  %1402 = vmatprep.mubr.f32.mxu0 0.0
  %1403 = vmatmul.mubr.f32.gmra.mxu0 %v519
  %v1404 = vpop.f32.mrf.mxu0
  %v1405 = vadd.f32 0.0, %v1404
  %v1406 = vpop.f32.mrf.mxu0
  %1407 = vmatprep.mubr.f32.mxu0 0.0
  %1408 = vmatmul.mubr.f32.gmra.mxu0 %v522
  %v1409 = vpop.f32.mrf.mxu0
  %v1410 = vadd.f32 0.0, %v1409
  %v1411 = vpop.f32.mrf.mxu0
  %1412 = vmatprep.mubr.f32.mxu0 0.0
  %1413 = vmatmul.mubr.f32.gmra.mxu0 %v525
  %v1414 = vpop.f32.mrf.mxu0
  %v1415 = vadd.f32 0.0, %v1414
  %v1416 = vpop.f32.mrf.mxu0
  %1417 = vmatprep.mubr.f32.mxu0 0.0
  %1418 = vmatmul.mubr.f32.gmra.mxu0 %v528
  %v1419 = vpop.f32.mrf.mxu0
  %v1420 = vadd.f32 0.0, %v1419
  %v1421 = vpop.f32.mrf.mxu0
  %1422 = vmatprep.mubr.f32.mxu0 0.0
  %1423 = vmatmul.mubr.f32.gmra.mxu0 %v531
  %v1424 = vpop.f32.mrf.mxu0
  %v1425 = vadd.f32 0.0, %v1424
  %v1426 = vpop.f32.mrf.mxu0
  %1427 = vmatprep.mubr.f32.mxu0 0.0
  %1428 = vmatmul.mubr.f32.gmra.mxu0 %v534
  %v1429 = vpop.f32.mrf.mxu0
  %v1430 = vadd.f32 0.0, %v1429
  %v1431 = vpop.f32.mrf.mxu0
  %1432 = vmatprep.mubr.f32.mxu0 0.0
  %1433 = vmatmul.mubr.f32.gmra.mxu0 %v537
  %v1434 = vpop.f32.mrf.mxu0
  %v1435 = vadd.f32 0.0, %v1434
  %v1436 = vpop.f32.mrf.mxu0
  %1437 = vmatprep.mubr.f32.mxu0 0.0
  %1438 = vmatmul.mubr.f32.gmra.mxu0 %v540
  %v1439 = vpop.f32.mrf.mxu0
  %v1440 = vadd.f32 0.0, %v1439
  %v1441 = vpop.f32.mrf.mxu0
  %1442 = vmatprep.mubr.f32.mxu0 0.0
  %1443 = vmatmul.mubr.f32.gmra.mxu0 %v543
  %v1444 = vpop.f32.mrf.mxu0
  %v1445 = vadd.f32 0.0, %v1444
  %v1446 = vpop.f32.mrf.mxu0
  %1447 = vmatprep.mubr.f32.mxu0 0.0
  %1448 = vmatmul.mubr.f32.gmra.mxu0 %v546
  %v1449 = vpop.f32.mrf.mxu0
  %v1450 = vadd.f32 0.0, %v1449
  %v1451 = vpop.f32.mrf.mxu0
  %1452 = vmatprep.mubr.f32.mxu0 0.0
  %1453 = vmatmul.mubr.f32.gmra.mxu0 %v549
  %v1454 = vpop.f32.mrf.mxu0
  %v1455 = vadd.f32 0.0, %v1454
  %v1456 = vpop.f32.mrf.mxu0
  %1457 = vmatprep.mubr.f32.mxu0 0.0
  %1458 = vmatmul.mubr.f32.gmra.mxu0 %v552
  %v1459 = vpop.f32.mrf.mxu0
  %v1460 = vadd.f32 0.0, %v1459
  %v1461 = vpop.f32.mrf.mxu0
  %1462 = vmatprep.mubr.f32.mxu0 0.0
  %1463 = vmatmul.mubr.f32.gmra.mxu0 %v555
  %v1464 = vpop.f32.mrf.mxu0
  %v1465 = vadd.f32 0.0, %v1464
  %v1466 = vpop.f32.mrf.mxu0
  %1467 = vmatprep.mubr.f32.mxu0 0.0
  %1468 = vmatmul.mubr.f32.gmra.mxu0 %v558
  %v1469 = vpop.f32.mrf.mxu0
  %v1470 = vadd.f32 0.0, %v1469
  %v1471 = vpop.f32.mrf.mxu0
  %1472 = vmatprep.mubr.f32.mxu0 0.0
  %1473 = vmatmul.mubr.f32.gmra.mxu0 %v561
  %v1474 = vpop.f32.mrf.mxu0
  %v1475 = vadd.f32 0.0, %v1474
  %v1476 = vpop.f32.mrf.mxu0
  %1477 = vmatprep.mubr.f32.mxu0 0.0
  %1478 = vmatmul.mubr.f32.gmra.mxu0 %v564
  %v1479 = vpop.f32.mrf.mxu0
  %v1480 = vadd.f32 0.0, %v1479
  %v1481 = vpop.f32.mrf.mxu0
  %1482 = vmatprep.mubr.f32.mxu0 0.0
  %1483 = vmatmul.mubr.f32.gmra.mxu0 %v567
  %v1484 = vpop.f32.mrf.mxu0
  %v1485 = vadd.f32 0.0, %v1484
  %v1486 = vpop.f32.mrf.mxu0
  %1487 = vmatprep.mubr.f32.mxu0 0.0
  %1488 = vmatmul.mubr.f32.gmra.mxu0 %v570
  %v1489 = vpop.f32.mrf.mxu0
  %v1490 = vadd.f32 0.0, %v1489
  %v1491 = vpop.f32.mrf.mxu0
  %1492 = vmatprep.mubr.f32.mxu0 0.0
  %1493 = vmatmul.mubr.f32.gmra.mxu0 %v573
  %v1494 = vpop.f32.mrf.mxu0
  %v1495 = vadd.f32 0.0, %v1494
  %v1496 = vpop.f32.mrf.mxu0
  %1497 = vmatprep.mubr.f32.mxu0 0.0
  %1498 = vmatmul.mubr.f32.gmra.mxu0 %v576
  %v1499 = vpop.f32.mrf.mxu0
  %v1500 = vadd.f32 0.0, %v1499
  %v1501 = vpop.f32.mrf.mxu0
  %1502 = vmatprep.mubr.f32.mxu0 0.0
  %1503 = vmatmul.mubr.f32.gmra.mxu0 %v579
  %v1504 = vpop.f32.mrf.mxu0
  %v1505 = vadd.f32 0.0, %v1504
  %v1506 = vpop.f32.mrf.mxu0
  %1507 = vmatprep.mubr.f32.mxu0 0.0
  %1508 = vmatmul.mubr.f32.gmra.mxu0 %v582
  %v1509 = vpop.f32.mrf.mxu0
  %v1510 = vadd.f32 0.0, %v1509
  %v1511 = vpop.f32.mrf.mxu0
  %1512 = vmatprep.mubr.f32.mxu0 0.0
  %1513 = vmatmul.mubr.f32.gmra.mxu0 %v585
  %v1514 = vpop.f32.mrf.mxu0
  %v1515 = vadd.f32 0.0, %v1514
  %v1516 = vpop.f32.mrf.mxu0
  %1517 = vmatprep.mubr.f32.mxu0 0.0
  %1518 = vmatmul.mubr.f32.gmra.mxu0 %v588
  %v1519 = vpop.f32.mrf.mxu0
  %v1520 = vadd.f32 0.0, %v1519
  %v1521 = vpop.f32.mrf.mxu0
  %1522 = vmatprep.mubr.f32.mxu0 0.0
  %1523 = vmatmul.mubr.f32.gmra.mxu0 %v591
  %v1524 = vpop.f32.mrf.mxu0
  %v1525 = vadd.f32 0.0, %v1524
  %v1526 = vpop.f32.mrf.mxu0
  %1527 = vmatprep.mubr.f32.mxu0 0.0
  %1528 = vmatmul.mubr.f32.gmra.mxu0 %v594
  %v1529 = vpop.f32.mrf.mxu0
  %v1530 = vadd.f32 0.0, %v1529
  %v1531 = vpop.f32.mrf.mxu0
  %1532 = vmatprep.mubr.f32.mxu0 0.0
  %1533 = vmatmul.mubr.f32.gmra.mxu0 %v597
  %v1534 = vpop.f32.mrf.mxu0
  %v1535 = vadd.f32 0.0, %v1534
  %v1536 = vpop.f32.mrf.mxu0
  %1537 = vmatprep.mubr.f32.mxu0 0.0
  %1538 = vmatmul.mubr.f32.gmra.mxu0 %v600
  %v1539 = vpop.f32.mrf.mxu0
  %v1540 = vadd.f32 0.0, %v1539
  %v1541 = vpop.f32.mrf.mxu0
  %1542 = vmatprep.mubr.f32.mxu0 0.0
  %1543 = vmatmul.mubr.f32.gmra.mxu0 %v603
  %v1544 = vpop.f32.mrf.mxu0
  %v1545 = vadd.f32 0.0, %v1544
  %v1546 = vpop.f32.mrf.mxu0
  %1547 = vmatprep.mubr.f32.mxu0 0.0
  %1548 = vmatmul.mubr.f32.gmra.mxu0 %v606
  %v1549 = vpop.f32.mrf.mxu0
  %v1550 = vadd.f32 0.0, %v1549
  %v1551 = vpop.f32.mrf.mxu0
  %1552 = vmatprep.mubr.f32.mxu0 0.0
  %1553 = vmatmul.mubr.f32.gmra.mxu0 %v609
  %v1554 = vpop.f32.mrf.mxu0
  %v1555 = vadd.f32 0.0, %v1554
  %v1556 = vpop.f32.mrf.mxu0
  %1557 = vmatprep.mubr.f32.mxu0 0.0
  %1558 = vmatmul.mubr.f32.gmra.mxu0 %v612
  %v1559 = vpop.f32.mrf.mxu0
  %v1560 = vadd.f32 0.0, %v1559
  %v1561 = vpop.f32.mrf.mxu0
  %1562 = vmatprep.mubr.f32.mxu0 0.0
  %1563 = vmatmul.mubr.f32.gmra.mxu0 %v615
  %v1564 = vpop.f32.mrf.mxu0
  %v1565 = vadd.f32 0.0, %v1564
  %v1566 = vpop.f32.mrf.mxu0
  %1567 = vmatprep.mubr.f32.mxu0 0.0
  %1568 = vmatmul.mubr.f32.gmra.mxu0 %v618
  %v1569 = vpop.f32.mrf.mxu0
  %v1570 = vadd.f32 0.0, %v1569
  %v1571 = vpop.f32.mrf.mxu0
  %1572 = vmatprep.mubr.f32.mxu0 0.0
  %1573 = vmatmul.mubr.f32.gmra.mxu0 %v621
  %v1574 = vpop.f32.mrf.mxu0
  %v1575 = vadd.f32 0.0, %v1574
  %v1576 = vpop.f32.mrf.mxu0
  %1577 = vmatprep.mubr.f32.mxu0 0.0
  %1578 = vmatmul.mubr.f32.gmra.mxu0 %v624
  %v1579 = vpop.f32.mrf.mxu0
  %v1580 = vadd.f32 0.0, %v1579
  %v1581 = vpop.f32.mrf.mxu0
  %1582 = vmatprep.mubr.f32.mxu0 0.0
  %1583 = vmatmul.mubr.f32.gmra.mxu0 %v627
  %v1584 = vpop.f32.mrf.mxu0
  %v1585 = vadd.f32 0.0, %v1584
  %v1586 = vpop.f32.mrf.mxu0
  %1587 = vmatprep.mubr.f32.mxu0 0.0
  %1588 = vmatmul.mubr.f32.gmra.mxu0 %v630
  %v1589 = vpop.f32.mrf.mxu0
  %v1590 = vadd.f32 0.0, %v1589
  %v1591 = vpop.f32.mrf.mxu0
  %1592 = vmatprep.mubr.f32.mxu0 0.0
  %1593 = vmatmul.mubr.f32.gmra.mxu0 %v633
  %v1594 = vpop.f32.mrf.mxu0
  %v1595 = vadd.f32 0.0, %v1594
  %v1596 = vpop.f32.mrf.mxu0
  %1597 = vmatprep.mubr.f32.mxu0 0.0
  %1598 = vmatmul.mubr.f32.gmra.mxu0 %v636
  %v1599 = vpop.f32.mrf.mxu0
  %v1600 = vadd.f32 0.0, %v1599
  %v1601 = vpop.f32.mrf.mxu0
  %1602 = vmatprep.mubr.f32.mxu0 0.0
  %1603 = vmatmul.mubr.f32.gmra.mxu0 %v639
  %v1604 = vpop.f32.mrf.mxu0
  %v1605 = vadd.f32 0.0, %v1604
  %v1606 = vpop.f32.mrf.mxu0
  %1607 = vmatprep.mubr.f32.mxu0 0.0
  %1608 = vmatmul.mubr.f32.gmra.mxu0 %v642
  %v1609 = vpop.f32.mrf.mxu0
  %v1610 = vadd.f32 0.0, %v1609
  %v1611 = vpop.f32.mrf.mxu0
  %1612 = vmatprep.mubr.f32.mxu0 0.0
  %1613 = vmatmul.mubr.f32.gmra.mxu0 %v645
  %v1614 = vpop.f32.mrf.mxu0
  %v1615 = vadd.f32 0.0, %v1614
  %v1616 = vpop.f32.mrf.mxu0
  %1617 = vmatprep.mubr.f32.mxu0 0.0
  %1618 = vmatmul.mubr.f32.gmra.mxu0 %v648
  %v1619 = vpop.f32.mrf.mxu0
  %v1620 = vadd.f32 0.0, %v1619
  %v1621 = vpop.f32.mrf.mxu0
  %1622 = vmatprep.mubr.f32.mxu0 0.0
  %1623 = vmatmul.mubr.f32.gmra.mxu0 %v651
  %v1624 = vpop.f32.mrf.mxu0
  %v1625 = vadd.f32 0.0, %v1624
  %v1626 = vpop.f32.mrf.mxu0
  %1627 = vmatprep.mubr.f32.mxu0 0.0
  %1628 = vmatmul.mubr.f32.gmra.mxu0 %v654
  %v1629 = vpop.f32.mrf.mxu0
  %v1630 = vadd.f32 0.0, %v1629
  %v1631 = vpop.f32.mrf.mxu0
  %1632 = vmatprep.mubr.f32.mxu0 0.0
  %1633 = vmatmul.mubr.f32.gmra.mxu0 %v657
  %v1634 = vpop.f32.mrf.mxu0
  %v1635 = vadd.f32 0.0, %v1634
  %v1636 = vpop.f32.mrf.mxu0
  %1637 = vmatprep.mubr.f32.mxu0 0.0
  %1638 = vmatmul.mubr.f32.gmra.mxu0 %v660
  %v1639 = vpop.f32.mrf.mxu0
  %v1640 = vadd.f32 0.0, %v1639
  %v1641 = vpop.f32.mrf.mxu0
  %1642 = vmatprep.mubr.f32.mxu0 0.0
  %1643 = vmatmul.mubr.f32.gmra.mxu0 %v663
  %v1644 = vpop.f32.mrf.mxu0
  %v1645 = vadd.f32 0.0, %v1644
  %v1646 = vpop.f32.mrf.mxu0
  %1647 = vmatprep.mubr.f32.mxu0 0.0
  %1648 = vmatmul.mubr.f32.gmra.mxu0 %v666
  %v1649 = vpop.f32.mrf.mxu0
  %v1650 = vadd.f32 0.0, %v1649
  %v1651 = vpop.f32.mrf.mxu0
  %1652 = vmatprep.mubr.f32.mxu0 0.0
  %1653 = vmatmul.mubr.f32.gmra.mxu0 %v669
  %v1654 = vpop.f32.mrf.mxu0
  %v1655 = vadd.f32 0.0, %v1654
  %v1656 = vpop.f32.mrf.mxu0
  %1657 = vmatprep.mubr.f32.mxu0 0.0
  %1658 = vmatmul.mubr.f32.gmra.mxu0 %v672
  %v1659 = vpop.f32.mrf.mxu0
  %v1660 = vadd.f32 0.0, %v1659
  %v1661 = vpop.f32.mrf.mxu0
  %1662 = vmatprep.mubr.f32.mxu0 0.0
  %1663 = vmatmul.mubr.f32.gmra.mxu0 %v675
  %v1664 = vpop.f32.mrf.mxu0
  %v1665 = vadd.f32 0.0, %v1664
  %v1666 = vpop.f32.mrf.mxu0
  %1667 = vmatprep.mubr.f32.mxu0 0.0
  %1668 = vmatmul.mubr.f32.gmra.mxu0 %v678
  %v1669 = vpop.f32.mrf.mxu0
  %v1670 = vadd.f32 0.0, %v1669
  %v1671 = vpop.f32.mrf.mxu0
  %1672 = vmatprep.mubr.f32.mxu0 0.0
  %1673 = vmatmul.mubr.f32.gmra.mxu0 %v681
  %v1674 = vpop.f32.mrf.mxu0
  %v1675 = vadd.f32 0.0, %v1674
  %v1676 = vpop.f32.mrf.mxu0
  %1677 = vmatprep.mubr.f32.mxu0 0.0
  %1678 = vmatmul.mubr.f32.gmra.mxu0 %v684
  %v1679 = vpop.f32.mrf.mxu0
  %v1680 = vadd.f32 0.0, %v1679
  %v1681 = vpop.f32.mrf.mxu0
  %1682 = vmatprep.mubr.f32.mxu0 0.0
  %1683 = vmatmul.mubr.f32.gmra.mxu0 %v687
  %v1684 = vpop.f32.mrf.mxu0
  %v1685 = vadd.f32 0.0, %v1684
  %v1686 = vpop.f32.mrf.mxu0
  %1687 = vmatprep.mubr.f32.mxu0 0.0
  %1688 = vmatmul.mubr.f32.gmra.mxu0 %v690
  %v1689 = vpop.f32.mrf.mxu0
  %v1690 = vadd.f32 0.0, %v1689
  %v1691 = vpop.f32.mrf.mxu0
  %1692 = vmatprep.mubr.f32.mxu0 0.0
  %1693 = vmatmul.mubr.f32.gmra.mxu0 %v693
  %v1694 = vpop.f32.mrf.mxu0
  %v1695 = vadd.f32 0.0, %v1694
  %v1696 = vpop.f32.mrf.mxu0
  %1697 = vmatprep.mubr.f32.mxu0 0.0
  %1698 = vmatmul.mubr.f32.gmra.mxu0 %v696
  %v1699 = vpop.f32.mrf.mxu0
  %v1700 = vadd.f32 0.0, %v1699
  %v1701 = vpop.f32.mrf.mxu0
  %1702 = vmatprep.mubr.f32.mxu0 0.0
  %1703 = vmatmul.mubr.f32.gmra.mxu0 %v699
  %v1704 = vpop.f32.mrf.mxu0
  %v1705 = vadd.f32 0.0, %v1704
  %v1706 = vpop.f32.mrf.mxu0
  %1707 = vmatprep.mubr.f32.mxu0 0.0
  %1708 = vmatmul.mubr.f32.gmra.mxu0 %v702
  %v1709 = vpop.f32.mrf.mxu0
  %v1710 = vadd.f32 0.0, %v1709
  %v1711 = vpop.f32.mrf.mxu0
  %1712 = vmatprep.mubr.f32.mxu0 0.0
  %1713 = vmatmul.mubr.f32.gmra.mxu0 %v705
  %v1714 = vpop.f32.mrf.mxu0
  %v1715 = vadd.f32 0.0, %v1714
  %v1716 = vpop.f32.mrf.mxu0
  %1717 = vmatprep.mubr.f32.mxu0 0.0
  %1718 = vmatmul.mubr.f32.gmra.mxu0 %v708
  %v1719 = vpop.f32.mrf.mxu0
  %v1720 = vadd.f32 0.0, %v1719
  %v1721 = vpop.f32.mrf.mxu0
  %1722 = vmatprep.mubr.f32.mxu0 0.0
  %1723 = vmatmul.mubr.f32.gmra.mxu0 %v711
  %v1724 = vpop.f32.mrf.mxu0
  %v1725 = vadd.f32 0.0, %v1724
  %v1726 = vpop.f32.mrf.mxu0
  %1727 = vmatprep.mubr.f32.mxu0 0.0
  %1728 = vmatmul.mubr.f32.gmra.mxu0 %v714
  %v1729 = vpop.f32.mrf.mxu0
  %v1730 = vadd.f32 0.0, %v1729
  %v1731 = vpop.f32.mrf.mxu0
  %1732 = vmatprep.mubr.f32.mxu0 0.0
  %1733 = vmatmul.mubr.f32.gmra.mxu0 %v717
  %v1734 = vpop.f32.mrf.mxu0
  %v1735 = vadd.f32 0.0, %v1734
  %v1736 = vpop.f32.mrf.mxu0
  %1737 = vmatprep.mubr.f32.mxu0 0.0
  %1738 = vmatmul.mubr.f32.gmra.mxu0 %v720
  %v1739 = vpop.f32.mrf.mxu0
  %v1740 = vadd.f32 0.0, %v1739
  %v1741 = vpop.f32.mrf.mxu0
  %1742 = vmatprep.mubr.f32.mxu0 0.0
  %1743 = vmatmul.mubr.f32.gmra.mxu0 %v723
  %v1744 = vpop.f32.mrf.mxu0
  %v1745 = vadd.f32 0.0, %v1744
  %v1746 = vpop.f32.mrf.mxu0
  %1747 = vmatprep.mubr.f32.mxu0 0.0
  %1748 = vmatmul.mubr.f32.gmra.mxu0 %v726
  %v1749 = vpop.f32.mrf.mxu0
  %v1750 = vadd.f32 0.0, %v1749
  %v1751 = vpop.f32.mrf.mxu0
  %1752 = vmatprep.mubr.f32.mxu0 0.0
  %1753 = vmatmul.mubr.f32.gmra.mxu0 %v729
  %v1754 = vpop.f32.mrf.mxu0
  %v1755 = vadd.f32 0.0, %v1754
  %v1756 = vpop.f32.mrf.mxu0
  %1757 = vmatprep.mubr.f32.mxu0 0.0
  %1758 = vmatmul.mubr.f32.gmra.mxu0 %v732
  %v1759 = vpop.f32.mrf.mxu0
  %v1760 = vadd.f32 0.0, %v1759
  %v1761 = vpop.f32.mrf.mxu0
  %1762 = vmatprep.mubr.f32.mxu0 0.0
  %1763 = vmatmul.mubr.f32.gmra.mxu0 %v735
  %v1764 = vpop.f32.mrf.mxu0
  %v1765 = vadd.f32 0.0, %v1764
  %v1766 = vpop.f32.mrf.mxu0
  %1767 = vmatprep.mubr.f32.mxu0 0.0
  %1768 = vmatmul.mubr.f32.gmra.mxu0 %v738
  %v1769 = vpop.f32.mrf.mxu0
  %v1770 = vadd.f32 0.0, %v1769
  %v1771 = vpop.f32.mrf.mxu0
  %1772 = vmatprep.mubr.f32.mxu0 0.0
  %1773 = vmatmul.mubr.f32.gmra.mxu0 %v741
  %v1774 = vpop.f32.mrf.mxu0
  %v1775 = vadd.f32 0.0, %v1774
  %v1776 = vpop.f32.mrf.mxu0
  %1777 = vmatprep.mubr.f32.mxu0 0.0
  %1778 = vmatmul.mubr.f32.gmra.mxu0 %v744
  %v1779 = vpop.f32.mrf.mxu0
  %v1780 = vadd.f32 0.0, %v1779
  %v1781 = vpop.f32.mrf.mxu0
  %1782 = vmatprep.mubr.f32.mxu0 0.0
  %1783 = vmatmul.mubr.f32.gmra.mxu0 %v747
  %v1784 = vpop.f32.mrf.mxu0
  %v1785 = vadd.f32 0.0, %v1784
  %v1786 = vpop.f32.mrf.mxu0
  %1787 = vmatprep.mubr.f32.mxu0 0.0
  %1788 = vmatmul.mubr.f32.gmra.mxu0 %v750
  %v1789 = vpop.f32.mrf.mxu0
  %v1790 = vadd.f32 0.0, %v1789
  %v1791 = vpop.f32.mrf.mxu0
  %1792 = vmatprep.mubr.f32.mxu0 0.0
  %1793 = vmatmul.mubr.f32.gmra.mxu0 %v753
  %v1794 = vpop.f32.mrf.mxu0
  %v1795 = vadd.f32 0.0, %v1794
  %v1796 = vpop.f32.mrf.mxu0
  %1797 = vmatprep.mubr.f32.mxu0 0.0
  %1798 = vmatmul.mubr.f32.gmra.mxu0 %v756
  %v1799 = vpop.f32.mrf.mxu0
  %v1800 = vadd.f32 0.0, %v1799
  %v1801 = vpop.f32.mrf.mxu0
  %1802 = vmatprep.mubr.f32.mxu0 0.0
  %1803 = vmatmul.mubr.f32.gmra.mxu0 %v759
  %v1804 = vpop.f32.mrf.mxu0
  %v1805 = vadd.f32 0.0, %v1804
  %v1806 = vpop.f32.mrf.mxu0
  %1807 = vmatprep.mubr.f32.mxu0 0.0
  %1808 = vmatmul.mubr.f32.gmra.mxu0 %v762
  %v1809 = vpop.f32.mrf.mxu0
  %v1810 = vadd.f32 0.0, %v1809
  %v1811 = vpop.f32.mrf.mxu0
  %1812 = vmatprep.mubr.f32.mxu0 0.0
  %1813 = vmatmul.mubr.f32.gmra.mxu0 %v765
  %v1814 = vpop.f32.mrf.mxu0
  %v1815 = vadd.f32 0.0, %v1814
  %v1816 = vpop.f32.mrf.mxu0
  %1817 = vmatprep.mubr.f32.mxu0 0.0
  %1818 = vmatmul.mubr.f32.gmra.mxu0 %v768
  %v1819 = vpop.f32.mrf.mxu0
  %v1820 = vadd.f32 0.0, %v1819
  %v1821 = vpop.f32.mrf.mxu0
  %1822 = vmatprep.mubr.f32.mxu0 0.0
  %1823 = vmatmul.mubr.f32.gmra.mxu0 %v771
  %v1824 = vpop.f32.mrf.mxu0
  %v1825 = vadd.f32 0.0, %v1824
  %v1826 = vpop.f32.mrf.mxu0
  %1827 = vmatprep.mubr.f32.mxu0 0.0
  %1828 = vmatmul.mubr.f32.gmra.mxu0 %v774
  %v1829 = vpop.f32.mrf.mxu0
  %v1830 = vadd.f32 0.0, %v1829
  %v1831 = vpop.f32.mrf.mxu0
  %1832 = vmatprep.mubr.f32.mxu0 0.0
  %1833 = vmatmul.mubr.f32.gmra.mxu0 %v777
  %v1834 = vpop.f32.mrf.mxu0
  %v1835 = vadd.f32 0.0, %v1834
  %v1836 = vpop.f32.mrf.mxu0
  %1837 = vmatprep.mubr.f32.mxu0 0.0
  %1838 = vmatmul.mubr.f32.gmra.mxu0 %v780
  %v1839 = vpop.f32.mrf.mxu0
  %v1840 = vadd.f32 0.0, %v1839
  %v1841 = vpop.f32.mrf.mxu0
  %1842 = vmatprep.mubr.f32.mxu0 0.0
  %1843 = vmatmul.mubr.f32.gmra.mxu0 %v783
  %v1844 = vpop.f32.mrf.mxu0
  %v1845 = vadd.f32 0.0, %v1844
  %v1846 = vpop.f32.mrf.mxu0
  %1847 = vmatprep.mubr.f32.mxu0 0.0
  %1848 = vmatmul.mubr.f32.gmra.mxu0 %v786
  %v1849 = vpop.f32.mrf.mxu0
  %v1850 = vadd.f32 0.0, %v1849
  %v1851 = vpop.f32.mrf.mxu0
  %1852 = vmatprep.mubr.f32.mxu0 0.0
  %1853 = vmatmul.mubr.f32.gmra.mxu0 %v789
  %v1854 = vpop.f32.mrf.mxu0
  %v1855 = vadd.f32 0.0, %v1854
  %v1856 = vpop.f32.mrf.mxu0
  %1857 = vmatprep.mubr.f32.mxu0 0.0
  %1858 = vmatmul.mubr.f32.gmra.mxu0 %v792
  %v1859 = vpop.f32.mrf.mxu0
  %v1860 = vadd.f32 0.0, %v1859
  %v1861 = vpop.f32.mrf.mxu0
  %1862 = vmatprep.mubr.f32.mxu0 0.0
  %1863 = vmatmul.mubr.f32.gmra.mxu0 %v795
  %v1864 = vpop.f32.mrf.mxu0
  %v1865 = vadd.f32 0.0, %v1864
  %v1866 = vpop.f32.mrf.mxu0
  %1867 = vmatprep.mubr.f32.mxu0 0.0
  %1868 = vmatmul.mubr.f32.gmra.mxu0 %v798
  %v1869 = vpop.f32.mrf.mxu0
  %v1870 = vadd.f32 0.0, %v1869
  %v1871 = vpop.f32.mrf.mxu0
  %1872 = vmatprep.mubr.f32.mxu0 0.0
  %1873 = vmatmul.mubr.f32.gmra.mxu0 %v801
  %v1874 = vpop.f32.mrf.mxu0
  %v1875 = vadd.f32 0.0, %v1874
  %v1876 = vpop.f32.mrf.mxu0
  %1877 = vmatprep.mubr.f32.mxu0 0.0
  %1878 = vmatmul.mubr.f32.gmra.mxu0 %v804
  %v1879 = vpop.f32.mrf.mxu0
  %v1880 = vadd.f32 0.0, %v1879
  %v1881 = vpop.f32.mrf.mxu0
  %1882 = vmatprep.mubr.f32.mxu0 0.0
  %1883 = vmatmul.mubr.f32.gmra.mxu0 %v807
  %v1884 = vpop.f32.mrf.mxu0
  %v1885 = vadd.f32 0.0, %v1884
  %v1886 = vpop.f32.mrf.mxu0
  %1887 = vmatprep.mubr.f32.mxu0 0.0
  %1888 = vmatmul.mubr.f32.gmra.mxu0 %v810
  %v1889 = vpop.f32.mrf.mxu0
  %v1890 = vadd.f32 0.0, %v1889
  %v1891 = vpop.f32.mrf.mxu0
  %1892 = vmatprep.mubr.f32.mxu0 0.0
  %1893 = vmatmul.mubr.f32.gmra.mxu0 %v813
  %v1894 = vpop.f32.mrf.mxu0
  %v1895 = vadd.f32 0.0, %v1894
  %v1896 = vpop.f32.mrf.mxu0
  %1897 = vmatprep.mubr.f32.mxu0 0.0
  %1898 = vmatmul.mubr.f32.gmra.mxu0 %v816
  %v1899 = vpop.f32.mrf.mxu0
  %v1900 = vadd.f32 0.0, %v1899
  %v1901 = vpop.f32.mrf.mxu0
  %1902 = vmatprep.mubr.f32.mxu0 0.0
  %1903 = vmatmul.mubr.f32.gmra.mxu0 %v819
  %v1904 = vpop.f32.mrf.mxu0
  %v1905 = vadd.f32 0.0, %v1904
  %v1906 = vpop.f32.mrf.mxu0
  %1907 = vmatprep.mubr.f32.mxu0 0.0
  %1908 = vmatmul.mubr.f32.gmra.mxu0 %v822
  %v1909 = vpop.f32.mrf.mxu0
  %v1910 = vadd.f32 0.0, %v1909
  %v1911 = vpop.f32.mrf.mxu0
  %1912 = vmatprep.mubr.f32.mxu0 0.0
  %1913 = vmatmul.mubr.f32.gmra.mxu0 %v825
  %v1914 = vpop.f32.mrf.mxu0
  %v1915 = vadd.f32 0.0, %v1914
  %v1916 = vpop.f32.mrf.mxu0
  %1917 = vmatprep.mubr.f32.mxu0 0.0
  %1918 = vmatmul.mubr.f32.gmra.mxu0 %v828
  %v1919 = vpop.f32.mrf.mxu0
  %v1920 = vadd.f32 0.0, %v1919
  %v1921 = vpop.f32.mrf.mxu0
  %1922 = vmatprep.mubr.f32.mxu0 0.0
  %1923 = vmatmul.mubr.f32.gmra.mxu0 %v831
  %v1924 = vpop.f32.mrf.mxu0
  %v1925 = vadd.f32 0.0, %v1924
  %v1926 = vpop.f32.mrf.mxu0
  %1927 = vmatprep.mubr.f32.mxu0 0.0
  %1928 = vmatmul.mubr.f32.gmra.mxu0 %v834
  %v1929 = vpop.f32.mrf.mxu0
  %v1930 = vadd.f32 0.0, %v1929
  %v1931 = vpop.f32.mrf.mxu0
  %1932 = vmatprep.mubr.f32.mxu0 0.0
  %1933 = vmatmul.mubr.f32.gmra.mxu0 %v837
  %v1934 = vpop.f32.mrf.mxu0
  %v1935 = vadd.f32 0.0, %v1934
  %v1936 = vpop.f32.mrf.mxu0
  %1937 = vmatprep.mubr.f32.mxu0 0.0
  %1938 = vmatmul.mubr.f32.gmra.mxu0 %v840
  %v1939 = vpop.f32.mrf.mxu0
  %v1940 = vadd.f32 0.0, %v1939
  %v1941 = vpop.f32.mrf.mxu0
  %1942 = vmatprep.mubr.f32.mxu0 0.0
  %1943 = vmatmul.mubr.f32.gmra.mxu0 %v843
  %v1944 = vpop.f32.mrf.mxu0
  %v1945 = vadd.f32 0.0, %v1944
  %v1946 = vpop.f32.mrf.mxu0
  %1947 = vmatprep.mubr.f32.mxu0 0.0
  %1948 = vmatmul.mubr.f32.gmra.mxu0 %v846
  %v1949 = vpop.f32.mrf.mxu0
  %v1950 = vadd.f32 0.0, %v1949
  %v1951 = vpop.f32.mrf.mxu0
  %1952 = vmatprep.mubr.f32.mxu0 0.0
  %1953 = vmatmul.mubr.f32.gmra.mxu0 %v849
  %v1954 = vpop.f32.mrf.mxu0
  %v1955 = vadd.f32 0.0, %v1954
  %v1956 = vpop.f32.mrf.mxu0
  %1957 = vmatprep.mubr.f32.mxu0 0.0
  %1958 = vmatmul.mubr.f32.gmra.mxu0 %v852
  %v1959 = vpop.f32.mrf.mxu0
  %v1960 = vadd.f32 0.0, %v1959
  %v1961 = vpop.f32.mrf.mxu0
  %1962 = vdwg.mxu0
  %vm1963 = vcmask 130048
  %1964 = vst.msk [vmem:[#allocation2] sm:$0xff] %vm1963, %v925
  %1965 = vst.msk [vmem:[#allocation2 + $0x8] sm:$0xff] %vm1963, %v930
  %1966 = vst.msk [vmem:[#allocation2 + $0x10] sm:$0xff] %vm1963, %v935
  %1967 = vst.msk [vmem:[#allocation2 + $0x18] sm:$0xff] %vm1963, %v940
  %1968 = vst.msk [vmem:[#allocation2 + $0x20] sm:$0xff] %vm1963, %v945
  %1969 = vst.msk [vmem:[#allocation2 + $0x28] sm:$0xff] %vm1963, %v950
  %1970 = vst.msk [vmem:[#allocation2 + $0x30] sm:$0xff] %vm1963, %v955
  %1971 = vst.msk [vmem:[#allocation2 + $0x38] sm:$0xff] %vm1963, %v960
  %1972 = vst.msk [vmem:[#allocation2 + $0x40] sm:$0xff] %vm1963, %v965
  %1973 = vst.msk [vmem:[#allocation2 + $0x48] sm:$0xff] %vm1963, %v970
  %1974 = vst.msk [vmem:[#allocation2 + $0x50] sm:$0xff] %vm1963, %v975
  %1975 = vst.msk [vmem:[#allocation2 + $0x58] sm:$0xff] %vm1963, %v980
  %1976 = vst.msk [vmem:[#allocation2 + $0x60] sm:$0xff] %vm1963, %v985
  %1977 = vst.msk [vmem:[#allocation2 + $0x68] sm:$0xff] %vm1963, %v990
  %1978 = vst.msk [vmem:[#allocation2 + $0x70] sm:$0xff] %vm1963, %v995
  %1979 = vst.msk [vmem:[#allocation2 + $0x78] sm:$0xff] %vm1963, %v1000
  %1980 = vst.msk [vmem:[#allocation2 + $0x80] sm:$0xff] %vm1963, %v1005
  %1981 = vst.msk [vmem:[#allocation2 + $0x88] sm:$0xff] %vm1963, %v1010
  %1982 = vst.msk [vmem:[#allocation2 + $0x90] sm:$0xff] %vm1963, %v1015
  %1983 = vst.msk [vmem:[#allocation2 + $0x98] sm:$0xff] %vm1963, %v1020
  %1984 = vst.msk [vmem:[#allocation2 + $0xa0] sm:$0xff] %vm1963, %v1025
  %1985 = vst.msk [vmem:[#allocation2 + $0xa8] sm:$0xff] %vm1963, %v1030
  %1986 = vst.msk [vmem:[#allocation2 + $0xb0] sm:$0xff] %vm1963, %v1035
  %1987 = vst.msk [vmem:[#allocation2 + $0xb8] sm:$0xff] %vm1963, %v1040
  %1988 = vst.msk [vmem:[#allocation2 + $0xc0] sm:$0xff] %vm1963, %v1045
  %1989 = vst.msk [vmem:[#allocation2 + $0xc8] sm:$0xff] %vm1963, %v1050
  %1990 = vst.msk [vmem:[#allocation2 + $0xd0] sm:$0xff] %vm1963, %v1055
  %1991 = vst.msk [vmem:[#allocation2 + $0xd8] sm:$0xff] %vm1963, %v1060
  %1992 = vst.msk [vmem:[#allocation2 + $0xe0] sm:$0xff] %vm1963, %v1065
  %1993 = vst.msk [vmem:[#allocation2 + $0xe8] sm:$0xff] %vm1963, %v1070
  %1994 = vst.msk [vmem:[#allocation2 + $0xf0] sm:$0xff] %vm1963, %v1075
  %1995 = vst.msk [vmem:[#allocation2 + $0xf8] sm:$0xff] %vm1963, %v1080
  %1996 = vst.msk [vmem:[#allocation2 + $0x100] sm:$0xff] %vm1963, %v1085
  %1997 = vst.msk [vmem:[#allocation2 + $0x108] sm:$0xff] %vm1963, %v1090
  %1998 = vst.msk [vmem:[#allocation2 + $0x110] sm:$0xff] %vm1963, %v1095
  %1999 = vst.msk [vmem:[#allocation2 + $0x118] sm:$0xff] %vm1963, %v1100
  %2000 = vst.msk [vmem:[#allocation2 + $0x120] sm:$0xff] %vm1963, %v1105
  %2001 = vst.msk [vmem:[#allocation2 + $0x128] sm:$0xff] %vm1963, %v1110
  %2002 = vst.msk [vmem:[#allocation2 + $0x130] sm:$0xff] %vm1963, %v1115
  %2003 = vst.msk [vmem:[#allocation2 + $0x138] sm:$0xff] %vm1963, %v1120
  %2004 = vst.msk [vmem:[#allocation2 + $0x140] sm:$0xff] %vm1963, %v1125
  %2005 = vst.msk [vmem:[#allocation2 + $0x148] sm:$0xff] %vm1963, %v1130
  %2006 = vst.msk [vmem:[#allocation2 + $0x150] sm:$0xff] %vm1963, %v1135
  %2007 = vst.msk [vmem:[#allocation2 + $0x158] sm:$0xff] %vm1963, %v1140
  %2008 = vst.msk [vmem:[#allocation2 + $0x160] sm:$0xff] %vm1963, %v1145
  %2009 = vst.msk [vmem:[#allocation2 + $0x168] sm:$0xff] %vm1963, %v1150
  %2010 = vst.msk [vmem:[#allocation2 + $0x170] sm:$0xff] %vm1963, %v1155
  %2011 = vst.msk [vmem:[#allocation2 + $0x178] sm:$0xff] %vm1963, %v1160
  %2012 = vst.msk [vmem:[#allocation2 + $0x180] sm:$0xff] %vm1963, %v1165
  %2013 = vst.msk [vmem:[#allocation2 + $0x188] sm:$0xff] %vm1963, %v1170
  %2014 = vst.msk [vmem:[#allocation2 + $0x190] sm:$0xff] %vm1963, %v1175
  %2015 = vst.msk [vmem:[#allocation2 + $0x198] sm:$0xff] %vm1963, %v1180
  %2016 = vst.msk [vmem:[#allocation2 + $0x1a0] sm:$0xff] %vm1963, %v1185
  %2017 = vst.msk [vmem:[#allocation2 + $0x1a8] sm:$0xff] %vm1963, %v1190
  %2018 = vst.msk [vmem:[#allocation2 + $0x1b0] sm:$0xff] %vm1963, %v1195
  %2019 = vst.msk [vmem:[#allocation2 + $0x1b8] sm:$0xff] %vm1963, %v1200
  %2020 = vst.msk [vmem:[#allocation2 + $0x1c0] sm:$0xff] %vm1963, %v1205
  %2021 = vst.msk [vmem:[#allocation2 + $0x1c8] sm:$0xff] %vm1963, %v1210
  %2022 = vst.msk [vmem:[#allocation2 + $0x1d0] sm:$0xff] %vm1963, %v1215
  %2023 = vst.msk [vmem:[#allocation2 + $0x1d8] sm:$0xff] %vm1963, %v1220
  %2024 = vst.msk [vmem:[#allocation2 + $0x1e0] sm:$0xff] %vm1963, %v1225
  %2025 = vst.msk [vmem:[#allocation2 + $0x1e8] sm:$0xff] %vm1963, %v1230
  %2026 = vst.msk [vmem:[#allocation2 + $0x1f0] sm:$0xff] %vm1963, %v1235
  %2027 = vst.msk [vmem:[#allocation2 + $0x1f8] sm:$0xff] %vm1963, %v1240
  %2028 = vst.msk [vmem:[#allocation2 + $0x200] sm:$0xff] %vm1963, %v1245
  %2029 = vst.msk [vmem:[#allocation2 + $0x208] sm:$0xff] %vm1963, %v1250
  %2030 = vst.msk [vmem:[#allocation2 + $0x210] sm:$0xff] %vm1963, %v1255
  %2031 = vst.msk [vmem:[#allocation2 + $0x218] sm:$0xff] %vm1963, %v1260
  %2032 = vst.msk [vmem:[#allocation2 + $0x220] sm:$0xff] %vm1963, %v1265
  %2033 = vst.msk [vmem:[#allocation2 + $0x228] sm:$0xff] %vm1963, %v1270
  %2034 = vst.msk [vmem:[#allocation2 + $0x230] sm:$0xff] %vm1963, %v1275
  %2035 = vst.msk [vmem:[#allocation2 + $0x238] sm:$0xff] %vm1963, %v1280
  %2036 = vst.msk [vmem:[#allocation2 + $0x240] sm:$0xff] %vm1963, %v1285
  %2037 = vst.msk [vmem:[#allocation2 + $0x248] sm:$0xff] %vm1963, %v1290
  %2038 = vst.msk [vmem:[#allocation2 + $0x250] sm:$0xff] %vm1963, %v1295
  %2039 = vst.msk [vmem:[#allocation2 + $0x258] sm:$0xff] %vm1963, %v1300
  %2040 = vst.msk [vmem:[#allocation2 + $0x260] sm:$0xff] %vm1963, %v1305
  %2041 = vst.msk [vmem:[#allocation2 + $0x268] sm:$0xff] %vm1963, %v1310
  %2042 = vst.msk [vmem:[#allocation2 + $0x270] sm:$0xff] %vm1963, %v1315
  %2043 = vst.msk [vmem:[#allocation2 + $0x278] sm:$0xff] %vm1963, %v1320
  %2044 = vst.msk [vmem:[#allocation2 + $0x280] sm:$0xff] %vm1963, %v1325
  %2045 = vst.msk [vmem:[#allocation2 + $0x288] sm:$0xff] %vm1963, %v1330
  %2046 = vst.msk [vmem:[#allocation2 + $0x290] sm:$0xff] %vm1963, %v1335
  %2047 = vst.msk [vmem:[#allocation2 + $0x298] sm:$0xff] %vm1963, %v1340
  %2048 = vst.msk [vmem:[#allocation2 + $0x2a0] sm:$0xff] %vm1963, %v1345
  %2049 = vst.msk [vmem:[#allocation2 + $0x2a8] sm:$0xff] %vm1963, %v1350
  %2050 = vst.msk [vmem:[#allocation2 + $0x2b0] sm:$0xff] %vm1963, %v1355
  %2051 = vst.msk [vmem:[#allocation2 + $0x2b8] sm:$0xff] %vm1963, %v1360
  %2052 = vst.msk [vmem:[#allocation2 + $0x2c0] sm:$0xff] %vm1963, %v1365
  %2053 = vst.msk [vmem:[#allocation2 + $0x2c8] sm:$0xff] %vm1963, %v1370
  %2054 = vst.msk [vmem:[#allocation2 + $0x2d0] sm:$0xff] %vm1963, %v1375
  %2055 = vst.msk [vmem:[#allocation2 + $0x2d8] sm:$0xff] %vm1963, %v1380
  %2056 = vst.msk [vmem:[#allocation2 + $0x2e0] sm:$0xff] %vm1963, %v1385
  %2057 = vst.msk [vmem:[#allocation2 + $0x2e8] sm:$0xff] %vm1963, %v1390
  %2058 = vst.msk [vmem:[#allocation2 + $0x2f0] sm:$0xff] %vm1963, %v1395
  %2059 = vst.msk [vmem:[#allocation2 + $0x2f8] sm:$0xff] %vm1963, %v1400
  %2060 = vst.msk [vmem:[#allocation2 + $0x300] sm:$0xff] %vm1963, %v1405
  %2061 = vst.msk [vmem:[#allocation2 + $0x308] sm:$0xff] %vm1963, %v1410
  %2062 = vst.msk [vmem:[#allocation2 + $0x310] sm:$0xff] %vm1963, %v1415
  %2063 = vst.msk [vmem:[#allocation2 + $0x318] sm:$0xff] %vm1963, %v1420
  %2064 = vst.msk [vmem:[#allocation2 + $0x320] sm:$0xff] %vm1963, %v1425
  %2065 = vst.msk [vmem:[#allocation2 + $0x328] sm:$0xff] %vm1963, %v1430
  %2066 = vst.msk [vmem:[#allocation2 + $0x330] sm:$0xff] %vm1963, %v1435
  %2067 = vst.msk [vmem:[#allocation2 + $0x338] sm:$0xff] %vm1963, %v1440
  %2068 = vst.msk [vmem:[#allocation2 + $0x340] sm:$0xff] %vm1963, %v1445
  %2069 = vst.msk [vmem:[#allocation2 + $0x348] sm:$0xff] %vm1963, %v1450
  %2070 = vst.msk [vmem:[#allocation2 + $0x350] sm:$0xff] %vm1963, %v1455
  %2071 = vst.msk [vmem:[#allocation2 + $0x358] sm:$0xff] %vm1963, %v1460
  %2072 = vst.msk [vmem:[#allocation2 + $0x360] sm:$0xff] %vm1963, %v1465
  %2073 = vst.msk [vmem:[#allocation2 + $0x368] sm:$0xff] %vm1963, %v1470
  %2074 = vst.msk [vmem:[#allocation2 + $0x370] sm:$0xff] %vm1963, %v1475
  %2075 = vst.msk [vmem:[#allocation2 + $0x378] sm:$0xff] %vm1963, %v1480
  %2076 = vst.msk [vmem:[#allocation2 + $0x380] sm:$0xff] %vm1963, %v1485
  %2077 = vst.msk [vmem:[#allocation2 + $0x388] sm:$0xff] %vm1963, %v1490
  %2078 = vst.msk [vmem:[#allocation2 + $0x390] sm:$0xff] %vm1963, %v1495
  %2079 = vst.msk [vmem:[#allocation2 + $0x398] sm:$0xff] %vm1963, %v1500
  %2080 = vst.msk [vmem:[#allocation2 + $0x3a0] sm:$0xff] %vm1963, %v1505
  %2081 = vst.msk [vmem:[#allocation2 + $0x3a8] sm:$0xff] %vm1963, %v1510
  %2082 = vst.msk [vmem:[#allocation2 + $0x3b0] sm:$0xff] %vm1963, %v1515
  %2083 = vst.msk [vmem:[#allocation2 + $0x3b8] sm:$0xff] %vm1963, %v1520
  %2084 = vst.msk [vmem:[#allocation2 + $0x3c0] sm:$0xff] %vm1963, %v1525
  %2085 = vst.msk [vmem:[#allocation2 + $0x3c8] sm:$0xff] %vm1963, %v1530
  %2086 = vst.msk [vmem:[#allocation2 + $0x3d0] sm:$0xff] %vm1963, %v1535
  %2087 = vst.msk [vmem:[#allocation2 + $0x3d8] sm:$0xff] %vm1963, %v1540
  %2088 = vst.msk [vmem:[#allocation2 + $0x3e0] sm:$0xff] %vm1963, %v1545
  %2089 = vst.msk [vmem:[#allocation2 + $0x3e8] sm:$0xff] %vm1963, %v1550
  %2090 = vst.msk [vmem:[#allocation2 + $0x3f0] sm:$0xff] %vm1963, %v1555
  %2091 = vst.msk [vmem:[#allocation2 + $0x3f8] sm:$0xff] %vm1963, %v1560
  %2092 = vst.msk [vmem:[#allocation2 + $0x400] sm:$0xff] %vm1963, %v1565
  %2093 = vst.msk [vmem:[#allocation2 + $0x408] sm:$0xff] %vm1963, %v1570
  %2094 = vst.msk [vmem:[#allocation2 + $0x410] sm:$0xff] %vm1963, %v1575
  %2095 = vst.msk [vmem:[#allocation2 + $0x418] sm:$0xff] %vm1963, %v1580
  %2096 = vst.msk [vmem:[#allocation2 + $0x420] sm:$0xff] %vm1963, %v1585
  %2097 = vst.msk [vmem:[#allocation2 + $0x428] sm:$0xff] %vm1963, %v1590
  %2098 = vst.msk [vmem:[#allocation2 + $0x430] sm:$0xff] %vm1963, %v1595
  %2099 = vst.msk [vmem:[#allocation2 + $0x438] sm:$0xff] %vm1963, %v1600
  %2100 = vst.msk [vmem:[#allocation2 + $0x440] sm:$0xff] %vm1963, %v1605
  %2101 = vst.msk [vmem:[#allocation2 + $0x448] sm:$0xff] %vm1963, %v1610
  %2102 = vst.msk [vmem:[#allocation2 + $0x450] sm:$0xff] %vm1963, %v1615
  %2103 = vst.msk [vmem:[#allocation2 + $0x458] sm:$0xff] %vm1963, %v1620
  %2104 = vst.msk [vmem:[#allocation2 + $0x460] sm:$0xff] %vm1963, %v1625
  %2105 = vst.msk [vmem:[#allocation2 + $0x468] sm:$0xff] %vm1963, %v1630
  %2106 = vst.msk [vmem:[#allocation2 + $0x470] sm:$0xff] %vm1963, %v1635
  %2107 = vst.msk [vmem:[#allocation2 + $0x478] sm:$0xff] %vm1963, %v1640
  %2108 = vst.msk [vmem:[#allocation2 + $0x480] sm:$0xff] %vm1963, %v1645
  %2109 = vst.msk [vmem:[#allocation2 + $0x488] sm:$0xff] %vm1963, %v1650
  %2110 = vst.msk [vmem:[#allocation2 + $0x490] sm:$0xff] %vm1963, %v1655
  %2111 = vst.msk [vmem:[#allocation2 + $0x498] sm:$0xff] %vm1963, %v1660
  %2112 = vst.msk [vmem:[#allocation2 + $0x4a0] sm:$0xff] %vm1963, %v1665
  %2113 = vst.msk [vmem:[#allocation2 + $0x4a8] sm:$0xff] %vm1963, %v1670
  %2114 = vst.msk [vmem:[#allocation2 + $0x4b0] sm:$0xff] %vm1963, %v1675
  %2115 = vst.msk [vmem:[#allocation2 + $0x4b8] sm:$0xff] %vm1963, %v1680
  %2116 = vst.msk [vmem:[#allocation2 + $0x4c0] sm:$0xff] %vm1963, %v1685
  %2117 = vst.msk [vmem:[#allocation2 + $0x4c8] sm:$0xff] %vm1963, %v1690
  %2118 = vst.msk [vmem:[#allocation2 + $0x4d0] sm:$0xff] %vm1963, %v1695
  %2119 = vst.msk [vmem:[#allocation2 + $0x4d8] sm:$0xff] %vm1963, %v1700
  %2120 = vst.msk [vmem:[#allocation2 + $0x4e0] sm:$0xff] %vm1963, %v1705
  %2121 = vst.msk [vmem:[#allocation2 + $0x4e8] sm:$0xff] %vm1963, %v1710
  %2122 = vst.msk [vmem:[#allocation2 + $0x4f0] sm:$0xff] %vm1963, %v1715
  %2123 = vst.msk [vmem:[#allocation2 + $0x4f8] sm:$0xff] %vm1963, %v1720
  %2124 = vst.msk [vmem:[#allocation2 + $0x500] sm:$0xff] %vm1963, %v1725
  %2125 = vst.msk [vmem:[#allocation2 + $0x508] sm:$0xff] %vm1963, %v1730
  %2126 = vst.msk [vmem:[#allocation2 + $0x510] sm:$0xff] %vm1963, %v1735
  %2127 = vst.msk [vmem:[#allocation2 + $0x518] sm:$0xff] %vm1963, %v1740
  %2128 = vst.msk [vmem:[#allocation2 + $0x520] sm:$0xff] %vm1963, %v1745
  %2129 = vst.msk [vmem:[#allocation2 + $0x528] sm:$0xff] %vm1963, %v1750
  %2130 = vst.msk [vmem:[#allocation2 + $0x530] sm:$0xff] %vm1963, %v1755
  %2131 = vst.msk [vmem:[#allocation2 + $0x538] sm:$0xff] %vm1963, %v1760
  %2132 = vst.msk [vmem:[#allocation2 + $0x540] sm:$0xff] %vm1963, %v1765
  %2133 = vst.msk [vmem:[#allocation2 + $0x548] sm:$0xff] %vm1963, %v1770
  %2134 = vst.msk [vmem:[#allocation2 + $0x550] sm:$0xff] %vm1963, %v1775
  %2135 = vst.msk [vmem:[#allocation2 + $0x558] sm:$0xff] %vm1963, %v1780
  %2136 = vst.msk [vmem:[#allocation2 + $0x560] sm:$0xff] %vm1963, %v1785
  %2137 = vst.msk [vmem:[#allocation2 + $0x568] sm:$0xff] %vm1963, %v1790
  %2138 = vst.msk [vmem:[#allocation2 + $0x570] sm:$0xff] %vm1963, %v1795
  %2139 = vst.msk [vmem:[#allocation2 + $0x578] sm:$0xff] %vm1963, %v1800
  %2140 = vst.msk [vmem:[#allocation2 + $0x580] sm:$0xff] %vm1963, %v1805
  %2141 = vst.msk [vmem:[#allocation2 + $0x588] sm:$0xff] %vm1963, %v1810
  %2142 = vst.msk [vmem:[#allocation2 + $0x590] sm:$0xff] %vm1963, %v1815
  %2143 = vst.msk [vmem:[#allocation2 + $0x598] sm:$0xff] %vm1963, %v1820
  %2144 = vst.msk [vmem:[#allocation2 + $0x5a0] sm:$0xff] %vm1963, %v1825
  %2145 = vst.msk [vmem:[#allocation2 + $0x5a8] sm:$0xff] %vm1963, %v1830
  %2146 = vst.msk [vmem:[#allocation2 + $0x5b0] sm:$0xff] %vm1963, %v1835
  %2147 = vst.msk [vmem:[#allocation2 + $0x5b8] sm:$0xff] %vm1963, %v1840
  %2148 = vst.msk [vmem:[#allocation2 + $0x5c0] sm:$0xff] %vm1963, %v1845
  %2149 = vst.msk [vmem:[#allocation2 + $0x5c8] sm:$0xff] %vm1963, %v1850
  %2150 = vst.msk [vmem:[#allocation2 + $0x5d0] sm:$0xff] %vm1963, %v1855
  %2151 = vst.msk [vmem:[#allocation2 + $0x5d8] sm:$0xff] %vm1963, %v1860
  %2152 = vst.msk [vmem:[#allocation2 + $0x5e0] sm:$0xff] %vm1963, %v1865
  %2153 = vst.msk [vmem:[#allocation2 + $0x5e8] sm:$0xff] %vm1963, %v1870
  %2154 = vst.msk [vmem:[#allocation2 + $0x5f0] sm:$0xff] %vm1963, %v1875
  %2155 = vst.msk [vmem:[#allocation2 + $0x5f8] sm:$0xff] %vm1963, %v1880
  %2156 = vst.msk [vmem:[#allocation2 + $0x600] sm:$0xff] %vm1963, %v1885
  %2157 = vst.msk [vmem:[#allocation2 + $0x608] sm:$0xff] %vm1963, %v1890
  %2158 = vst.msk [vmem:[#allocation2 + $0x610] sm:$0xff] %vm1963, %v1895
  %2159 = vst.msk [vmem:[#allocation2 + $0x618] sm:$0xff] %vm1963, %v1900
  %2160 = vst.msk [vmem:[#allocation2 + $0x620] sm:$0xff] %vm1963, %v1905
  %2161 = vst.msk [vmem:[#allocation2 + $0x628] sm:$0xff] %vm1963, %v1910
  %2162 = vst.msk [vmem:[#allocation2 + $0x630] sm:$0xff] %vm1963, %v1915
  %2163 = vst.msk [vmem:[#allocation2 + $0x638] sm:$0xff] %vm1963, %v1920
  %2164 = vst.msk [vmem:[#allocation2 + $0x640] sm:$0xff] %vm1963, %v1925
  %2165 = vst.msk [vmem:[#allocation2 + $0x648] sm:$0xff] %vm1963, %v1930
  %2166 = vst.msk [vmem:[#allocation2 + $0x650] sm:$0xff] %vm1963, %v1935
  %2167 = vst.msk [vmem:[#allocation2 + $0x658] sm:$0xff] %vm1963, %v1940
  %2168 = vst.msk [vmem:[#allocation2 + $0x660] sm:$0xff] %vm1963, %v1945
  %2169 = vst.msk [vmem:[#allocation2 + $0x668] sm:$0xff] %vm1963, %v1950
  %2170 = vst.msk [vmem:[#allocation2 + $0x670] sm:$0xff] %vm1963, %v1955
  %2171 = vst.msk [vmem:[#allocation2 + $0x678] sm:$0xff] %vm1963, %v1960
  %2380 = vrot.lane.b32.xlu0 %v925, 112
  %v2381 = vpop.permute.xlu0 %2380
  %2382 = vrot.lane.b32.xlu0 %v930, 112
  %v2383 = vpop.permute.xlu0 %2382
  %2384 = vrot.lane.b32.xlu0 %v935, 112
  %v2385 = vpop.permute.xlu0 %2384
  %2386 = vrot.lane.b32.xlu0 %v940, 112
  %v2387 = vpop.permute.xlu0 %2386
  %2388 = vrot.lane.b32.xlu0 %v945, 112
  %v2389 = vpop.permute.xlu0 %2388
  %2390 = vrot.lane.b32.xlu0 %v950, 112
  %v2391 = vpop.permute.xlu0 %2390
  %2392 = vrot.lane.b32.xlu0 %v955, 112
  %v2393 = vpop.permute.xlu0 %2392
  %2394 = vrot.lane.b32.xlu0 %v960, 112
  %v2395 = vpop.permute.xlu0 %2394
  %2396 = vrot.lane.b32.xlu0 %v965, 112
  %v2397 = vpop.permute.xlu0 %2396
  %2398 = vrot.lane.b32.xlu0 %v970, 112
  %v2399 = vpop.permute.xlu0 %2398
  %2400 = vrot.lane.b32.xlu0 %v975, 112
  %v2401 = vpop.permute.xlu0 %2400
  %2402 = vrot.lane.b32.xlu0 %v980, 112
  %v2403 = vpop.permute.xlu0 %2402
  %2404 = vrot.lane.b32.xlu0 %v985, 112
  %v2405 = vpop.permute.xlu0 %2404
  %2406 = vrot.lane.b32.xlu0 %v990, 112
  %v2407 = vpop.permute.xlu0 %2406
  %2408 = vrot.lane.b32.xlu0 %v995, 112
  %v2409 = vpop.permute.xlu0 %2408
  %2410 = vrot.lane.b32.xlu0 %v1000, 112
  %v2411 = vpop.permute.xlu0 %2410
  %2412 = vrot.lane.b32.xlu0 %v1005, 112
  %v2413 = vpop.permute.xlu0 %2412
  %2414 = vrot.lane.b32.xlu0 %v1010, 112
  %v2415 = vpop.permute.xlu0 %2414
  %2416 = vrot.lane.b32.xlu0 %v1015, 112
  %v2417 = vpop.permute.xlu0 %2416
  %2418 = vrot.lane.b32.xlu0 %v1020, 112
  %v2419 = vpop.permute.xlu0 %2418
  %2420 = vrot.lane.b32.xlu0 %v1025, 112
  %v2421 = vpop.permute.xlu0 %2420
  %2422 = vrot.lane.b32.xlu0 %v1030, 112
  %v2423 = vpop.permute.xlu0 %2422
  %2424 = vrot.lane.b32.xlu0 %v1035, 112
  %v2425 = vpop.permute.xlu0 %2424
  %2426 = vrot.lane.b32.xlu0 %v1040, 112
  %v2427 = vpop.permute.xlu0 %2426
  %2428 = vrot.lane.b32.xlu0 %v1045, 112
  %v2429 = vpop.permute.xlu0 %2428
  %2430 = vrot.lane.b32.xlu0 %v1050, 112
  %v2431 = vpop.permute.xlu0 %2430
  %2432 = vrot.lane.b32.xlu0 %v1055, 112
  %v2433 = vpop.permute.xlu0 %2432
  %2434 = vrot.lane.b32.xlu0 %v1060, 112
  %v2435 = vpop.permute.xlu0 %2434
  %2436 = vrot.lane.b32.xlu0 %v1065, 112
  %v2437 = vpop.permute.xlu0 %2436
  %2438 = vrot.lane.b32.xlu0 %v1070, 112
  %v2439 = vpop.permute.xlu0 %2438
  %2440 = vrot.lane.b32.xlu0 %v1075, 112
  %v2441 = vpop.permute.xlu0 %2440
  %2442 = vrot.lane.b32.xlu0 %v1080, 112
  %v2443 = vpop.permute.xlu0 %2442
  %2444 = vrot.lane.b32.xlu0 %v1085, 112
  %v2445 = vpop.permute.xlu0 %2444
  %2446 = vrot.lane.b32.xlu0 %v1090, 112
  %v2447 = vpop.permute.xlu0 %2446
  %2448 = vrot.lane.b32.xlu0 %v1095, 112
  %v2449 = vpop.permute.xlu0 %2448
  %2450 = vrot.lane.b32.xlu0 %v1100, 112
  %v2451 = vpop.permute.xlu0 %2450
  %2452 = vrot.lane.b32.xlu0 %v1105, 112
  %v2453 = vpop.permute.xlu0 %2452
  %2454 = vrot.lane.b32.xlu0 %v1110, 112
  %v2455 = vpop.permute.xlu0 %2454
  %2456 = vrot.lane.b32.xlu0 %v1115, 112
  %v2457 = vpop.permute.xlu0 %2456
  %2458 = vrot.lane.b32.xlu0 %v1120, 112
  %v2459 = vpop.permute.xlu0 %2458
  %2460 = vrot.lane.b32.xlu0 %v1125, 112
  %v2461 = vpop.permute.xlu0 %2460
  %2462 = vrot.lane.b32.xlu0 %v1130, 112
  %v2463 = vpop.permute.xlu0 %2462
  %2464 = vrot.lane.b32.xlu0 %v1135, 112
  %v2465 = vpop.permute.xlu0 %2464
  %2466 = vrot.lane.b32.xlu0 %v1140, 112
  %v2467 = vpop.permute.xlu0 %2466
  %2468 = vrot.lane.b32.xlu0 %v1145, 112
  %v2469 = vpop.permute.xlu0 %2468
  %2470 = vrot.lane.b32.xlu0 %v1150, 112
  %v2471 = vpop.permute.xlu0 %2470
  %2472 = vrot.lane.b32.xlu0 %v1155, 112
  %v2473 = vpop.permute.xlu0 %2472
  %2474 = vrot.lane.b32.xlu0 %v1160, 112
  %v2475 = vpop.permute.xlu0 %2474
  %2476 = vrot.lane.b32.xlu0 %v1165, 112
  %v2477 = vpop.permute.xlu0 %2476
  %2478 = vrot.lane.b32.xlu0 %v1170, 112
  %v2479 = vpop.permute.xlu0 %2478
  %2480 = vrot.lane.b32.xlu0 %v1175, 112
  %v2481 = vpop.permute.xlu0 %2480
  %2482 = vrot.lane.b32.xlu0 %v1180, 112
  %v2483 = vpop.permute.xlu0 %2482
  %2484 = vrot.lane.b32.xlu0 %v1185, 112
  %v2485 = vpop.permute.xlu0 %2484
  %2486 = vrot.lane.b32.xlu0 %v1190, 112
  %v2487 = vpop.permute.xlu0 %2486
  %2488 = vrot.lane.b32.xlu0 %v1195, 112
  %v2489 = vpop.permute.xlu0 %2488
  %2490 = vrot.lane.b32.xlu0 %v1200, 112
  %v2491 = vpop.permute.xlu0 %2490
  %2492 = vrot.lane.b32.xlu0 %v1205, 112
  %v2493 = vpop.permute.xlu0 %2492
  %2494 = vrot.lane.b32.xlu0 %v1210, 112
  %v2495 = vpop.permute.xlu0 %2494
  %2496 = vrot.lane.b32.xlu0 %v1215, 112
  %v2497 = vpop.permute.xlu0 %2496
  %2498 = vrot.lane.b32.xlu0 %v1220, 112
  %v2499 = vpop.permute.xlu0 %2498
  %2500 = vrot.lane.b32.xlu0 %v1225, 112
  %v2501 = vpop.permute.xlu0 %2500
  %2502 = vrot.lane.b32.xlu0 %v1230, 112
  %v2503 = vpop.permute.xlu0 %2502
  %2504 = vrot.lane.b32.xlu0 %v1235, 112
  %v2505 = vpop.permute.xlu0 %2504
  %2506 = vrot.lane.b32.xlu0 %v1240, 112
  %v2507 = vpop.permute.xlu0 %2506
  %2508 = vrot.lane.b32.xlu0 %v1245, 112
  %v2509 = vpop.permute.xlu0 %2508
  %2510 = vrot.lane.b32.xlu0 %v1250, 112
  %v2511 = vpop.permute.xlu0 %2510
  %2512 = vrot.lane.b32.xlu0 %v1255, 112
  %v2513 = vpop.permute.xlu0 %2512
  %2514 = vrot.lane.b32.xlu0 %v1260, 112
  %v2515 = vpop.permute.xlu0 %2514
  %2516 = vrot.lane.b32.xlu0 %v1265, 112
  %v2517 = vpop.permute.xlu0 %2516
  %2518 = vrot.lane.b32.xlu0 %v1270, 112
  %v2519 = vpop.permute.xlu0 %2518
  %2520 = vrot.lane.b32.xlu0 %v1275, 112
  %v2521 = vpop.permute.xlu0 %2520
  %2522 = vrot.lane.b32.xlu0 %v1280, 112
  %v2523 = vpop.permute.xlu0 %2522
  %2524 = vrot.lane.b32.xlu0 %v1285, 112
  %v2525 = vpop.permute.xlu0 %2524
  %2526 = vrot.lane.b32.xlu0 %v1290, 112
  %v2527 = vpop.permute.xlu0 %2526
  %2528 = vrot.lane.b32.xlu0 %v1295, 112
  %v2529 = vpop.permute.xlu0 %2528
  %2530 = vrot.lane.b32.xlu0 %v1300, 112
  %v2531 = vpop.permute.xlu0 %2530
  %2532 = vrot.lane.b32.xlu0 %v1305, 112
  %v2533 = vpop.permute.xlu0 %2532
  %2534 = vrot.lane.b32.xlu0 %v1310, 112
  %v2535 = vpop.permute.xlu0 %2534
  %2536 = vrot.lane.b32.xlu0 %v1315, 112
  %v2537 = vpop.permute.xlu0 %2536
  %2538 = vrot.lane.b32.xlu0 %v1320, 112
  %v2539 = vpop.permute.xlu0 %2538
  %2540 = vrot.lane.b32.xlu0 %v1325, 112
  %v2541 = vpop.permute.xlu0 %2540
  %2542 = vrot.lane.b32.xlu0 %v1330, 112
  %v2543 = vpop.permute.xlu0 %2542
  %2544 = vrot.lane.b32.xlu0 %v1335, 112
  %v2545 = vpop.permute.xlu0 %2544
  %2546 = vrot.lane.b32.xlu0 %v1340, 112
  %v2547 = vpop.permute.xlu0 %2546
  %2548 = vrot.lane.b32.xlu0 %v1345, 112
  %v2549 = vpop.permute.xlu0 %2548
  %2550 = vrot.lane.b32.xlu0 %v1350, 112
  %v2551 = vpop.permute.xlu0 %2550
  %2552 = vrot.lane.b32.xlu0 %v1355, 112
  %v2553 = vpop.permute.xlu0 %2552
  %2554 = vrot.lane.b32.xlu0 %v1360, 112
  %v2555 = vpop.permute.xlu0 %2554
  %2556 = vrot.lane.b32.xlu0 %v1365, 112
  %v2557 = vpop.permute.xlu0 %2556
  %2558 = vrot.lane.b32.xlu0 %v1370, 112
  %v2559 = vpop.permute.xlu0 %2558
  %2560 = vrot.lane.b32.xlu0 %v1375, 112
  %v2561 = vpop.permute.xlu0 %2560
  %2562 = vrot.lane.b32.xlu0 %v1380, 112
  %v2563 = vpop.permute.xlu0 %2562
  %2564 = vrot.lane.b32.xlu0 %v1385, 112
  %v2565 = vpop.permute.xlu0 %2564
  %2566 = vrot.lane.b32.xlu0 %v1390, 112
  %v2567 = vpop.permute.xlu0 %2566
  %2568 = vrot.lane.b32.xlu0 %v1395, 112
  %v2569 = vpop.permute.xlu0 %2568
  %2570 = vrot.lane.b32.xlu0 %v1400, 112
  %v2571 = vpop.permute.xlu0 %2570
  %2572 = vrot.lane.b32.xlu0 %v1405, 112
  %v2573 = vpop.permute.xlu0 %2572
  %2574 = vrot.lane.b32.xlu0 %v1410, 112
  %v2575 = vpop.permute.xlu0 %2574
  %2576 = vrot.lane.b32.xlu0 %v1415, 112
  %v2577 = vpop.permute.xlu0 %2576
  %2578 = vrot.lane.b32.xlu0 %v1420, 112
  %v2579 = vpop.permute.xlu0 %2578
  %2580 = vrot.lane.b32.xlu0 %v1425, 112
  %v2581 = vpop.permute.xlu0 %2580
  %2582 = vrot.lane.b32.xlu0 %v1430, 112
  %v2583 = vpop.permute.xlu0 %2582
  %2584 = vrot.lane.b32.xlu0 %v1435, 112
  %v2585 = vpop.permute.xlu0 %2584
  %2586 = vrot.lane.b32.xlu0 %v1440, 112
  %v2587 = vpop.permute.xlu0 %2586
  %2588 = vrot.lane.b32.xlu0 %v1445, 112
  %v2589 = vpop.permute.xlu0 %2588
  %2590 = vrot.lane.b32.xlu0 %v1450, 112
  %v2591 = vpop.permute.xlu0 %2590
  %2592 = vrot.lane.b32.xlu0 %v1455, 112
  %v2593 = vpop.permute.xlu0 %2592
  %2594 = vrot.lane.b32.xlu0 %v1460, 112
  %v2595 = vpop.permute.xlu0 %2594
  %2596 = vrot.lane.b32.xlu0 %v1465, 112
  %v2597 = vpop.permute.xlu0 %2596
  %2598 = vrot.lane.b32.xlu0 %v1470, 112
  %v2599 = vpop.permute.xlu0 %2598
  %2600 = vrot.lane.b32.xlu0 %v1475, 112
  %v2601 = vpop.permute.xlu0 %2600
  %2602 = vrot.lane.b32.xlu0 %v1480, 112
  %v2603 = vpop.permute.xlu0 %2602
  %2604 = vrot.lane.b32.xlu0 %v1485, 112
  %v2605 = vpop.permute.xlu0 %2604
  %2606 = vrot.lane.b32.xlu0 %v1490, 112
  %v2607 = vpop.permute.xlu0 %2606
  %2608 = vrot.lane.b32.xlu0 %v1495, 112
  %v2609 = vpop.permute.xlu0 %2608
  %2610 = vrot.lane.b32.xlu0 %v1500, 112
  %v2611 = vpop.permute.xlu0 %2610
  %2612 = vrot.lane.b32.xlu0 %v1505, 112
  %v2613 = vpop.permute.xlu0 %2612
  %2614 = vrot.lane.b32.xlu0 %v1510, 112
  %v2615 = vpop.permute.xlu0 %2614
  %2616 = vrot.lane.b32.xlu0 %v1515, 112
  %v2617 = vpop.permute.xlu0 %2616
  %2618 = vrot.lane.b32.xlu0 %v1520, 112
  %v2619 = vpop.permute.xlu0 %2618
  %2620 = vrot.lane.b32.xlu0 %v1525, 112
  %v2621 = vpop.permute.xlu0 %2620
  %2622 = vrot.lane.b32.xlu0 %v1530, 112
  %v2623 = vpop.permute.xlu0 %2622
  %2624 = vrot.lane.b32.xlu0 %v1535, 112
  %v2625 = vpop.permute.xlu0 %2624
  %2626 = vrot.lane.b32.xlu0 %v1540, 112
  %v2627 = vpop.permute.xlu0 %2626
  %2628 = vrot.lane.b32.xlu0 %v1545, 112
  %v2629 = vpop.permute.xlu0 %2628
  %2630 = vrot.lane.b32.xlu0 %v1550, 112
  %v2631 = vpop.permute.xlu0 %2630
  %2632 = vrot.lane.b32.xlu0 %v1555, 112
  %v2633 = vpop.permute.xlu0 %2632
  %2634 = vrot.lane.b32.xlu0 %v1560, 112
  %v2635 = vpop.permute.xlu0 %2634
  %2636 = vrot.lane.b32.xlu0 %v1565, 112
  %v2637 = vpop.permute.xlu0 %2636
  %2638 = vrot.lane.b32.xlu0 %v1570, 112
  %v2639 = vpop.permute.xlu0 %2638
  %2640 = vrot.lane.b32.xlu0 %v1575, 112
  %v2641 = vpop.permute.xlu0 %2640
  %2642 = vrot.lane.b32.xlu0 %v1580, 112
  %v2643 = vpop.permute.xlu0 %2642
  %2644 = vrot.lane.b32.xlu0 %v1585, 112
  %v2645 = vpop.permute.xlu0 %2644
  %2646 = vrot.lane.b32.xlu0 %v1590, 112
  %v2647 = vpop.permute.xlu0 %2646
  %2648 = vrot.lane.b32.xlu0 %v1595, 112
  %v2649 = vpop.permute.xlu0 %2648
  %2650 = vrot.lane.b32.xlu0 %v1600, 112
  %v2651 = vpop.permute.xlu0 %2650
  %2652 = vrot.lane.b32.xlu0 %v1605, 112
  %v2653 = vpop.permute.xlu0 %2652
  %2654 = vrot.lane.b32.xlu0 %v1610, 112
  %v2655 = vpop.permute.xlu0 %2654
  %2656 = vrot.lane.b32.xlu0 %v1615, 112
  %v2657 = vpop.permute.xlu0 %2656
  %2658 = vrot.lane.b32.xlu0 %v1620, 112
  %v2659 = vpop.permute.xlu0 %2658
  %2660 = vrot.lane.b32.xlu0 %v1625, 112
  %v2661 = vpop.permute.xlu0 %2660
  %2662 = vrot.lane.b32.xlu0 %v1630, 112
  %v2663 = vpop.permute.xlu0 %2662
  %2664 = vrot.lane.b32.xlu0 %v1635, 112
  %v2665 = vpop.permute.xlu0 %2664
  %2666 = vrot.lane.b32.xlu0 %v1640, 112
  %v2667 = vpop.permute.xlu0 %2666
  %2668 = vrot.lane.b32.xlu0 %v1645, 112
  %v2669 = vpop.permute.xlu0 %2668
  %2670 = vrot.lane.b32.xlu0 %v1650, 112
  %v2671 = vpop.permute.xlu0 %2670
  %2672 = vrot.lane.b32.xlu0 %v1655, 112
  %v2673 = vpop.permute.xlu0 %2672
  %2674 = vrot.lane.b32.xlu0 %v1660, 112
  %v2675 = vpop.permute.xlu0 %2674
  %2676 = vrot.lane.b32.xlu0 %v1665, 112
  %v2677 = vpop.permute.xlu0 %2676
  %2678 = vrot.lane.b32.xlu0 %v1670, 112
  %v2679 = vpop.permute.xlu0 %2678
  %2680 = vrot.lane.b32.xlu0 %v1675, 112
  %v2681 = vpop.permute.xlu0 %2680
  %2682 = vrot.lane.b32.xlu0 %v1680, 112
  %v2683 = vpop.permute.xlu0 %2682
  %2684 = vrot.lane.b32.xlu0 %v1685, 112
  %v2685 = vpop.permute.xlu0 %2684
  %2686 = vrot.lane.b32.xlu0 %v1690, 112
  %v2687 = vpop.permute.xlu0 %2686
  %2688 = vrot.lane.b32.xlu0 %v1695, 112
  %v2689 = vpop.permute.xlu0 %2688
  %2690 = vrot.lane.b32.xlu0 %v1700, 112
  %v2691 = vpop.permute.xlu0 %2690
  %2692 = vrot.lane.b32.xlu0 %v1705, 112
  %v2693 = vpop.permute.xlu0 %2692
  %2694 = vrot.lane.b32.xlu0 %v1710, 112
  %v2695 = vpop.permute.xlu0 %2694
  %2696 = vrot.lane.b32.xlu0 %v1715, 112
  %v2697 = vpop.permute.xlu0 %2696
  %2698 = vrot.lane.b32.xlu0 %v1720, 112
  %v2699 = vpop.permute.xlu0 %2698
  %2700 = vrot.lane.b32.xlu0 %v1725, 112
  %v2701 = vpop.permute.xlu0 %2700
  %2702 = vrot.lane.b32.xlu0 %v1730, 112
  %v2703 = vpop.permute.xlu0 %2702
  %2704 = vrot.lane.b32.xlu0 %v1735, 112
  %v2705 = vpop.permute.xlu0 %2704
  %2706 = vrot.lane.b32.xlu0 %v1740, 112
  %v2707 = vpop.permute.xlu0 %2706
  %2708 = vrot.lane.b32.xlu0 %v1745, 112
  %v2709 = vpop.permute.xlu0 %2708
  %2710 = vrot.lane.b32.xlu0 %v1750, 112
  %v2711 = vpop.permute.xlu0 %2710
  %2712 = vrot.lane.b32.xlu0 %v1755, 112
  %v2713 = vpop.permute.xlu0 %2712
  %2714 = vrot.lane.b32.xlu0 %v1760, 112
  %v2715 = vpop.permute.xlu0 %2714
  %2716 = vrot.lane.b32.xlu0 %v1765, 112
  %v2717 = vpop.permute.xlu0 %2716
  %2718 = vrot.lane.b32.xlu0 %v1770, 112
  %v2719 = vpop.permute.xlu0 %2718
  %2720 = vrot.lane.b32.xlu0 %v1775, 112
  %v2721 = vpop.permute.xlu0 %2720
  %2722 = vrot.lane.b32.xlu0 %v1780, 112
  %v2723 = vpop.permute.xlu0 %2722
  %2724 = vrot.lane.b32.xlu0 %v1785, 112
  %v2725 = vpop.permute.xlu0 %2724
  %2726 = vrot.lane.b32.xlu0 %v1790, 112
  %v2727 = vpop.permute.xlu0 %2726
  %2728 = vrot.lane.b32.xlu0 %v1795, 112
  %v2729 = vpop.permute.xlu0 %2728
  %2730 = vrot.lane.b32.xlu0 %v1800, 112
  %v2731 = vpop.permute.xlu0 %2730
  %2732 = vrot.lane.b32.xlu0 %v1805, 112
  %v2733 = vpop.permute.xlu0 %2732
  %2734 = vrot.lane.b32.xlu0 %v1810, 112
  %v2735 = vpop.permute.xlu0 %2734
  %2736 = vrot.lane.b32.xlu0 %v1815, 112
  %v2737 = vpop.permute.xlu0 %2736
  %2738 = vrot.lane.b32.xlu0 %v1820, 112
  %v2739 = vpop.permute.xlu0 %2738
  %2740 = vrot.lane.b32.xlu0 %v1825, 112
  %v2741 = vpop.permute.xlu0 %2740
  %2742 = vrot.lane.b32.xlu0 %v1830, 112
  %v2743 = vpop.permute.xlu0 %2742
  %2744 = vrot.lane.b32.xlu0 %v1835, 112
  %v2745 = vpop.permute.xlu0 %2744
  %2746 = vrot.lane.b32.xlu0 %v1840, 112
  %v2747 = vpop.permute.xlu0 %2746
  %2748 = vrot.lane.b32.xlu0 %v1845, 112
  %v2749 = vpop.permute.xlu0 %2748
  %2750 = vrot.lane.b32.xlu0 %v1850, 112
  %v2751 = vpop.permute.xlu0 %2750
  %2752 = vrot.lane.b32.xlu0 %v1855, 112
  %v2753 = vpop.permute.xlu0 %2752
  %2754 = vrot.lane.b32.xlu0 %v1860, 112
  %v2755 = vpop.permute.xlu0 %2754
  %2756 = vrot.lane.b32.xlu0 %v1865, 112
  %v2757 = vpop.permute.xlu0 %2756
  %2758 = vrot.lane.b32.xlu0 %v1870, 112
  %v2759 = vpop.permute.xlu0 %2758
  %2760 = vrot.lane.b32.xlu0 %v1875, 112
  %v2761 = vpop.permute.xlu0 %2760
  %2762 = vrot.lane.b32.xlu0 %v1880, 112
  %v2763 = vpop.permute.xlu0 %2762
  %2764 = vrot.lane.b32.xlu0 %v1885, 112
  %v2765 = vpop.permute.xlu0 %2764
  %2766 = vrot.lane.b32.xlu0 %v1890, 112
  %v2767 = vpop.permute.xlu0 %2766
  %2768 = vrot.lane.b32.xlu0 %v1895, 112
  %v2769 = vpop.permute.xlu0 %2768
  %2770 = vrot.lane.b32.xlu0 %v1900, 112
  %v2771 = vpop.permute.xlu0 %2770
  %2772 = vrot.lane.b32.xlu0 %v1905, 112
  %v2773 = vpop.permute.xlu0 %2772
  %2774 = vrot.lane.b32.xlu0 %v1910, 112
  %v2775 = vpop.permute.xlu0 %2774
  %2776 = vrot.lane.b32.xlu0 %v1915, 112
  %v2777 = vpop.permute.xlu0 %2776
  %2778 = vrot.lane.b32.xlu0 %v1920, 112
  %v2779 = vpop.permute.xlu0 %2778
  %2780 = vrot.lane.b32.xlu0 %v1925, 112
  %v2781 = vpop.permute.xlu0 %2780
  %2782 = vrot.lane.b32.xlu0 %v1930, 112
  %v2783 = vpop.permute.xlu0 %2782
  %2784 = vrot.lane.b32.xlu0 %v1935, 112
  %v2785 = vpop.permute.xlu0 %2784
  %2786 = vrot.lane.b32.xlu0 %v1940, 112
  %v2787 = vpop.permute.xlu0 %2786
  %2788 = vrot.lane.b32.xlu0 %v1945, 112
  %v2789 = vpop.permute.xlu0 %2788
  %2790 = vrot.lane.b32.xlu0 %v1950, 112
  %v2791 = vpop.permute.xlu0 %2790
  %2792 = vrot.lane.b32.xlu0 %v1955, 112
  %v2793 = vpop.permute.xlu0 %2792
  %2794 = vrot.lane.b32.xlu0 %v1960, 112
  %v2795 = vpop.permute.xlu0 %2794
  %3004 = vst.msk [vmem:[#allocation3] sm:$0xff] %vm1963, %v2381
  %3005 = vst.msk [vmem:[#allocation3 + $0x8] sm:$0xff] %vm1963, %v2383
  %3006 = vst.msk [vmem:[#allocation3 + $0x10] sm:$0xff] %vm1963, %v2385
  %3007 = vst.msk [vmem:[#allocation3 + $0x18] sm:$0xff] %vm1963, %v2387
  %3008 = vst.msk [vmem:[#allocation3 + $0x20] sm:$0xff] %vm1963, %v2389
  %3009 = vst.msk [vmem:[#allocation3 + $0x28] sm:$0xff] %vm1963, %v2391
  %3010 = vst.msk [vmem:[#allocation3 + $0x30] sm:$0xff] %vm1963, %v2393
  %3011 = vst.msk [vmem:[#allocation3 + $0x38] sm:$0xff] %vm1963, %v2395
  %3012 = vst.msk [vmem:[#allocation3 + $0x40] sm:$0xff] %vm1963, %v2397
  %3013 = vst.msk [vmem:[#allocation3 + $0x48] sm:$0xff] %vm1963, %v2399
  %3014 = vst.msk [vmem:[#allocation3 + $0x50] sm:$0xff] %vm1963, %v2401
  %3015 = vst.msk [vmem:[#allocation3 + $0x58] sm:$0xff] %vm1963, %v2403
  %3016 = vst.msk [vmem:[#allocation3 + $0x60] sm:$0xff] %vm1963, %v2405
  %3017 = vst.msk [vmem:[#allocation3 + $0x68] sm:$0xff] %vm1963, %v2407
  %3018 = vst.msk [vmem:[#allocation3 + $0x70] sm:$0xff] %vm1963, %v2409
  %3019 = vst.msk [vmem:[#allocation3 + $0x78] sm:$0xff] %vm1963, %v2411
  %3020 = vst.msk [vmem:[#allocation3 + $0x80] sm:$0xff] %vm1963, %v2413
  %3021 = vst.msk [vmem:[#allocation3 + $0x88] sm:$0xff] %vm1963, %v2415
  %3022 = vst.msk [vmem:[#allocation3 + $0x90] sm:$0xff] %vm1963, %v2417
  %3023 = vst.msk [vmem:[#allocation3 + $0x98] sm:$0xff] %vm1963, %v2419
  %3024 = vst.msk [vmem:[#allocation3 + $0xa0] sm:$0xff] %vm1963, %v2421
  %3025 = vst.msk [vmem:[#allocation3 + $0xa8] sm:$0xff] %vm1963, %v2423
  %3026 = vst.msk [vmem:[#allocation3 + $0xb0] sm:$0xff] %vm1963, %v2425
  %3027 = vst.msk [vmem:[#allocation3 + $0xb8] sm:$0xff] %vm1963, %v2427
  %3028 = vst.msk [vmem:[#allocation3 + $0xc0] sm:$0xff] %vm1963, %v2429
  %3029 = vst.msk [vmem:[#allocation3 + $0xc8] sm:$0xff] %vm1963, %v2431
  %3030 = vst.msk [vmem:[#allocation3 + $0xd0] sm:$0xff] %vm1963, %v2433
  %3031 = vst.msk [vmem:[#allocation3 + $0xd8] sm:$0xff] %vm1963, %v2435
  %3032 = vst.msk [vmem:[#allocation3 + $0xe0] sm:$0xff] %vm1963, %v2437
  %3033 = vst.msk [vmem:[#allocation3 + $0xe8] sm:$0xff] %vm1963, %v2439
  %3034 = vst.msk [vmem:[#allocation3 + $0xf0] sm:$0xff] %vm1963, %v2441
  %3035 = vst.msk [vmem:[#allocation3 + $0xf8] sm:$0xff] %vm1963, %v2443
  %3036 = vst.msk [vmem:[#allocation3 + $0x100] sm:$0xff] %vm1963, %v2445
  %3037 = vst.msk [vmem:[#allocation3 + $0x108] sm:$0xff] %vm1963, %v2447
  %3038 = vst.msk [vmem:[#allocation3 + $0x110] sm:$0xff] %vm1963, %v2449
  %3039 = vst.msk [vmem:[#allocation3 + $0x118] sm:$0xff] %vm1963, %v2451
  %3040 = vst.msk [vmem:[#allocation3 + $0x120] sm:$0xff] %vm1963, %v2453
  %3041 = vst.msk [vmem:[#allocation3 + $0x128] sm:$0xff] %vm1963, %v2455
  %3042 = vst.msk [vmem:[#allocation3 + $0x130] sm:$0xff] %vm1963, %v2457
  %3043 = vst.msk [vmem:[#allocation3 + $0x138] sm:$0xff] %vm1963, %v2459
  %3044 = vst.msk [vmem:[#allocation3 + $0x140] sm:$0xff] %vm1963, %v2461
  %3045 = vst.msk [vmem:[#allocation3 + $0x148] sm:$0xff] %vm1963, %v2463
  %3046 = vst.msk [vmem:[#allocation3 + $0x150] sm:$0xff] %vm1963, %v2465
  %3047 = vst.msk [vmem:[#allocation3 + $0x158] sm:$0xff] %vm1963, %v2467
  %3048 = vst.msk [vmem:[#allocation3 + $0x160] sm:$0xff] %vm1963, %v2469
  %3049 = vst.msk [vmem:[#allocation3 + $0x168] sm:$0xff] %vm1963, %v2471
  %3050 = vst.msk [vmem:[#allocation3 + $0x170] sm:$0xff] %vm1963, %v2473
  %3051 = vst.msk [vmem:[#allocation3 + $0x178] sm:$0xff] %vm1963, %v2475
  %3052 = vst.msk [vmem:[#allocation3 + $0x180] sm:$0xff] %vm1963, %v2477
  %3053 = vst.msk [vmem:[#allocation3 + $0x188] sm:$0xff] %vm1963, %v2479
  %3054 = vst.msk [vmem:[#allocation3 + $0x190] sm:$0xff] %vm1963, %v2481
  %3055 = vst.msk [vmem:[#allocation3 + $0x198] sm:$0xff] %vm1963, %v2483
  %3056 = vst.msk [vmem:[#allocation3 + $0x1a0] sm:$0xff] %vm1963, %v2485
  %3057 = vst.msk [vmem:[#allocation3 + $0x1a8] sm:$0xff] %vm1963, %v2487
  %3058 = vst.msk [vmem:[#allocation3 + $0x1b0] sm:$0xff] %vm1963, %v2489
  %3059 = vst.msk [vmem:[#allocation3 + $0x1b8] sm:$0xff] %vm1963, %v2491
  %3060 = vst.msk [vmem:[#allocation3 + $0x1c0] sm:$0xff] %vm1963, %v2493
  %3061 = vst.msk [vmem:[#allocation3 + $0x1c8] sm:$0xff] %vm1963, %v2495
  %3062 = vst.msk [vmem:[#allocation3 + $0x1d0] sm:$0xff] %vm1963, %v2497
  %3063 = vst.msk [vmem:[#allocation3 + $0x1d8] sm:$0xff] %vm1963, %v2499
  %3064 = vst.msk [vmem:[#allocation3 + $0x1e0] sm:$0xff] %vm1963, %v2501
  %3065 = vst.msk [vmem:[#allocation3 + $0x1e8] sm:$0xff] %vm1963, %v2503
  %3066 = vst.msk [vmem:[#allocation3 + $0x1f0] sm:$0xff] %vm1963, %v2505
  %3067 = vst.msk [vmem:[#allocation3 + $0x1f8] sm:$0xff] %vm1963, %v2507
  %3068 = vst.msk [vmem:[#allocation3 + $0x200] sm:$0xff] %vm1963, %v2509
  %3069 = vst.msk [vmem:[#allocation3 + $0x208] sm:$0xff] %vm1963, %v2511
  %3070 = vst.msk [vmem:[#allocation3 + $0x210] sm:$0xff] %vm1963, %v2513
  %3071 = vst.msk [vmem:[#allocation3 + $0x218] sm:$0xff] %vm1963, %v2515
  %3072 = vst.msk [vmem:[#allocation3 + $0x220] sm:$0xff] %vm1963, %v2517
  %3073 = vst.msk [vmem:[#allocation3 + $0x228] sm:$0xff] %vm1963, %v2519
  %3074 = vst.msk [vmem:[#allocation3 + $0x230] sm:$0xff] %vm1963, %v2521
  %3075 = vst.msk [vmem:[#allocation3 + $0x238] sm:$0xff] %vm1963, %v2523
  %3076 = vst.msk [vmem:[#allocation3 + $0x240] sm:$0xff] %vm1963, %v2525
  %3077 = vst.msk [vmem:[#allocation3 + $0x248] sm:$0xff] %vm1963, %v2527
  %3078 = vst.msk [vmem:[#allocation3 + $0x250] sm:$0xff] %vm1963, %v2529
  %3079 = vst.msk [vmem:[#allocation3 + $0x258] sm:$0xff] %vm1963, %v2531
  %3080 = vst.msk [vmem:[#allocation3 + $0x260] sm:$0xff] %vm1963, %v2533
  %3081 = vst.msk [vmem:[#allocation3 + $0x268] sm:$0xff] %vm1963, %v2535
  %3082 = vst.msk [vmem:[#allocation3 + $0x270] sm:$0xff] %vm1963, %v2537
  %3083 = vst.msk [vmem:[#allocation3 + $0x278] sm:$0xff] %vm1963, %v2539
  %3084 = vst.msk [vmem:[#allocation3 + $0x280] sm:$0xff] %vm1963, %v2541
  %3085 = vst.msk [vmem:[#allocation3 + $0x288] sm:$0xff] %vm1963, %v2543
  %3086 = vst.msk [vmem:[#allocation3 + $0x290] sm:$0xff] %vm1963, %v2545
  %3087 = vst.msk [vmem:[#allocation3 + $0x298] sm:$0xff] %vm1963, %v2547
  %3088 = vst.msk [vmem:[#allocation3 + $0x2a0] sm:$0xff] %vm1963, %v2549
  %3089 = vst.msk [vmem:[#allocation3 + $0x2a8] sm:$0xff] %vm1963, %v2551
  %3090 = vst.msk [vmem:[#allocation3 + $0x2b0] sm:$0xff] %vm1963, %v2553
  %3091 = vst.msk [vmem:[#allocation3 + $0x2b8] sm:$0xff] %vm1963, %v2555
  %3092 = vst.msk [vmem:[#allocation3 + $0x2c0] sm:$0xff] %vm1963, %v2557
  %3093 = vst.msk [vmem:[#allocation3 + $0x2c8] sm:$0xff] %vm1963, %v2559
  %3094 = vst.msk [vmem:[#allocation3 + $0x2d0] sm:$0xff] %vm1963, %v2561
  %3095 = vst.msk [vmem:[#allocation3 + $0x2d8] sm:$0xff] %vm1963, %v2563
  %3096 = vst.msk [vmem:[#allocation3 + $0x2e0] sm:$0xff] %vm1963, %v2565
  %3097 = vst.msk [vmem:[#allocation3 + $0x2e8] sm:$0xff] %vm1963, %v2567
  %3098 = vst.msk [vmem:[#allocation3 + $0x2f0] sm:$0xff] %vm1963, %v2569
  %3099 = vst.msk [vmem:[#allocation3 + $0x2f8] sm:$0xff] %vm1963, %v2571
  %3100 = vst.msk [vmem:[#allocation3 + $0x300] sm:$0xff] %vm1963, %v2573
  %3101 = vst.msk [vmem:[#allocation3 + $0x308] sm:$0xff] %vm1963, %v2575
  %3102 = vst.msk [vmem:[#allocation3 + $0x310] sm:$0xff] %vm1963, %v2577
  %3103 = vst.msk [vmem:[#allocation3 + $0x318] sm:$0xff] %vm1963, %v2579
  %3104 = vst.msk [vmem:[#allocation3 + $0x320] sm:$0xff] %vm1963, %v2581
  %3105 = vst.msk [vmem:[#allocation3 + $0x328] sm:$0xff] %vm1963, %v2583
  %3106 = vst.msk [vmem:[#allocation3 + $0x330] sm:$0xff] %vm1963, %v2585
  %3107 = vst.msk [vmem:[#allocation3 + $0x338] sm:$0xff] %vm1963, %v2587
  %3108 = vst.msk [vmem:[#allocation3 + $0x340] sm:$0xff] %vm1963, %v2589
  %3109 = vst.msk [vmem:[#allocation3 + $0x348] sm:$0xff] %vm1963, %v2591
  %3110 = vst.msk [vmem:[#allocation3 + $0x350] sm:$0xff] %vm1963, %v2593
  %3111 = vst.msk [vmem:[#allocation3 + $0x358] sm:$0xff] %vm1963, %v2595
  %3112 = vst.msk [vmem:[#allocation3 + $0x360] sm:$0xff] %vm1963, %v2597
  %3113 = vst.msk [vmem:[#allocation3 + $0x368] sm:$0xff] %vm1963, %v2599
  %3114 = vst.msk [vmem:[#allocation3 + $0x370] sm:$0xff] %vm1963, %v2601
  %3115 = vst.msk [vmem:[#allocation3 + $0x378] sm:$0xff] %vm1963, %v2603
  %3116 = vst.msk [vmem:[#allocation3 + $0x380] sm:$0xff] %vm1963, %v2605
  %3117 = vst.msk [vmem:[#allocation3 + $0x388] sm:$0xff] %vm1963, %v2607
  %3118 = vst.msk [vmem:[#allocation3 + $0x390] sm:$0xff] %vm1963, %v2609
  %3119 = vst.msk [vmem:[#allocation3 + $0x398] sm:$0xff] %vm1963, %v2611
  %3120 = vst.msk [vmem:[#allocation3 + $0x3a0] sm:$0xff] %vm1963, %v2613
  %3121 = vst.msk [vmem:[#allocation3 + $0x3a8] sm:$0xff] %vm1963, %v2615
  %3122 = vst.msk [vmem:[#allocation3 + $0x3b0] sm:$0xff] %vm1963, %v2617
  %3123 = vst.msk [vmem:[#allocation3 + $0x3b8] sm:$0xff] %vm1963, %v2619
  %3124 = vst.msk [vmem:[#allocation3 + $0x3c0] sm:$0xff] %vm1963, %v2621
  %3125 = vst.msk [vmem:[#allocation3 + $0x3c8] sm:$0xff] %vm1963, %v2623
  %3126 = vst.msk [vmem:[#allocation3 + $0x3d0] sm:$0xff] %vm1963, %v2625
  %3127 = vst.msk [vmem:[#allocation3 + $0x3d8] sm:$0xff] %vm1963, %v2627
  %3128 = vst.msk [vmem:[#allocation3 + $0x3e0] sm:$0xff] %vm1963, %v2629
  %3129 = vst.msk [vmem:[#allocation3 + $0x3e8] sm:$0xff] %vm1963, %v2631
  %3130 = vst.msk [vmem:[#allocation3 + $0x3f0] sm:$0xff] %vm1963, %v2633
  %3131 = vst.msk [vmem:[#allocation3 + $0x3f8] sm:$0xff] %vm1963, %v2635
  %3132 = vst.msk [vmem:[#allocation3 + $0x400] sm:$0xff] %vm1963, %v2637
  %3133 = vst.msk [vmem:[#allocation3 + $0x408] sm:$0xff] %vm1963, %v2639
  %3134 = vst.msk [vmem:[#allocation3 + $0x410] sm:$0xff] %vm1963, %v2641
  %3135 = vst.msk [vmem:[#allocation3 + $0x418] sm:$0xff] %vm1963, %v2643
  %3136 = vst.msk [vmem:[#allocation3 + $0x420] sm:$0xff] %vm1963, %v2645
  %3137 = vst.msk [vmem:[#allocation3 + $0x428] sm:$0xff] %vm1963, %v2647
  %3138 = vst.msk [vmem:[#allocation3 + $0x430] sm:$0xff] %vm1963, %v2649
  %3139 = vst.msk [vmem:[#allocation3 + $0x438] sm:$0xff] %vm1963, %v2651
  %3140 = vst.msk [vmem:[#allocation3 + $0x440] sm:$0xff] %vm1963, %v2653
  %3141 = vst.msk [vmem:[#allocation3 + $0x448] sm:$0xff] %vm1963, %v2655
  %3142 = vst.msk [vmem:[#allocation3 + $0x450] sm:$0xff] %vm1963, %v2657
  %3143 = vst.msk [vmem:[#allocation3 + $0x458] sm:$0xff] %vm1963, %v2659
  %3144 = vst.msk [vmem:[#allocation3 + $0x460] sm:$0xff] %vm1963, %v2661
  %3145 = vst.msk [vmem:[#allocation3 + $0x468] sm:$0xff] %vm1963, %v2663
  %3146 = vst.msk [vmem:[#allocation3 + $0x470] sm:$0xff] %vm1963, %v2665
  %3147 = vst.msk [vmem:[#allocation3 + $0x478] sm:$0xff] %vm1963, %v2667
  %3148 = vst.msk [vmem:[#allocation3 + $0x480] sm:$0xff] %vm1963, %v2669
  %3149 = vst.msk [vmem:[#allocation3 + $0x488] sm:$0xff] %vm1963, %v2671
  %3150 = vst.msk [vmem:[#allocation3 + $0x490] sm:$0xff] %vm1963, %v2673
  %3151 = vst.msk [vmem:[#allocation3 + $0x498] sm:$0xff] %vm1963, %v2675
  %3152 = vst.msk [vmem:[#allocation3 + $0x4a0] sm:$0xff] %vm1963, %v2677
  %3153 = vst.msk [vmem:[#allocation3 + $0x4a8] sm:$0xff] %vm1963, %v2679
  %3154 = vst.msk [vmem:[#allocation3 + $0x4b0] sm:$0xff] %vm1963, %v2681
  %3155 = vst.msk [vmem:[#allocation3 + $0x4b8] sm:$0xff] %vm1963, %v2683
  %3156 = vst.msk [vmem:[#allocation3 + $0x4c0] sm:$0xff] %vm1963, %v2685
  %3157 = vst.msk [vmem:[#allocation3 + $0x4c8] sm:$0xff] %vm1963, %v2687
  %3158 = vst.msk [vmem:[#allocation3 + $0x4d0] sm:$0xff] %vm1963, %v2689
  %3159 = vst.msk [vmem:[#allocation3 + $0x4d8] sm:$0xff] %vm1963, %v2691
  %3160 = vst.msk [vmem:[#allocation3 + $0x4e0] sm:$0xff] %vm1963, %v2693
  %3161 = vst.msk [vmem:[#allocation3 + $0x4e8] sm:$0xff] %vm1963, %v2695
  %3162 = vst.msk [vmem:[#allocation3 + $0x4f0] sm:$0xff] %vm1963, %v2697
  %3163 = vst.msk [vmem:[#allocation3 + $0x4f8] sm:$0xff] %vm1963, %v2699
  %3164 = vst.msk [vmem:[#allocation3 + $0x500] sm:$0xff] %vm1963, %v2701
  %3165 = vst.msk [vmem:[#allocation3 + $0x508] sm:$0xff] %vm1963, %v2703
  %3166 = vst.msk [vmem:[#allocation3 + $0x510] sm:$0xff] %vm1963, %v2705
  %3167 = vst.msk [vmem:[#allocation3 + $0x518] sm:$0xff] %vm1963, %v2707
  %3168 = vst.msk [vmem:[#allocation3 + $0x520] sm:$0xff] %vm1963, %v2709
  %3169 = vst.msk [vmem:[#allocation3 + $0x528] sm:$0xff] %vm1963, %v2711
  %3170 = vst.msk [vmem:[#allocation3 + $0x530] sm:$0xff] %vm1963, %v2713
  %3171 = vst.msk [vmem:[#allocation3 + $0x538] sm:$0xff] %vm1963, %v2715
  %3172 = vst.msk [vmem:[#allocation3 + $0x540] sm:$0xff] %vm1963, %v2717
  %3173 = vst.msk [vmem:[#allocation3 + $0x548] sm:$0xff] %vm1963, %v2719
  %3174 = vst.msk [vmem:[#allocation3 + $0x550] sm:$0xff] %vm1963, %v2721
  %3175 = vst.msk [vmem:[#allocation3 + $0x558] sm:$0xff] %vm1963, %v2723
  %3176 = vst.msk [vmem:[#allocation3 + $0x560] sm:$0xff] %vm1963, %v2725
  %3177 = vst.msk [vmem:[#allocation3 + $0x568] sm:$0xff] %vm1963, %v2727
  %3178 = vst.msk [vmem:[#allocation3 + $0x570] sm:$0xff] %vm1963, %v2729
  %3179 = vst.msk [vmem:[#allocation3 + $0x578] sm:$0xff] %vm1963, %v2731
  %3180 = vst.msk [vmem:[#allocation3 + $0x580] sm:$0xff] %vm1963, %v2733
  %3181 = vst.msk [vmem:[#allocation3 + $0x588] sm:$0xff] %vm1963, %v2735
  %3182 = vst.msk [vmem:[#allocation3 + $0x590] sm:$0xff] %vm1963, %v2737
  %3183 = vst.msk [vmem:[#allocation3 + $0x598] sm:$0xff] %vm1963, %v2739
  %3184 = vst.msk [vmem:[#allocation3 + $0x5a0] sm:$0xff] %vm1963, %v2741
  %3185 = vst.msk [vmem:[#allocation3 + $0x5a8] sm:$0xff] %vm1963, %v2743
  %3186 = vst.msk [vmem:[#allocation3 + $0x5b0] sm:$0xff] %vm1963, %v2745
  %3187 = vst.msk [vmem:[#allocation3 + $0x5b8] sm:$0xff] %vm1963, %v2747
  %3188 = vst.msk [vmem:[#allocation3 + $0x5c0] sm:$0xff] %vm1963, %v2749
  %3189 = vst.msk [vmem:[#allocation3 + $0x5c8] sm:$0xff] %vm1963, %v2751
  %3190 = vst.msk [vmem:[#allocation3 + $0x5d0] sm:$0xff] %vm1963, %v2753
  %3191 = vst.msk [vmem:[#allocation3 + $0x5d8] sm:$0xff] %vm1963, %v2755
  %3192 = vst.msk [vmem:[#allocation3 + $0x5e0] sm:$0xff] %vm1963, %v2757
  %3193 = vst.msk [vmem:[#allocation3 + $0x5e8] sm:$0xff] %vm1963, %v2759
  %3194 = vst.msk [vmem:[#allocation3 + $0x5f0] sm:$0xff] %vm1963, %v2761
  %3195 = vst.msk [vmem:[#allocation3 + $0x5f8] sm:$0xff] %vm1963, %v2763
  %3196 = vst.msk [vmem:[#allocation3 + $0x600] sm:$0xff] %vm1963, %v2765
  %3197 = vst.msk [vmem:[#allocation3 + $0x608] sm:$0xff] %vm1963, %v2767
  %3198 = vst.msk [vmem:[#allocation3 + $0x610] sm:$0xff] %vm1963, %v2769
  %3199 = vst.msk [vmem:[#allocation3 + $0x618] sm:$0xff] %vm1963, %v2771
  %3200 = vst.msk [vmem:[#allocation3 + $0x620] sm:$0xff] %vm1963, %v2773
  %3201 = vst.msk [vmem:[#allocation3 + $0x628] sm:$0xff] %vm1963, %v2775
  %3202 = vst.msk [vmem:[#allocation3 + $0x630] sm:$0xff] %vm1963, %v2777
  %3203 = vst.msk [vmem:[#allocation3 + $0x638] sm:$0xff] %vm1963, %v2779
  %3204 = vst.msk [vmem:[#allocation3 + $0x640] sm:$0xff] %vm1963, %v2781
  %3205 = vst.msk [vmem:[#allocation3 + $0x648] sm:$0xff] %vm1963, %v2783
  %3206 = vst.msk [vmem:[#allocation3 + $0x650] sm:$0xff] %vm1963, %v2785
  %3207 = vst.msk [vmem:[#allocation3 + $0x658] sm:$0xff] %vm1963, %v2787
  %3208 = vst.msk [vmem:[#allocation3 + $0x660] sm:$0xff] %vm1963, %v2789
  %3209 = vst.msk [vmem:[#allocation3 + $0x668] sm:$0xff] %vm1963, %v2791
  %3210 = vst.msk [vmem:[#allocation3 + $0x670] sm:$0xff] %vm1963, %v2793
  %3211 = vst.msk [vmem:[#allocation3 + $0x678] sm:$0xff] %vm1963, %v2795
  %3212 = vrot.lane.b32.xlu0 %v925, 96
  %v3213 = vpop.permute.xlu0 %3212
  %3214 = vrot.lane.b32.xlu0 %v930, 96
  %v3215 = vpop.permute.xlu0 %3214
  %3216 = vrot.lane.b32.xlu0 %v935, 96
  %v3217 = vpop.permute.xlu0 %3216
  %3218 = vrot.lane.b32.xlu0 %v940, 96
  %v3219 = vpop.permute.xlu0 %3218
  %3220 = vrot.lane.b32.xlu0 %v945, 96
  %v3221 = vpop.permute.xlu0 %3220
  %3222 = vrot.lane.b32.xlu0 %v950, 96
  %v3223 = vpop.permute.xlu0 %3222
  %3224 = vrot.lane.b32.xlu0 %v955, 96
  %v3225 = vpop.permute.xlu0 %3224
  %3226 = vrot.lane.b32.xlu0 %v960, 96
  %v3227 = vpop.permute.xlu0 %3226
  %3228 = vrot.lane.b32.xlu0 %v965, 96
  %v3229 = vpop.permute.xlu0 %3228
  %3230 = vrot.lane.b32.xlu0 %v970, 96
  %v3231 = vpop.permute.xlu0 %3230
  %3232 = vrot.lane.b32.xlu0 %v975, 96
  %v3233 = vpop.permute.xlu0 %3232
  %3234 = vrot.lane.b32.xlu0 %v980, 96
  %v3235 = vpop.permute.xlu0 %3234
  %3236 = vrot.lane.b32.xlu0 %v985, 96
  %v3237 = vpop.permute.xlu0 %3236
  %3238 = vrot.lane.b32.xlu0 %v990, 96
  %v3239 = vpop.permute.xlu0 %3238
  %3240 = vrot.lane.b32.xlu0 %v995, 96
  %v3241 = vpop.permute.xlu0 %3240
  %3242 = vrot.lane.b32.xlu0 %v1000, 96
  %v3243 = vpop.permute.xlu0 %3242
  %3244 = vrot.lane.b32.xlu0 %v1005, 96
  %v3245 = vpop.permute.xlu0 %3244
  %3246 = vrot.lane.b32.xlu0 %v1010, 96
  %v3247 = vpop.permute.xlu0 %3246
  %3248 = vrot.lane.b32.xlu0 %v1015, 96
  %v3249 = vpop.permute.xlu0 %3248
  %3250 = vrot.lane.b32.xlu0 %v1020, 96
  %v3251 = vpop.permute.xlu0 %3250
  %3252 = vrot.lane.b32.xlu0 %v1025, 96
  %v3253 = vpop.permute.xlu0 %3252
  %3254 = vrot.lane.b32.xlu0 %v1030, 96
  %v3255 = vpop.permute.xlu0 %3254
  %3256 = vrot.lane.b32.xlu0 %v1035, 96
  %v3257 = vpop.permute.xlu0 %3256
  %3258 = vrot.lane.b32.xlu0 %v1040, 96
  %v3259 = vpop.permute.xlu0 %3258
  %3260 = vrot.lane.b32.xlu0 %v1045, 96
  %v3261 = vpop.permute.xlu0 %3260
  %3262 = vrot.lane.b32.xlu0 %v1050, 96
  %v3263 = vpop.permute.xlu0 %3262
  %3264 = vrot.lane.b32.xlu0 %v1055, 96
  %v3265 = vpop.permute.xlu0 %3264
  %3266 = vrot.lane.b32.xlu0 %v1060, 96
  %v3267 = vpop.permute.xlu0 %3266
  %3268 = vrot.lane.b32.xlu0 %v1065, 96
  %v3269 = vpop.permute.xlu0 %3268
  %3270 = vrot.lane.b32.xlu0 %v1070, 96
  %v3271 = vpop.permute.xlu0 %3270
  %3272 = vrot.lane.b32.xlu0 %v1075, 96
  %v3273 = vpop.permute.xlu0 %3272
  %3274 = vrot.lane.b32.xlu0 %v1080, 96
  %v3275 = vpop.permute.xlu0 %3274
  %3276 = vrot.lane.b32.xlu0 %v1085, 96
  %v3277 = vpop.permute.xlu0 %3276
  %3278 = vrot.lane.b32.xlu0 %v1090, 96
  %v3279 = vpop.permute.xlu0 %3278
  %3280 = vrot.lane.b32.xlu0 %v1095, 96
  %v3281 = vpop.permute.xlu0 %3280
  %3282 = vrot.lane.b32.xlu0 %v1100, 96
  %v3283 = vpop.permute.xlu0 %3282
  %3284 = vrot.lane.b32.xlu0 %v1105, 96
  %v3285 = vpop.permute.xlu0 %3284
  %3286 = vrot.lane.b32.xlu0 %v1110, 96
  %v3287 = vpop.permute.xlu0 %3286
  %3288 = vrot.lane.b32.xlu0 %v1115, 96
  %v3289 = vpop.permute.xlu0 %3288
  %3290 = vrot.lane.b32.xlu0 %v1120, 96
  %v3291 = vpop.permute.xlu0 %3290
  %3292 = vrot.lane.b32.xlu0 %v1125, 96
  %v3293 = vpop.permute.xlu0 %3292
  %3294 = vrot.lane.b32.xlu0 %v1130, 96
  %v3295 = vpop.permute.xlu0 %3294
  %3296 = vrot.lane.b32.xlu0 %v1135, 96
  %v3297 = vpop.permute.xlu0 %3296
  %3298 = vrot.lane.b32.xlu0 %v1140, 96
  %v3299 = vpop.permute.xlu0 %3298
  %3300 = vrot.lane.b32.xlu0 %v1145, 96
  %v3301 = vpop.permute.xlu0 %3300
  %3302 = vrot.lane.b32.xlu0 %v1150, 96
  %v3303 = vpop.permute.xlu0 %3302
  %3304 = vrot.lane.b32.xlu0 %v1155, 96
  %v3305 = vpop.permute.xlu0 %3304
  %3306 = vrot.lane.b32.xlu0 %v1160, 96
  %v3307 = vpop.permute.xlu0 %3306
  %3308 = vrot.lane.b32.xlu0 %v1165, 96
  %v3309 = vpop.permute.xlu0 %3308
  %3310 = vrot.lane.b32.xlu0 %v1170, 96
  %v3311 = vpop.permute.xlu0 %3310
  %3312 = vrot.lane.b32.xlu0 %v1175, 96
  %v3313 = vpop.permute.xlu0 %3312
  %3314 = vrot.lane.b32.xlu0 %v1180, 96
  %v3315 = vpop.permute.xlu0 %3314
  %3316 = vrot.lane.b32.xlu0 %v1185, 96
  %v3317 = vpop.permute.xlu0 %3316
  %3318 = vrot.lane.b32.xlu0 %v1190, 96
  %v3319 = vpop.permute.xlu0 %3318
  %3320 = vrot.lane.b32.xlu0 %v1195, 96
  %v3321 = vpop.permute.xlu0 %3320
  %3322 = vrot.lane.b32.xlu0 %v1200, 96
  %v3323 = vpop.permute.xlu0 %3322
  %3324 = vrot.lane.b32.xlu0 %v1205, 96
  %v3325 = vpop.permute.xlu0 %3324
  %3326 = vrot.lane.b32.xlu0 %v1210, 96
  %v3327 = vpop.permute.xlu0 %3326
  %3328 = vrot.lane.b32.xlu0 %v1215, 96
  %v3329 = vpop.permute.xlu0 %3328
  %3330 = vrot.lane.b32.xlu0 %v1220, 96
  %v3331 = vpop.permute.xlu0 %3330
  %3332 = vrot.lane.b32.xlu0 %v1225, 96
  %v3333 = vpop.permute.xlu0 %3332
  %3334 = vrot.lane.b32.xlu0 %v1230, 96
  %v3335 = vpop.permute.xlu0 %3334
  %3336 = vrot.lane.b32.xlu0 %v1235, 96
  %v3337 = vpop.permute.xlu0 %3336
  %3338 = vrot.lane.b32.xlu0 %v1240, 96
  %v3339 = vpop.permute.xlu0 %3338
  %3340 = vrot.lane.b32.xlu0 %v1245, 96
  %v3341 = vpop.permute.xlu0 %3340
  %3342 = vrot.lane.b32.xlu0 %v1250, 96
  %v3343 = vpop.permute.xlu0 %3342
  %3344 = vrot.lane.b32.xlu0 %v1255, 96
  %v3345 = vpop.permute.xlu0 %3344
  %3346 = vrot.lane.b32.xlu0 %v1260, 96
  %v3347 = vpop.permute.xlu0 %3346
  %3348 = vrot.lane.b32.xlu0 %v1265, 96
  %v3349 = vpop.permute.xlu0 %3348
  %3350 = vrot.lane.b32.xlu0 %v1270, 96
  %v3351 = vpop.permute.xlu0 %3350
  %3352 = vrot.lane.b32.xlu0 %v1275, 96
  %v3353 = vpop.permute.xlu0 %3352
  %3354 = vrot.lane.b32.xlu0 %v1280, 96
  %v3355 = vpop.permute.xlu0 %3354
  %3356 = vrot.lane.b32.xlu0 %v1285, 96
  %v3357 = vpop.permute.xlu0 %3356
  %3358 = vrot.lane.b32.xlu0 %v1290, 96
  %v3359 = vpop.permute.xlu0 %3358
  %3360 = vrot.lane.b32.xlu0 %v1295, 96
  %v3361 = vpop.permute.xlu0 %3360
  %3362 = vrot.lane.b32.xlu0 %v1300, 96
  %v3363 = vpop.permute.xlu0 %3362
  %3364 = vrot.lane.b32.xlu0 %v1305, 96
  %v3365 = vpop.permute.xlu0 %3364
  %3366 = vrot.lane.b32.xlu0 %v1310, 96
  %v3367 = vpop.permute.xlu0 %3366
  %3368 = vrot.lane.b32.xlu0 %v1315, 96
  %v3369 = vpop.permute.xlu0 %3368
  %3370 = vrot.lane.b32.xlu0 %v1320, 96
  %v3371 = vpop.permute.xlu0 %3370
  %3372 = vrot.lane.b32.xlu0 %v1325, 96
  %v3373 = vpop.permute.xlu0 %3372
  %3374 = vrot.lane.b32.xlu0 %v1330, 96
  %v3375 = vpop.permute.xlu0 %3374
  %3376 = vrot.lane.b32.xlu0 %v1335, 96
  %v3377 = vpop.permute.xlu0 %3376
  %3378 = vrot.lane.b32.xlu0 %v1340, 96
  %v3379 = vpop.permute.xlu0 %3378
  %3380 = vrot.lane.b32.xlu0 %v1345, 96
  %v3381 = vpop.permute.xlu0 %3380
  %3382 = vrot.lane.b32.xlu0 %v1350, 96
  %v3383 = vpop.permute.xlu0 %3382
  %3384 = vrot.lane.b32.xlu0 %v1355, 96
  %v3385 = vpop.permute.xlu0 %3384
  %3386 = vrot.lane.b32.xlu0 %v1360, 96
  %v3387 = vpop.permute.xlu0 %3386
  %3388 = vrot.lane.b32.xlu0 %v1365, 96
  %v3389 = vpop.permute.xlu0 %3388
  %3390 = vrot.lane.b32.xlu0 %v1370, 96
  %v3391 = vpop.permute.xlu0 %3390
  %3392 = vrot.lane.b32.xlu0 %v1375, 96
  %v3393 = vpop.permute.xlu0 %3392
  %3394 = vrot.lane.b32.xlu0 %v1380, 96
  %v3395 = vpop.permute.xlu0 %3394
  %3396 = vrot.lane.b32.xlu0 %v1385, 96
  %v3397 = vpop.permute.xlu0 %3396
  %3398 = vrot.lane.b32.xlu0 %v1390, 96
  %v3399 = vpop.permute.xlu0 %3398
  %3400 = vrot.lane.b32.xlu0 %v1395, 96
  %v3401 = vpop.permute.xlu0 %3400
  %3402 = vrot.lane.b32.xlu0 %v1400, 96
  %v3403 = vpop.permute.xlu0 %3402
  %3404 = vrot.lane.b32.xlu0 %v1405, 96
  %v3405 = vpop.permute.xlu0 %3404
  %3406 = vrot.lane.b32.xlu0 %v1410, 96
  %v3407 = vpop.permute.xlu0 %3406
  %3408 = vrot.lane.b32.xlu0 %v1415, 96
  %v3409 = vpop.permute.xlu0 %3408
  %3410 = vrot.lane.b32.xlu0 %v1420, 96
  %v3411 = vpop.permute.xlu0 %3410
  %3412 = vrot.lane.b32.xlu0 %v1425, 96
  %v3413 = vpop.permute.xlu0 %3412
  %3414 = vrot.lane.b32.xlu0 %v1430, 96
  %v3415 = vpop.permute.xlu0 %3414
  %3416 = vrot.lane.b32.xlu0 %v1435, 96
  %v3417 = vpop.permute.xlu0 %3416
  %3418 = vrot.lane.b32.xlu0 %v1440, 96
  %v3419 = vpop.permute.xlu0 %3418
  %3420 = vrot.lane.b32.xlu0 %v1445, 96
  %v3421 = vpop.permute.xlu0 %3420
  %3422 = vrot.lane.b32.xlu0 %v1450, 96
  %v3423 = vpop.permute.xlu0 %3422
  %3424 = vrot.lane.b32.xlu0 %v1455, 96
  %v3425 = vpop.permute.xlu0 %3424
  %3426 = vrot.lane.b32.xlu0 %v1460, 96
  %v3427 = vpop.permute.xlu0 %3426
  %3428 = vrot.lane.b32.xlu0 %v1465, 96
  %v3429 = vpop.permute.xlu0 %3428
  %3430 = vrot.lane.b32.xlu0 %v1470, 96
  %v3431 = vpop.permute.xlu0 %3430
  %3432 = vrot.lane.b32.xlu0 %v1475, 96
  %v3433 = vpop.permute.xlu0 %3432
  %3434 = vrot.lane.b32.xlu0 %v1480, 96
  %v3435 = vpop.permute.xlu0 %3434
  %3436 = vrot.lane.b32.xlu0 %v1485, 96
  %v3437 = vpop.permute.xlu0 %3436
  %3438 = vrot.lane.b32.xlu0 %v1490, 96
  %v3439 = vpop.permute.xlu0 %3438
  %3440 = vrot.lane.b32.xlu0 %v1495, 96
  %v3441 = vpop.permute.xlu0 %3440
  %3442 = vrot.lane.b32.xlu0 %v1500, 96
  %v3443 = vpop.permute.xlu0 %3442
  %3444 = vrot.lane.b32.xlu0 %v1505, 96
  %v3445 = vpop.permute.xlu0 %3444
  %3446 = vrot.lane.b32.xlu0 %v1510, 96
  %v3447 = vpop.permute.xlu0 %3446
  %3448 = vrot.lane.b32.xlu0 %v1515, 96
  %v3449 = vpop.permute.xlu0 %3448
  %3450 = vrot.lane.b32.xlu0 %v1520, 96
  %v3451 = vpop.permute.xlu0 %3450
  %3452 = vrot.lane.b32.xlu0 %v1525, 96
  %v3453 = vpop.permute.xlu0 %3452
  %3454 = vrot.lane.b32.xlu0 %v1530, 96
  %v3455 = vpop.permute.xlu0 %3454
  %3456 = vrot.lane.b32.xlu0 %v1535, 96
  %v3457 = vpop.permute.xlu0 %3456
  %3458 = vrot.lane.b32.xlu0 %v1540, 96
  %v3459 = vpop.permute.xlu0 %3458
  %3460 = vrot.lane.b32.xlu0 %v1545, 96
  %v3461 = vpop.permute.xlu0 %3460
  %3462 = vrot.lane.b32.xlu0 %v1550, 96
  %v3463 = vpop.permute.xlu0 %3462
  %3464 = vrot.lane.b32.xlu0 %v1555, 96
  %v3465 = vpop.permute.xlu0 %3464
  %3466 = vrot.lane.b32.xlu0 %v1560, 96
  %v3467 = vpop.permute.xlu0 %3466
  %3468 = vrot.lane.b32.xlu0 %v1565, 96
  %v3469 = vpop.permute.xlu0 %3468
  %3470 = vrot.lane.b32.xlu0 %v1570, 96
  %v3471 = vpop.permute.xlu0 %3470
  %3472 = vrot.lane.b32.xlu0 %v1575, 96
  %v3473 = vpop.permute.xlu0 %3472
  %3474 = vrot.lane.b32.xlu0 %v1580, 96
  %v3475 = vpop.permute.xlu0 %3474
  %3476 = vrot.lane.b32.xlu0 %v1585, 96
  %v3477 = vpop.permute.xlu0 %3476
  %3478 = vrot.lane.b32.xlu0 %v1590, 96
  %v3479 = vpop.permute.xlu0 %3478
  %3480 = vrot.lane.b32.xlu0 %v1595, 96
  %v3481 = vpop.permute.xlu0 %3480
  %3482 = vrot.lane.b32.xlu0 %v1600, 96
  %v3483 = vpop.permute.xlu0 %3482
  %3484 = vrot.lane.b32.xlu0 %v1605, 96
  %v3485 = vpop.permute.xlu0 %3484
  %3486 = vrot.lane.b32.xlu0 %v1610, 96
  %v3487 = vpop.permute.xlu0 %3486
  %3488 = vrot.lane.b32.xlu0 %v1615, 96
  %v3489 = vpop.permute.xlu0 %3488
  %3490 = vrot.lane.b32.xlu0 %v1620, 96
  %v3491 = vpop.permute.xlu0 %3490
  %3492 = vrot.lane.b32.xlu0 %v1625, 96
  %v3493 = vpop.permute.xlu0 %3492
  %3494 = vrot.lane.b32.xlu0 %v1630, 96
  %v3495 = vpop.permute.xlu0 %3494
  %3496 = vrot.lane.b32.xlu0 %v1635, 96
  %v3497 = vpop.permute.xlu0 %3496
  %3498 = vrot.lane.b32.xlu0 %v1640, 96
  %v3499 = vpop.permute.xlu0 %3498
  %3500 = vrot.lane.b32.xlu0 %v1645, 96
  %v3501 = vpop.permute.xlu0 %3500
  %3502 = vrot.lane.b32.xlu0 %v1650, 96
  %v3503 = vpop.permute.xlu0 %3502
  %3504 = vrot.lane.b32.xlu0 %v1655, 96
  %v3505 = vpop.permute.xlu0 %3504
  %3506 = vrot.lane.b32.xlu0 %v1660, 96
  %v3507 = vpop.permute.xlu0 %3506
  %3508 = vrot.lane.b32.xlu0 %v1665, 96
  %v3509 = vpop.permute.xlu0 %3508
  %3510 = vrot.lane.b32.xlu0 %v1670, 96
  %v3511 = vpop.permute.xlu0 %3510
  %3512 = vrot.lane.b32.xlu0 %v1675, 96
  %v3513 = vpop.permute.xlu0 %3512
  %3514 = vrot.lane.b32.xlu0 %v1680, 96
  %v3515 = vpop.permute.xlu0 %3514
  %3516 = vrot.lane.b32.xlu0 %v1685, 96
  %v3517 = vpop.permute.xlu0 %3516
  %3518 = vrot.lane.b32.xlu0 %v1690, 96
  %v3519 = vpop.permute.xlu0 %3518
  %3520 = vrot.lane.b32.xlu0 %v1695, 96
  %v3521 = vpop.permute.xlu0 %3520
  %3522 = vrot.lane.b32.xlu0 %v1700, 96
  %v3523 = vpop.permute.xlu0 %3522
  %3524 = vrot.lane.b32.xlu0 %v1705, 96
  %v3525 = vpop.permute.xlu0 %3524
  %3526 = vrot.lane.b32.xlu0 %v1710, 96
  %v3527 = vpop.permute.xlu0 %3526
  %3528 = vrot.lane.b32.xlu0 %v1715, 96
  %v3529 = vpop.permute.xlu0 %3528
  %3530 = vrot.lane.b32.xlu0 %v1720, 96
  %v3531 = vpop.permute.xlu0 %3530
  %3532 = vrot.lane.b32.xlu0 %v1725, 96
  %v3533 = vpop.permute.xlu0 %3532
  %3534 = vrot.lane.b32.xlu0 %v1730, 96
  %v3535 = vpop.permute.xlu0 %3534
  %3536 = vrot.lane.b32.xlu0 %v1735, 96
  %v3537 = vpop.permute.xlu0 %3536
  %3538 = vrot.lane.b32.xlu0 %v1740, 96
  %v3539 = vpop.permute.xlu0 %3538
  %3540 = vrot.lane.b32.xlu0 %v1745, 96
  %v3541 = vpop.permute.xlu0 %3540
  %3542 = vrot.lane.b32.xlu0 %v1750, 96
  %v3543 = vpop.permute.xlu0 %3542
  %3544 = vrot.lane.b32.xlu0 %v1755, 96
  %v3545 = vpop.permute.xlu0 %3544
  %3546 = vrot.lane.b32.xlu0 %v1760, 96
  %v3547 = vpop.permute.xlu0 %3546
  %3548 = vrot.lane.b32.xlu0 %v1765, 96
  %v3549 = vpop.permute.xlu0 %3548
  %3550 = vrot.lane.b32.xlu0 %v1770, 96
  %v3551 = vpop.permute.xlu0 %3550
  %3552 = vrot.lane.b32.xlu0 %v1775, 96
  %v3553 = vpop.permute.xlu0 %3552
  %3554 = vrot.lane.b32.xlu0 %v1780, 96
  %v3555 = vpop.permute.xlu0 %3554
  %3556 = vrot.lane.b32.xlu0 %v1785, 96
  %v3557 = vpop.permute.xlu0 %3556
  %3558 = vrot.lane.b32.xlu0 %v1790, 96
  %v3559 = vpop.permute.xlu0 %3558
  %3560 = vrot.lane.b32.xlu0 %v1795, 96
  %v3561 = vpop.permute.xlu0 %3560
  %3562 = vrot.lane.b32.xlu0 %v1800, 96
  %v3563 = vpop.permute.xlu0 %3562
  %3564 = vrot.lane.b32.xlu0 %v1805, 96
  %v3565 = vpop.permute.xlu0 %3564
  %3566 = vrot.lane.b32.xlu0 %v1810, 96
  %v3567 = vpop.permute.xlu0 %3566
  %3568 = vrot.lane.b32.xlu0 %v1815, 96
  %v3569 = vpop.permute.xlu0 %3568
  %3570 = vrot.lane.b32.xlu0 %v1820, 96
  %v3571 = vpop.permute.xlu0 %3570
  %3572 = vrot.lane.b32.xlu0 %v1825, 96
  %v3573 = vpop.permute.xlu0 %3572
  %3574 = vrot.lane.b32.xlu0 %v1830, 96
  %v3575 = vpop.permute.xlu0 %3574
  %3576 = vrot.lane.b32.xlu0 %v1835, 96
  %v3577 = vpop.permute.xlu0 %3576
  %3578 = vrot.lane.b32.xlu0 %v1840, 96
  %v3579 = vpop.permute.xlu0 %3578
  %3580 = vrot.lane.b32.xlu0 %v1845, 96
  %v3581 = vpop.permute.xlu0 %3580
  %3582 = vrot.lane.b32.xlu0 %v1850, 96
  %v3583 = vpop.permute.xlu0 %3582
  %3584 = vrot.lane.b32.xlu0 %v1855, 96
  %v3585 = vpop.permute.xlu0 %3584
  %3586 = vrot.lane.b32.xlu0 %v1860, 96
  %v3587 = vpop.permute.xlu0 %3586
  %3588 = vrot.lane.b32.xlu0 %v1865, 96
  %v3589 = vpop.permute.xlu0 %3588
  %3590 = vrot.lane.b32.xlu0 %v1870, 96
  %v3591 = vpop.permute.xlu0 %3590
  %3592 = vrot.lane.b32.xlu0 %v1875, 96
  %v3593 = vpop.permute.xlu0 %3592
  %3594 = vrot.lane.b32.xlu0 %v1880, 96
  %v3595 = vpop.permute.xlu0 %3594
  %3596 = vrot.lane.b32.xlu0 %v1885, 96
  %v3597 = vpop.permute.xlu0 %3596
  %3598 = vrot.lane.b32.xlu0 %v1890, 96
  %v3599 = vpop.permute.xlu0 %3598
  %3600 = vrot.lane.b32.xlu0 %v1895, 96
  %v3601 = vpop.permute.xlu0 %3600
  %3602 = vrot.lane.b32.xlu0 %v1900, 96
  %v3603 = vpop.permute.xlu0 %3602
  %3604 = vrot.lane.b32.xlu0 %v1905, 96
  %v3605 = vpop.permute.xlu0 %3604
  %3606 = vrot.lane.b32.xlu0 %v1910, 96
  %v3607 = vpop.permute.xlu0 %3606
  %3608 = vrot.lane.b32.xlu0 %v1915, 96
  %v3609 = vpop.permute.xlu0 %3608
  %3610 = vrot.lane.b32.xlu0 %v1920, 96
  %v3611 = vpop.permute.xlu0 %3610
  %3612 = vrot.lane.b32.xlu0 %v1925, 96
  %v3613 = vpop.permute.xlu0 %3612
  %3614 = vrot.lane.b32.xlu0 %v1930, 96
  %v3615 = vpop.permute.xlu0 %3614
  %3616 = vrot.lane.b32.xlu0 %v1935, 96
  %v3617 = vpop.permute.xlu0 %3616
  %3618 = vrot.lane.b32.xlu0 %v1940, 96
  %v3619 = vpop.permute.xlu0 %3618
  %3620 = vrot.lane.b32.xlu0 %v1945, 96
  %v3621 = vpop.permute.xlu0 %3620
  %3622 = vrot.lane.b32.xlu0 %v1950, 96
  %v3623 = vpop.permute.xlu0 %3622
  %3624 = vrot.lane.b32.xlu0 %v1955, 96
  %v3625 = vpop.permute.xlu0 %3624
  %3626 = vrot.lane.b32.xlu0 %v1960, 96
  %v3627 = vpop.permute.xlu0 %3626
  %3836 = vst.msk [vmem:[#allocation4] sm:$0xff] %vm1963, %v3213
  %3837 = vst.msk [vmem:[#allocation4 + $0x8] sm:$0xff] %vm1963, %v3215
  %3838 = vst.msk [vmem:[#allocation4 + $0x10] sm:$0xff] %vm1963, %v3217
  %3839 = vst.msk [vmem:[#allocation4 + $0x18] sm:$0xff] %vm1963, %v3219
  %3840 = vst.msk [vmem:[#allocation4 + $0x20] sm:$0xff] %vm1963, %v3221
  %3841 = vst.msk [vmem:[#allocation4 + $0x28] sm:$0xff] %vm1963, %v3223
  %3842 = vst.msk [vmem:[#allocation4 + $0x30] sm:$0xff] %vm1963, %v3225
  %3843 = vst.msk [vmem:[#allocation4 + $0x38] sm:$0xff] %vm1963, %v3227
  %3844 = vst.msk [vmem:[#allocation4 + $0x40] sm:$0xff] %vm1963, %v3229
  %3845 = vst.msk [vmem:[#allocation4 + $0x48] sm:$0xff] %vm1963, %v3231
  %3846 = vst.msk [vmem:[#allocation4 + $0x50] sm:$0xff] %vm1963, %v3233
  %3847 = vst.msk [vmem:[#allocation4 + $0x58] sm:$0xff] %vm1963, %v3235
  %3848 = vst.msk [vmem:[#allocation4 + $0x60] sm:$0xff] %vm1963, %v3237
  %3849 = vst.msk [vmem:[#allocation4 + $0x68] sm:$0xff] %vm1963, %v3239
  %3850 = vst.msk [vmem:[#allocation4 + $0x70] sm:$0xff] %vm1963, %v3241
  %3851 = vst.msk [vmem:[#allocation4 + $0x78] sm:$0xff] %vm1963, %v3243
  %3852 = vst.msk [vmem:[#allocation4 + $0x80] sm:$0xff] %vm1963, %v3245
  %3853 = vst.msk [vmem:[#allocation4 + $0x88] sm:$0xff] %vm1963, %v3247
  %3854 = vst.msk [vmem:[#allocation4 + $0x90] sm:$0xff] %vm1963, %v3249
  %3855 = vst.msk [vmem:[#allocation4 + $0x98] sm:$0xff] %vm1963, %v3251
  %3856 = vst.msk [vmem:[#allocation4 + $0xa0] sm:$0xff] %vm1963, %v3253
  %3857 = vst.msk [vmem:[#allocation4 + $0xa8] sm:$0xff] %vm1963, %v3255
  %3858 = vst.msk [vmem:[#allocation4 + $0xb0] sm:$0xff] %vm1963, %v3257
  %3859 = vst.msk [vmem:[#allocation4 + $0xb8] sm:$0xff] %vm1963, %v3259
  %3860 = vst.msk [vmem:[#allocation4 + $0xc0] sm:$0xff] %vm1963, %v3261
  %3861 = vst.msk [vmem:[#allocation4 + $0xc8] sm:$0xff] %vm1963, %v3263
  %3862 = vst.msk [vmem:[#allocation4 + $0xd0] sm:$0xff] %vm1963, %v3265
  %3863 = vst.msk [vmem:[#allocation4 + $0xd8] sm:$0xff] %vm1963, %v3267
  %3864 = vst.msk [vmem:[#allocation4 + $0xe0] sm:$0xff] %vm1963, %v3269
  %3865 = vst.msk [vmem:[#allocation4 + $0xe8] sm:$0xff] %vm1963, %v3271
  %3866 = vst.msk [vmem:[#allocation4 + $0xf0] sm:$0xff] %vm1963, %v3273
  %3867 = vst.msk [vmem:[#allocation4 + $0xf8] sm:$0xff] %vm1963, %v3275
  %3868 = vst.msk [vmem:[#allocation4 + $0x100] sm:$0xff] %vm1963, %v3277
  %3869 = vst.msk [vmem:[#allocation4 + $0x108] sm:$0xff] %vm1963, %v3279
  %3870 = vst.msk [vmem:[#allocation4 + $0x110] sm:$0xff] %vm1963, %v3281
  %3871 = vst.msk [vmem:[#allocation4 + $0x118] sm:$0xff] %vm1963, %v3283
  %3872 = vst.msk [vmem:[#allocation4 + $0x120] sm:$0xff] %vm1963, %v3285
  %3873 = vst.msk [vmem:[#allocation4 + $0x128] sm:$0xff] %vm1963, %v3287
  %3874 = vst.msk [vmem:[#allocation4 + $0x130] sm:$0xff] %vm1963, %v3289
  %3875 = vst.msk [vmem:[#allocation4 + $0x138] sm:$0xff] %vm1963, %v3291
  %3876 = vst.msk [vmem:[#allocation4 + $0x140] sm:$0xff] %vm1963, %v3293
  %3877 = vst.msk [vmem:[#allocation4 + $0x148] sm:$0xff] %vm1963, %v3295
  %3878 = vst.msk [vmem:[#allocation4 + $0x150] sm:$0xff] %vm1963, %v3297
  %3879 = vst.msk [vmem:[#allocation4 + $0x158] sm:$0xff] %vm1963, %v3299
  %3880 = vst.msk [vmem:[#allocation4 + $0x160] sm:$0xff] %vm1963, %v3301
  %3881 = vst.msk [vmem:[#allocation4 + $0x168] sm:$0xff] %vm1963, %v3303
  %3882 = vst.msk [vmem:[#allocation4 + $0x170] sm:$0xff] %vm1963, %v3305
  %3883 = vst.msk [vmem:[#allocation4 + $0x178] sm:$0xff] %vm1963, %v3307
  %3884 = vst.msk [vmem:[#allocation4 + $0x180] sm:$0xff] %vm1963, %v3309
  %3885 = vst.msk [vmem:[#allocation4 + $0x188] sm:$0xff] %vm1963, %v3311
  %3886 = vst.msk [vmem:[#allocation4 + $0x190] sm:$0xff] %vm1963, %v3313
  %3887 = vst.msk [vmem:[#allocation4 + $0x198] sm:$0xff] %vm1963, %v3315
  %3888 = vst.msk [vmem:[#allocation4 + $0x1a0] sm:$0xff] %vm1963, %v3317
  %3889 = vst.msk [vmem:[#allocation4 + $0x1a8] sm:$0xff] %vm1963, %v3319
  %3890 = vst.msk [vmem:[#allocation4 + $0x1b0] sm:$0xff] %vm1963, %v3321
  %3891 = vst.msk [vmem:[#allocation4 + $0x1b8] sm:$0xff] %vm1963, %v3323
  %3892 = vst.msk [vmem:[#allocation4 + $0x1c0] sm:$0xff] %vm1963, %v3325
  %3893 = vst.msk [vmem:[#allocation4 + $0x1c8] sm:$0xff] %vm1963, %v3327
  %3894 = vst.msk [vmem:[#allocation4 + $0x1d0] sm:$0xff] %vm1963, %v3329
  %3895 = vst.msk [vmem:[#allocation4 + $0x1d8] sm:$0xff] %vm1963, %v3331
  %3896 = vst.msk [vmem:[#allocation4 + $0x1e0] sm:$0xff] %vm1963, %v3333
  %3897 = vst.msk [vmem:[#allocation4 + $0x1e8] sm:$0xff] %vm1963, %v3335
  %3898 = vst.msk [vmem:[#allocation4 + $0x1f0] sm:$0xff] %vm1963, %v3337
  %3899 = vst.msk [vmem:[#allocation4 + $0x1f8] sm:$0xff] %vm1963, %v3339
  %3900 = vst.msk [vmem:[#allocation4 + $0x200] sm:$0xff] %vm1963, %v3341
  %3901 = vst.msk [vmem:[#allocation4 + $0x208] sm:$0xff] %vm1963, %v3343
  %3902 = vst.msk [vmem:[#allocation4 + $0x210] sm:$0xff] %vm1963, %v3345
  %3903 = vst.msk [vmem:[#allocation4 + $0x218] sm:$0xff] %vm1963, %v3347
  %3904 = vst.msk [vmem:[#allocation4 + $0x220] sm:$0xff] %vm1963, %v3349
  %3905 = vst.msk [vmem:[#allocation4 + $0x228] sm:$0xff] %vm1963, %v3351
  %3906 = vst.msk [vmem:[#allocation4 + $0x230] sm:$0xff] %vm1963, %v3353
  %3907 = vst.msk [vmem:[#allocation4 + $0x238] sm:$0xff] %vm1963, %v3355
  %3908 = vst.msk [vmem:[#allocation4 + $0x240] sm:$0xff] %vm1963, %v3357
  %3909 = vst.msk [vmem:[#allocation4 + $0x248] sm:$0xff] %vm1963, %v3359
  %3910 = vst.msk [vmem:[#allocation4 + $0x250] sm:$0xff] %vm1963, %v3361
  %3911 = vst.msk [vmem:[#allocation4 + $0x258] sm:$0xff] %vm1963, %v3363
  %3912 = vst.msk [vmem:[#allocation4 + $0x260] sm:$0xff] %vm1963, %v3365
  %3913 = vst.msk [vmem:[#allocation4 + $0x268] sm:$0xff] %vm1963, %v3367
  %3914 = vst.msk [vmem:[#allocation4 + $0x270] sm:$0xff] %vm1963, %v3369
  %3915 = vst.msk [vmem:[#allocation4 + $0x278] sm:$0xff] %vm1963, %v3371
  %3916 = vst.msk [vmem:[#allocation4 + $0x280] sm:$0xff] %vm1963, %v3373
  %3917 = vst.msk [vmem:[#allocation4 + $0x288] sm:$0xff] %vm1963, %v3375
  %3918 = vst.msk [vmem:[#allocation4 + $0x290] sm:$0xff] %vm1963, %v3377
  %3919 = vst.msk [vmem:[#allocation4 + $0x298] sm:$0xff] %vm1963, %v3379
  %3920 = vst.msk [vmem:[#allocation4 + $0x2a0] sm:$0xff] %vm1963, %v3381
  %3921 = vst.msk [vmem:[#allocation4 + $0x2a8] sm:$0xff] %vm1963, %v3383
  %3922 = vst.msk [vmem:[#allocation4 + $0x2b0] sm:$0xff] %vm1963, %v3385
  %3923 = vst.msk [vmem:[#allocation4 + $0x2b8] sm:$0xff] %vm1963, %v3387
  %3924 = vst.msk [vmem:[#allocation4 + $0x2c0] sm:$0xff] %vm1963, %v3389
  %3925 = vst.msk [vmem:[#allocation4 + $0x2c8] sm:$0xff] %vm1963, %v3391
  %3926 = vst.msk [vmem:[#allocation4 + $0x2d0] sm:$0xff] %vm1963, %v3393
  %3927 = vst.msk [vmem:[#allocation4 + $0x2d8] sm:$0xff] %vm1963, %v3395
  %3928 = vst.msk [vmem:[#allocation4 + $0x2e0] sm:$0xff] %vm1963, %v3397
  %3929 = vst.msk [vmem:[#allocation4 + $0x2e8] sm:$0xff] %vm1963, %v3399
  %3930 = vst.msk [vmem:[#allocation4 + $0x2f0] sm:$0xff] %vm1963, %v3401
  %3931 = vst.msk [vmem:[#allocation4 + $0x2f8] sm:$0xff] %vm1963, %v3403
  %3932 = vst.msk [vmem:[#allocation4 + $0x300] sm:$0xff] %vm1963, %v3405
  %3933 = vst.msk [vmem:[#allocation4 + $0x308] sm:$0xff] %vm1963, %v3407
  %3934 = vst.msk [vmem:[#allocation4 + $0x310] sm:$0xff] %vm1963, %v3409
  %3935 = vst.msk [vmem:[#allocation4 + $0x318] sm:$0xff] %vm1963, %v3411
  %3936 = vst.msk [vmem:[#allocation4 + $0x320] sm:$0xff] %vm1963, %v3413
  %3937 = vst.msk [vmem:[#allocation4 + $0x328] sm:$0xff] %vm1963, %v3415
  %3938 = vst.msk [vmem:[#allocation4 + $0x330] sm:$0xff] %vm1963, %v3417
  %3939 = vst.msk [vmem:[#allocation4 + $0x338] sm:$0xff] %vm1963, %v3419
  %3940 = vst.msk [vmem:[#allocation4 + $0x340] sm:$0xff] %vm1963, %v3421
  %3941 = vst.msk [vmem:[#allocation4 + $0x348] sm:$0xff] %vm1963, %v3423
  %3942 = vst.msk [vmem:[#allocation4 + $0x350] sm:$0xff] %vm1963, %v3425
  %3943 = vst.msk [vmem:[#allocation4 + $0x358] sm:$0xff] %vm1963, %v3427
  %3944 = vst.msk [vmem:[#allocation4 + $0x360] sm:$0xff] %vm1963, %v3429
  %3945 = vst.msk [vmem:[#allocation4 + $0x368] sm:$0xff] %vm1963, %v3431
  %3946 = vst.msk [vmem:[#allocation4 + $0x370] sm:$0xff] %vm1963, %v3433
  %3947 = vst.msk [vmem:[#allocation4 + $0x378] sm:$0xff] %vm1963, %v3435
  %3948 = vst.msk [vmem:[#allocation4 + $0x380] sm:$0xff] %vm1963, %v3437
  %3949 = vst.msk [vmem:[#allocation4 + $0x388] sm:$0xff] %vm1963, %v3439
  %3950 = vst.msk [vmem:[#allocation4 + $0x390] sm:$0xff] %vm1963, %v3441
  %3951 = vst.msk [vmem:[#allocation4 + $0x398] sm:$0xff] %vm1963, %v3443
  %3952 = vst.msk [vmem:[#allocation4 + $0x3a0] sm:$0xff] %vm1963, %v3445
  %3953 = vst.msk [vmem:[#allocation4 + $0x3a8] sm:$0xff] %vm1963, %v3447
  %3954 = vst.msk [vmem:[#allocation4 + $0x3b0] sm:$0xff] %vm1963, %v3449
  %3955 = vst.msk [vmem:[#allocation4 + $0x3b8] sm:$0xff] %vm1963, %v3451
  %3956 = vst.msk [vmem:[#allocation4 + $0x3c0] sm:$0xff] %vm1963, %v3453
  %3957 = vst.msk [vmem:[#allocation4 + $0x3c8] sm:$0xff] %vm1963, %v3455
  %3958 = vst.msk [vmem:[#allocation4 + $0x3d0] sm:$0xff] %vm1963, %v3457
  %3959 = vst.msk [vmem:[#allocation4 + $0x3d8] sm:$0xff] %vm1963, %v3459
  %3960 = vst.msk [vmem:[#allocation4 + $0x3e0] sm:$0xff] %vm1963, %v3461
  %3961 = vst.msk [vmem:[#allocation4 + $0x3e8] sm:$0xff] %vm1963, %v3463
  %3962 = vst.msk [vmem:[#allocation4 + $0x3f0] sm:$0xff] %vm1963, %v3465
  %3963 = vst.msk [vmem:[#allocation4 + $0x3f8] sm:$0xff] %vm1963, %v3467
  %3964 = vst.msk [vmem:[#allocation4 + $0x400] sm:$0xff] %vm1963, %v3469
  %3965 = vst.msk [vmem:[#allocation4 + $0x408] sm:$0xff] %vm1963, %v3471
  %3966 = vst.msk [vmem:[#allocation4 + $0x410] sm:$0xff] %vm1963, %v3473
  %3967 = vst.msk [vmem:[#allocation4 + $0x418] sm:$0xff] %vm1963, %v3475
  %3968 = vst.msk [vmem:[#allocation4 + $0x420] sm:$0xff] %vm1963, %v3477
  %3969 = vst.msk [vmem:[#allocation4 + $0x428] sm:$0xff] %vm1963, %v3479
  %3970 = vst.msk [vmem:[#allocation4 + $0x430] sm:$0xff] %vm1963, %v3481
  %3971 = vst.msk [vmem:[#allocation4 + $0x438] sm:$0xff] %vm1963, %v3483
  %3972 = vst.msk [vmem:[#allocation4 + $0x440] sm:$0xff] %vm1963, %v3485
  %3973 = vst.msk [vmem:[#allocation4 + $0x448] sm:$0xff] %vm1963, %v3487
  %3974 = vst.msk [vmem:[#allocation4 + $0x450] sm:$0xff] %vm1963, %v3489
  %3975 = vst.msk [vmem:[#allocation4 + $0x458] sm:$0xff] %vm1963, %v3491
  %3976 = vst.msk [vmem:[#allocation4 + $0x460] sm:$0xff] %vm1963, %v3493
  %3977 = vst.msk [vmem:[#allocation4 + $0x468] sm:$0xff] %vm1963, %v3495
  %3978 = vst.msk [vmem:[#allocation4 + $0x470] sm:$0xff] %vm1963, %v3497
  %3979 = vst.msk [vmem:[#allocation4 + $0x478] sm:$0xff] %vm1963, %v3499
  %3980 = vst.msk [vmem:[#allocation4 + $0x480] sm:$0xff] %vm1963, %v3501
  %3981 = vst.msk [vmem:[#allocation4 + $0x488] sm:$0xff] %vm1963, %v3503
  %3982 = vst.msk [vmem:[#allocation4 + $0x490] sm:$0xff] %vm1963, %v3505
  %3983 = vst.msk [vmem:[#allocation4 + $0x498] sm:$0xff] %vm1963, %v3507
  %3984 = vst.msk [vmem:[#allocation4 + $0x4a0] sm:$0xff] %vm1963, %v3509
  %3985 = vst.msk [vmem:[#allocation4 + $0x4a8] sm:$0xff] %vm1963, %v3511
  %3986 = vst.msk [vmem:[#allocation4 + $0x4b0] sm:$0xff] %vm1963, %v3513
  %3987 = vst.msk [vmem:[#allocation4 + $0x4b8] sm:$0xff] %vm1963, %v3515
  %3988 = vst.msk [vmem:[#allocation4 + $0x4c0] sm:$0xff] %vm1963, %v3517
  %3989 = vst.msk [vmem:[#allocation4 + $0x4c8] sm:$0xff] %vm1963, %v3519
  %3990 = vst.msk [vmem:[#allocation4 + $0x4d0] sm:$0xff] %vm1963, %v3521
  %3991 = vst.msk [vmem:[#allocation4 + $0x4d8] sm:$0xff] %vm1963, %v3523
  %3992 = vst.msk [vmem:[#allocation4 + $0x4e0] sm:$0xff] %vm1963, %v3525
  %3993 = vst.msk [vmem:[#allocation4 + $0x4e8] sm:$0xff] %vm1963, %v3527
  %3994 = vst.msk [vmem:[#allocation4 + $0x4f0] sm:$0xff] %vm1963, %v3529
  %3995 = vst.msk [vmem:[#allocation4 + $0x4f8] sm:$0xff] %vm1963, %v3531
  %3996 = vst.msk [vmem:[#allocation4 + $0x500] sm:$0xff] %vm1963, %v3533
  %3997 = vst.msk [vmem:[#allocation4 + $0x508] sm:$0xff] %vm1963, %v3535
  %3998 = vst.msk [vmem:[#allocation4 + $0x510] sm:$0xff] %vm1963, %v3537
  %3999 = vst.msk [vmem:[#allocation4 + $0x518] sm:$0xff] %vm1963, %v3539
  %4000 = vst.msk [vmem:[#allocation4 + $0x520] sm:$0xff] %vm1963, %v3541
  %4001 = vst.msk [vmem:[#allocation4 + $0x528] sm:$0xff] %vm1963, %v3543
  %4002 = vst.msk [vmem:[#allocation4 + $0x530] sm:$0xff] %vm1963, %v3545
  %4003 = vst.msk [vmem:[#allocation4 + $0x538] sm:$0xff] %vm1963, %v3547
  %4004 = vst.msk [vmem:[#allocation4 + $0x540] sm:$0xff] %vm1963, %v3549
  %4005 = vst.msk [vmem:[#allocation4 + $0x548] sm:$0xff] %vm1963, %v3551
  %4006 = vst.msk [vmem:[#allocation4 + $0x550] sm:$0xff] %vm1963, %v3553
  %4007 = vst.msk [vmem:[#allocation4 + $0x558] sm:$0xff] %vm1963, %v3555
  %4008 = vst.msk [vmem:[#allocation4 + $0x560] sm:$0xff] %vm1963, %v3557
  %4009 = vst.msk [vmem:[#allocation4 + $0x568] sm:$0xff] %vm1963, %v3559
  %4010 = vst.msk [vmem:[#allocation4 + $0x570] sm:$0xff] %vm1963, %v3561
  %4011 = vst.msk [vmem:[#allocation4 + $0x578] sm:$0xff] %vm1963, %v3563
  %4012 = vst.msk [vmem:[#allocation4 + $0x580] sm:$0xff] %vm1963, %v3565
  %4013 = vst.msk [vmem:[#allocation4 + $0x588] sm:$0xff] %vm1963, %v3567
  %4014 = vst.msk [vmem:[#allocation4 + $0x590] sm:$0xff] %vm1963, %v3569
  %4015 = vst.msk [vmem:[#allocation4 + $0x598] sm:$0xff] %vm1963, %v3571
  %4016 = vst.msk [vmem:[#allocation4 + $0x5a0] sm:$0xff] %vm1963, %v3573
  %4017 = vst.msk [vmem:[#allocation4 + $0x5a8] sm:$0xff] %vm1963, %v3575
  %4018 = vst.msk [vmem:[#allocation4 + $0x5b0] sm:$0xff] %vm1963, %v3577
  %4019 = vst.msk [vmem:[#allocation4 + $0x5b8] sm:$0xff] %vm1963, %v3579
  %4020 = vst.msk [vmem:[#allocation4 + $0x5c0] sm:$0xff] %vm1963, %v3581
  %4021 = vst.msk [vmem:[#allocation4 + $0x5c8] sm:$0xff] %vm1963, %v3583
  %4022 = vst.msk [vmem:[#allocation4 + $0x5d0] sm:$0xff] %vm1963, %v3585
  %4023 = vst.msk [vmem:[#allocation4 + $0x5d8] sm:$0xff] %vm1963, %v3587
  %4024 = vst.msk [vmem:[#allocation4 + $0x5e0] sm:$0xff] %vm1963, %v3589
  %4025 = vst.msk [vmem:[#allocation4 + $0x5e8] sm:$0xff] %vm1963, %v3591
  %4026 = vst.msk [vmem:[#allocation4 + $0x5f0] sm:$0xff] %vm1963, %v3593
  %4027 = vst.msk [vmem:[#allocation4 + $0x5f8] sm:$0xff] %vm1963, %v3595
  %4028 = vst.msk [vmem:[#allocation4 + $0x600] sm:$0xff] %vm1963, %v3597
  %4029 = vst.msk [vmem:[#allocation4 + $0x608] sm:$0xff] %vm1963, %v3599
  %4030 = vst.msk [vmem:[#allocation4 + $0x610] sm:$0xff] %vm1963, %v3601
  %4031 = vst.msk [vmem:[#allocation4 + $0x618] sm:$0xff] %vm1963, %v3603
  %4032 = vst.msk [vmem:[#allocation4 + $0x620] sm:$0xff] %vm1963, %v3605
  %4033 = vst.msk [vmem:[#allocation4 + $0x628] sm:$0xff] %vm1963, %v3607
  %4034 = vst.msk [vmem:[#allocation4 + $0x630] sm:$0xff] %vm1963, %v3609
  %4035 = vst.msk [vmem:[#allocation4 + $0x638] sm:$0xff] %vm1963, %v3611
  %4036 = vst.msk [vmem:[#allocation4 + $0x640] sm:$0xff] %vm1963, %v3613
  %4037 = vst.msk [vmem:[#allocation4 + $0x648] sm:$0xff] %vm1963, %v3615
  %4038 = vst.msk [vmem:[#allocation4 + $0x650] sm:$0xff] %vm1963, %v3617
  %4039 = vst.msk [vmem:[#allocation4 + $0x658] sm:$0xff] %vm1963, %v3619
  %4040 = vst.msk [vmem:[#allocation4 + $0x660] sm:$0xff] %vm1963, %v3621
  %4041 = vst.msk [vmem:[#allocation4 + $0x668] sm:$0xff] %vm1963, %v3623
  %4042 = vst.msk [vmem:[#allocation4 + $0x670] sm:$0xff] %vm1963, %v3625
  %4043 = vst.msk [vmem:[#allocation4 + $0x678] sm:$0xff] %vm1963, %v3627
  loop: start=0, step=1, limit=8
  $region14: #{tpu_custom_call.1} parent=0 // loop_pre_header
    _
  $region15: #{tpu_custom_call.1} parent=0 // loop_header
    %s4045 = sphi 0, %s4049
    %p4046 = scmp.ge.s32.totalorder %s4045, 8
  $region16: #{tpu_custom_call.1} parent=0 // loop_header_branch
    %4048 = sbr.rel (%p4046) target = $region20
  $region17: #{tpu_custom_call.1} parent=0 // loop_body
    %s4050 = smul.u32 %s4045, 2
    %s4051 = smul.u32 %s4045, 208
    %s4052 = scalar_lea.vmem [#allocation2], %s4051
    %v4053 = vld [vmem:[%s4052] sm:$0xff]
    %v4054 = vld [vmem:[%s4052 + $0x8] sm:$0xff]
    %v4055 = vld [vmem:[%s4052 + $0x10] sm:$0xff]
    %v4056 = vld [vmem:[%s4052 + $0x18] sm:$0xff]
    %v4057 = vld [vmem:[%s4052 + $0x20] sm:$0xff]
    %v4058 = vld [vmem:[%s4052 + $0x28] sm:$0xff]
    %v4059 = vld [vmem:[%s4052 + $0x30] sm:$0xff]
    %v4060 = vld [vmem:[%s4052 + $0x38] sm:$0xff]
    %v4061 = vld [vmem:[%s4052 + $0x40] sm:$0xff]
    %v4062 = vld [vmem:[%s4052 + $0x48] sm:$0xff]
    %v4063 = vld [vmem:[%s4052 + $0x50] sm:$0xff]
    %v4064 = vld [vmem:[%s4052 + $0x58] sm:$0xff]
    %v4065 = vld [vmem:[%s4052 + $0x60] sm:$0xf]
    %s4066 = scalar_lea.vmem [#allocation3], %s4051
    %v4067 = vld [vmem:[%s4066] sm:$0xff]
    %v4068 = vld [vmem:[%s4066 + $0x8] sm:$0xff]
    %v4069 = vld [vmem:[%s4066 + $0x10] sm:$0xff]
    %v4070 = vld [vmem:[%s4066 + $0x18] sm:$0xff]
    %v4071 = vld [vmem:[%s4066 + $0x20] sm:$0xff]
    %v4072 = vld [vmem:[%s4066 + $0x28] sm:$0xff]
    %v4073 = vld [vmem:[%s4066 + $0x30] sm:$0xff]
    %v4074 = vld [vmem:[%s4066 + $0x38] sm:$0xff]
    %v4075 = vld [vmem:[%s4066 + $0x40] sm:$0xff]
    %v4076 = vld [vmem:[%s4066 + $0x48] sm:$0xff]
    %v4077 = vld [vmem:[%s4066 + $0x50] sm:$0xff]
    %v4078 = vld [vmem:[%s4066 + $0x58] sm:$0xff]
    %v4079 = vld [vmem:[%s4066 + $0x60] sm:$0xf]
    %s4080 = scalar_lea.vmem [#allocation4], %s4051
    %v4081 = vld [vmem:[%s4080] sm:$0xff]
    %v4082 = vld [vmem:[%s4080 + $0x8] sm:$0xff]
    %v4083 = vld [vmem:[%s4080 + $0x10] sm:$0xff]
    %v4084 = vld [vmem:[%s4080 + $0x18] sm:$0xff]
    %v4085 = vld [vmem:[%s4080 + $0x20] sm:$0xff]
    %v4086 = vld [vmem:[%s4080 + $0x28] sm:$0xff]
    %v4087 = vld [vmem:[%s4080 + $0x30] sm:$0xff]
    %v4088 = vld [vmem:[%s4080 + $0x38] sm:$0xff]
    %v4089 = vld [vmem:[%s4080 + $0x40] sm:$0xff]
    %v4090 = vld [vmem:[%s4080 + $0x48] sm:$0xff]
    %v4091 = vld [vmem:[%s4080 + $0x50] sm:$0xff]
    %v4092 = vld [vmem:[%s4080 + $0x58] sm:$0xff]
    %v4093 = vld [vmem:[%s4080 + $0x60] sm:$0xf]
    %s4094 = scalar_lea.vmem %s2, %s4050
    %v4095 = vld [vmem:[%s4094] sm:$0x1]
    %v4097 = vlaneseq
    %v4098 = vshrl.u32 %v4097, 7
    %v4099 = vsub.s32 0, %v4098
    %v4100 = vrot.slane %v4095, %v4099
    %v4103 = vsel %vm1963, %v4053, 0
    %v4106 = vsel %vm1963, %v4054, 0
    %v4109 = vsel %vm1963, %v4055, 0
    %v4112 = vsel %vm1963, %v4056, 0
    %v4115 = vsel %vm1963, %v4057, 0
    %v4118 = vsel %vm1963, %v4058, 0
    %v4121 = vsel %vm1963, %v4059, 0
    %v4124 = vsel %vm1963, %v4060, 0
    %v4127 = vsel %vm1963, %v4061, 0
    %v4130 = vsel %vm1963, %v4062, 0
    %v4133 = vsel %vm1963, %v4063, 0
    %v4136 = vsel %vm1963, %v4064, 0
    %v4139 = vsel %vm1963, %v4065, 0
    %v4142 = vsel %vm1963, %v4067, 0
    %v4145 = vsel %vm1963, %v4068, 0
    %v4148 = vsel %vm1963, %v4069, 0
    %v4151 = vsel %vm1963, %v4070, 0
    %v4154 = vsel %vm1963, %v4071, 0
    %v4157 = vsel %vm1963, %v4072, 0
    %v4160 = vsel %vm1963, %v4073, 0
    %v4163 = vsel %vm1963, %v4074, 0
    %v4166 = vsel %vm1963, %v4075, 0
    %v4169 = vsel %vm1963, %v4076, 0
    %v4172 = vsel %vm1963, %v4077, 0
    %v4175 = vsel %vm1963, %v4078, 0
    %v4178 = vsel %vm1963, %v4079, 0
    %4180 = vmatprep.subr.mxu0 0.0
    %4181 = vmatpush1.xpose.msra.mxu0 0.0
    %4182 = vmatprep.subr.mxu0 0.0
    %4183 = vmatpush1.xpose.msra.mxu0 0.0
    %4184 = vmatprep.subr.mxu0 0.0
    %4185 = vmatpush1.xpose.msra.mxu0 0.0
    %4186 = vmatprep.subr.mxu0 0.0
    %4187 = vmatpush1.xpose.msra.mxu0 %v4178
    %4188 = vmatprep.subr.mxu0 0.0
    %4189 = vmatpush1.xpose.msra.mxu0 %v4175
    %4190 = vmatprep.subr.mxu0 0.0
    %4191 = vmatpush1.xpose.msra.mxu0 %v4172
    %4192 = vmatprep.subr.mxu0 0.0
    %4193 = vmatpush1.xpose.msra.mxu0 %v4169
    %4194 = vmatprep.subr.mxu0 0.0
    %4195 = vmatpush1.xpose.msra.mxu0 %v4166
    %4196 = vmatprep.subr.mxu0 0.0
    %4197 = vmatpush1.xpose.msra.mxu0 %v4163
    %4198 = vmatprep.subr.mxu0 0.0
    %4199 = vmatpush1.xpose.msra.mxu0 %v4160
    %4200 = vmatprep.subr.mxu0 0.0
    %4201 = vmatpush1.xpose.msra.mxu0 %v4157
    %4202 = vmatprep.subr.mxu0 0.0
    %4203 = vmatpush1.xpose.msra.mxu0 %v4154
    %4204 = vmatprep.subr.mxu0 0.0
    %4205 = vmatpush1.xpose.msra.mxu0 %v4151
    %4206 = vmatprep.subr.mxu0 0.0
    %4207 = vmatpush1.xpose.msra.mxu0 %v4148
    %4208 = vmatprep.subr.mxu0 0.0
    %4209 = vmatpush1.xpose.msra.mxu0 %v4145
    %4210 = vmatprep.subr.mxu0 0.0
    %4211 = vmatpush1.xpose.msra.mxu0 %v4142
    %4212 = vmatprep.subr.mxu0 0.0
    %4213 = vmatpush2.xpose.msra.mxu0 0.0
    %4214 = vmatprep.subr.mxu0 0.0
    %4215 = vmatpush2.xpose.msra.mxu0 0.0
    %4216 = vmatprep.subr.mxu0 0.0
    %4217 = vmatpush2.xpose.msra.mxu0 0.0
    %4218 = vmatprep.subr.mxu0 0.0
    %4219 = vmatpush2.xpose.msra.mxu0 0.0
    %4220 = vmatprep.subr.mxu0 0.0
    %4221 = vmatpush2.xpose.msra.mxu0 0.0
    %4222 = vmatprep.subr.mxu0 0.0
    %4223 = vmatpush2.xpose.msra.mxu0 0.0
    %4224 = vmatprep.subr.mxu0 0.0
    %4225 = vmatpush2.xpose.msra.mxu0 0.0
    %4226 = vmatprep.subr.mxu0 0.0
    %4227 = vmatpush2.xpose.msra.mxu0 0.0
    %4228 = vmatprep.subr.mxu0 0.0
    %4229 = vmatpush2.xpose.msra.mxu0 0.0
    %4230 = vmatprep.subr.mxu0 0.0
    %4231 = vmatpush2.xpose.msra.mxu0 0.0
    %4232 = vmatprep.subr.mxu0 0.0
    %4233 = vmatpush2.xpose.msra.mxu0 0.0
    %4234 = vmatprep.subr.mxu0 0.0
    %4235 = vmatpush2.xpose.msra.mxu0 0.0
    %4236 = vmatprep.subr.mxu0 0.0
    %4237 = vmatpush2.xpose.msra.mxu0 0.0
    %4238 = vmatprep.subr.mxu0 0.0
    %4239 = vmatpush2.xpose.msra.mxu0 0.0
    %4240 = vmatprep.subr.mxu0 0.0
    %4241 = vmatpush2.xpose.msra.mxu0 0.0
    %4242 = vmatprep.subr.mxu0 0.0
    %4243 = vmatpush2.xpose.msra.mxu0 0.0
    %4244 = vmatprep.mubr.f32.mxu0 0.0
    %4245 = vmatmul.mubr.f32.gmra.mxu0 %v4103
    %v4246 = vpop.f32.mrf.mxu0
    %v4247 = vadd.f32 %v4100, %v4246
    %v4248 = vpop.f32.mrf.mxu0
    %4249 = vmatprep.mubr.f32.mxu0 0.0
    %4250 = vmatmul.mubr.f32.gmra.mxu0 %v4106
    %v4251 = vpop.f32.mrf.mxu0
    %v4252 = vadd.f32 %v4100, %v4251
    %v4253 = vpop.f32.mrf.mxu0
    %4254 = vmatprep.mubr.f32.mxu0 0.0
    %4255 = vmatmul.mubr.f32.gmra.mxu0 %v4109
    %v4256 = vpop.f32.mrf.mxu0
    %v4257 = vadd.f32 %v4100, %v4256
    %v4258 = vpop.f32.mrf.mxu0
    %4259 = vmatprep.mubr.f32.mxu0 0.0
    %4260 = vmatmul.mubr.f32.gmra.mxu0 %v4112
    %v4261 = vpop.f32.mrf.mxu0
    %v4262 = vadd.f32 %v4100, %v4261
    %v4263 = vpop.f32.mrf.mxu0
    %4264 = vmatprep.mubr.f32.mxu0 0.0
    %4265 = vmatmul.mubr.f32.gmra.mxu0 %v4115
    %v4266 = vpop.f32.mrf.mxu0
    %v4267 = vadd.f32 %v4100, %v4266
    %v4268 = vpop.f32.mrf.mxu0
    %4269 = vmatprep.mubr.f32.mxu0 0.0
    %4270 = vmatmul.mubr.f32.gmra.mxu0 %v4118
    %v4271 = vpop.f32.mrf.mxu0
    %v4272 = vadd.f32 %v4100, %v4271
    %v4273 = vpop.f32.mrf.mxu0
    %4274 = vmatprep.mubr.f32.mxu0 0.0
    %4275 = vmatmul.mubr.f32.gmra.mxu0 %v4121
    %v4276 = vpop.f32.mrf.mxu0
    %v4277 = vadd.f32 %v4100, %v4276
    %v4278 = vpop.f32.mrf.mxu0
    %4279 = vmatprep.mubr.f32.mxu0 0.0
    %4280 = vmatmul.mubr.f32.gmra.mxu0 %v4124
    %v4281 = vpop.f32.mrf.mxu0
    %v4282 = vadd.f32 %v4100, %v4281
    %v4283 = vpop.f32.mrf.mxu0
    %4284 = vmatprep.mubr.f32.mxu0 0.0
    %4285 = vmatmul.mubr.f32.gmra.mxu0 %v4127
    %v4286 = vpop.f32.mrf.mxu0
    %v4287 = vadd.f32 %v4100, %v4286
    %v4288 = vpop.f32.mrf.mxu0
    %4289 = vmatprep.mubr.f32.mxu0 0.0
    %4290 = vmatmul.mubr.f32.gmra.mxu0 %v4130
    %v4291 = vpop.f32.mrf.mxu0
    %v4292 = vadd.f32 %v4100, %v4291
    %v4293 = vpop.f32.mrf.mxu0
    %4294 = vmatprep.mubr.f32.mxu0 0.0
    %4295 = vmatmul.mubr.f32.gmra.mxu0 %v4133
    %v4296 = vpop.f32.mrf.mxu0
    %v4297 = vadd.f32 %v4100, %v4296
    %v4298 = vpop.f32.mrf.mxu0
    %4299 = vmatprep.mubr.f32.mxu0 0.0
    %4300 = vmatmul.mubr.f32.gmra.mxu0 %v4136
    %v4301 = vpop.f32.mrf.mxu0
    %v4302 = vadd.f32 %v4100, %v4301
    %v4303 = vpop.f32.mrf.mxu0
    %4304 = vmatprep.mubr.f32.mxu0 0.0
    %4305 = vmatmul.mubr.f32.gmra.mxu0 %v4139
    %v4306 = vpop.f32.mrf.mxu0
    %v4307 = vadd.f32 %v4100, %v4306
    %v4308 = vpop.f32.mrf.mxu0
    %4309 = vdwg.mxu0
    %vm4310 = vcmask 818176
    %v4311 = vsel %vm4310, %v4247, -inf
    %4312 = vmax.xlane.f32.xlu0 %v4311
    %v4313 = vpop.xlane.xlu0 %4312
    %v4314 = vsel %vm4310, %v4252, -inf
    %4315 = vmax.xlane.f32.xlu0 %v4314
    %v4316 = vpop.xlane.xlu0 %4315
    %v4317 = vsel %vm4310, %v4257, -inf
    %4318 = vmax.xlane.f32.xlu0 %v4317
    %v4319 = vpop.xlane.xlu0 %4318
    %v4320 = vsel %vm4310, %v4262, -inf
    %4321 = vmax.xlane.f32.xlu0 %v4320
    %v4322 = vpop.xlane.xlu0 %4321
    %v4323 = vsel %vm4310, %v4267, -inf
    %4324 = vmax.xlane.f32.xlu0 %v4323
    %v4325 = vpop.xlane.xlu0 %4324
    %v4326 = vsel %vm4310, %v4272, -inf
    %4327 = vmax.xlane.f32.xlu0 %v4326
    %v4328 = vpop.xlane.xlu0 %4327
    %v4329 = vsel %vm4310, %v4277, -inf
    %4330 = vmax.xlane.f32.xlu0 %v4329
    %v4331 = vpop.xlane.xlu0 %4330
    %v4332 = vsel %vm4310, %v4282, -inf
    %4333 = vmax.xlane.f32.xlu0 %v4332
    %v4334 = vpop.xlane.xlu0 %4333
    %v4335 = vsel %vm4310, %v4287, -inf
    %4336 = vmax.xlane.f32.xlu0 %v4335
    %v4337 = vpop.xlane.xlu0 %4336
    %v4338 = vsel %vm4310, %v4292, -inf
    %4339 = vmax.xlane.f32.xlu0 %v4338
    %v4340 = vpop.xlane.xlu0 %4339
    %v4341 = vsel %vm4310, %v4297, -inf
    %4342 = vmax.xlane.f32.xlu0 %v4341
    %v4343 = vpop.xlane.xlu0 %4342
    %v4344 = vsel %vm4310, %v4302, -inf
    %4345 = vmax.xlane.f32.xlu0 %v4344
    %v4346 = vpop.xlane.xlu0 %4345
    %vm4347 = vcmask 814080
    %v4348 = vsel %vm4347, %v4307, -inf
    %4349 = vmax.xlane.f32.xlu0 %v4348
    %v4350 = vpop.xlane.xlu0 %4349
    %v4351 = vsub.f32 %v4247, %v4313
    %v4352 = vsub.f32 %v4252, %v4316
    %v4353 = vsub.f32 %v4257, %v4319
    %v4354 = vsub.f32 %v4262, %v4322
    %v4355 = vsub.f32 %v4267, %v4325
    %v4356 = vsub.f32 %v4272, %v4328
    %v4357 = vsub.f32 %v4277, %v4331
    %v4358 = vsub.f32 %v4282, %v4334
    %v4359 = vsub.f32 %v4287, %v4337
    %v4360 = vsub.f32 %v4292, %v4340
    %v4361 = vsub.f32 %v4297, %v4343
    %v4362 = vsub.f32 %v4302, %v4346
    %v4363 = vsub.f32 %v4307, %v4350
    %v4364 = vmul.f32 %v4351, 1.442695
    %v4365 = vpow.pop %v4364
    %v4366 = vmul.f32 %v4352, 1.442695
    %v4367 = vpow.pop %v4366
    %v4368 = vmul.f32 %v4353, 1.442695
    %v4369 = vpow.pop %v4368
    %v4370 = vmul.f32 %v4354, 1.442695
    %v4371 = vpow.pop %v4370
    %v4372 = vmul.f32 %v4355, 1.442695
    %v4373 = vpow.pop %v4372
    %v4374 = vmul.f32 %v4356, 1.442695
    %v4375 = vpow.pop %v4374
    %v4376 = vmul.f32 %v4357, 1.442695
    %v4377 = vpow.pop %v4376
    %v4378 = vmul.f32 %v4358, 1.442695
    %v4379 = vpow.pop %v4378
    %v4380 = vmul.f32 %v4359, 1.442695
    %v4381 = vpow.pop %v4380
    %v4382 = vmul.f32 %v4360, 1.442695
    %v4383 = vpow.pop %v4382
    %v4384 = vmul.f32 %v4361, 1.442695
    %v4385 = vpow.pop %v4384
    %v4386 = vmul.f32 %v4362, 1.442695
    %v4387 = vpow.pop %v4386
    %v4388 = vmul.f32 %v4363, 1.442695
    %v4389 = vpow.pop %v4388
    %v4390 = vsel %vm4310, %v4365, 0.0
    %4391 = vadd.xlane.f32.xlu0 %v4390
    %v4392 = vpop.xlane.xlu0 %4391
    %v4393 = vsel %vm4310, %v4367, 0.0
    %4394 = vadd.xlane.f32.xlu0 %v4393
    %v4395 = vpop.xlane.xlu0 %4394
    %v4396 = vsel %vm4310, %v4369, 0.0
    %4397 = vadd.xlane.f32.xlu0 %v4396
    %v4398 = vpop.xlane.xlu0 %4397
    %v4399 = vsel %vm4310, %v4371, 0.0
    %4400 = vadd.xlane.f32.xlu0 %v4399
    %v4401 = vpop.xlane.xlu0 %4400
    %v4402 = vsel %vm4310, %v4373, 0.0
    %4403 = vadd.xlane.f32.xlu0 %v4402
    %v4404 = vpop.xlane.xlu0 %4403
    %v4405 = vsel %vm4310, %v4375, 0.0
    %4406 = vadd.xlane.f32.xlu0 %v4405
    %v4407 = vpop.xlane.xlu0 %4406
    %v4408 = vsel %vm4310, %v4377, 0.0
    %4409 = vadd.xlane.f32.xlu0 %v4408
    %v4410 = vpop.xlane.xlu0 %4409
    %v4411 = vsel %vm4310, %v4379, 0.0
    %4412 = vadd.xlane.f32.xlu0 %v4411
    %v4413 = vpop.xlane.xlu0 %4412
    %v4414 = vsel %vm4310, %v4381, 0.0
    %4415 = vadd.xlane.f32.xlu0 %v4414
    %v4416 = vpop.xlane.xlu0 %4415
    %v4417 = vsel %vm4310, %v4383, 0.0
    %4418 = vadd.xlane.f32.xlu0 %v4417
    %v4419 = vpop.xlane.xlu0 %4418
    %v4420 = vsel %vm4310, %v4385, 0.0
    %4421 = vadd.xlane.f32.xlu0 %v4420
    %v4422 = vpop.xlane.xlu0 %4421
    %v4423 = vsel %vm4310, %v4387, 0.0
    %4424 = vadd.xlane.f32.xlu0 %v4423
    %v4425 = vpop.xlane.xlu0 %4424
    %v4426 = vsel %vm4347, %v4389, 0.0
    %4427 = vadd.xlane.f32.xlu0 %v4426
    %v4428 = vpop.xlane.xlu0 %4427
    %v4430 = vsel %vm4310, %v4365, 0
    %v4433 = vsel %vm4310, %v4367, 0
    %v4436 = vsel %vm4310, %v4369, 0
    %v4439 = vsel %vm4310, %v4371, 0
    %v4442 = vsel %vm4310, %v4373, 0
    %v4445 = vsel %vm4310, %v4375, 0
    %v4448 = vsel %vm4310, %v4377, 0
    %v4451 = vsel %vm4310, %v4379, 0
    %v4454 = vsel %vm4310, %v4381, 0
    %v4457 = vsel %vm4310, %v4383, 0
    %v4460 = vsel %vm4310, %v4385, 0
    %v4463 = vsel %vm4310, %v4387, 0
    %v4466 = vsel %vm4310, %v4389, 0
    %vm4468 = vcmask 1043456
    %v4470 = vsel %vm4468, %v4093, 0
    %4472 = vmatprep.subr.mxu0 0.0
    %4473 = vmatpush1.msra.mxu0 0.0
    %4474 = vmatprep.subr.mxu0 0.0
    %4475 = vmatpush1.msra.mxu0 0.0
    %4476 = vmatprep.subr.mxu0 0.0
    %4477 = vmatpush1.msra.mxu0 0.0
    %4478 = vmatprep.subr.mxu0 0.0
    %4479 = vmatpush1.msra.mxu0 %v4470
    %4480 = vmatprep.subr.mxu0 0.0
    %4481 = vmatpush1.msra.mxu0 %v4092
    %4482 = vmatprep.subr.mxu0 0.0
    %4483 = vmatpush1.msra.mxu0 %v4091
    %4484 = vmatprep.subr.mxu0 0.0
    %4485 = vmatpush1.msra.mxu0 %v4090
    %4486 = vmatprep.subr.mxu0 0.0
    %4487 = vmatpush1.msra.mxu0 %v4089
    %4488 = vmatprep.subr.mxu0 0.0
    %4489 = vmatpush1.msra.mxu0 %v4088
    %4490 = vmatprep.subr.mxu0 0.0
    %4491 = vmatpush1.msra.mxu0 %v4087
    %4492 = vmatprep.subr.mxu0 0.0
    %4493 = vmatpush1.msra.mxu0 %v4086
    %4494 = vmatprep.subr.mxu0 0.0
    %4495 = vmatpush1.msra.mxu0 %v4085
    %4496 = vmatprep.subr.mxu0 0.0
    %4497 = vmatpush1.msra.mxu0 %v4084
    %4498 = vmatprep.subr.mxu0 0.0
    %4499 = vmatpush1.msra.mxu0 %v4083
    %4500 = vmatprep.subr.mxu0 0.0
    %4501 = vmatpush1.msra.mxu0 %v4082
    %4502 = vmatprep.subr.mxu0 0.0
    %4503 = vmatpush1.msra.mxu0 %v4081
    %4504 = vmatprep.subr.mxu0 0.0
    %4505 = vmatpush2.msra.mxu0 0.0
    %4506 = vmatprep.subr.mxu0 0.0
    %4507 = vmatpush2.msra.mxu0 0.0
    %4508 = vmatprep.subr.mxu0 0.0
    %4509 = vmatpush2.msra.mxu0 0.0
    %4510 = vmatprep.subr.mxu0 0.0
    %4511 = vmatpush2.msra.mxu0 0.0
    %4512 = vmatprep.subr.mxu0 0.0
    %4513 = vmatpush2.msra.mxu0 0.0
    %4514 = vmatprep.subr.mxu0 0.0
    %4515 = vmatpush2.msra.mxu0 0.0
    %4516 = vmatprep.subr.mxu0 0.0
    %4517 = vmatpush2.msra.mxu0 0.0
    %4518 = vmatprep.subr.mxu0 0.0
    %4519 = vmatpush2.msra.mxu0 0.0
    %4520 = vmatprep.subr.mxu0 0.0
    %4521 = vmatpush2.msra.mxu0 0.0
    %4522 = vmatprep.subr.mxu0 0.0
    %4523 = vmatpush2.msra.mxu0 0.0
    %4524 = vmatprep.subr.mxu0 0.0
    %4525 = vmatpush2.msra.mxu0 0.0
    %4526 = vmatprep.subr.mxu0 0.0
    %4527 = vmatpush2.msra.mxu0 0.0
    %4528 = vmatprep.subr.mxu0 0.0
    %4529 = vmatpush2.msra.mxu0 0.0
    %4530 = vmatprep.subr.mxu0 0.0
    %4531 = vmatpush2.msra.mxu0 0.0
    %4532 = vmatprep.subr.mxu0 0.0
    %4533 = vmatpush2.msra.mxu0 0.0
    %4534 = vmatprep.subr.mxu0 0.0
    %4535 = vmatpush2.msra.mxu0 0.0
    %4536 = vmatprep.mubr.f32.mxu0 0.0
    %4537 = vmatmul.mubr.f32.gmra.mxu0 %v4430
    %v4538 = vpop.f32.mrf.mxu0
    %v4539 = vadd.f32 0.0, %v4538
    %v4540 = vpop.f32.mrf.mxu0
    %4541 = vmatprep.mubr.f32.mxu0 0.0
    %4542 = vmatmul.mubr.f32.gmra.mxu0 %v4433
    %v4543 = vpop.f32.mrf.mxu0
    %v4544 = vadd.f32 0.0, %v4543
    %v4545 = vpop.f32.mrf.mxu0
    %4546 = vmatprep.mubr.f32.mxu0 0.0
    %4547 = vmatmul.mubr.f32.gmra.mxu0 %v4436
    %v4548 = vpop.f32.mrf.mxu0
    %v4549 = vadd.f32 0.0, %v4548
    %v4550 = vpop.f32.mrf.mxu0
    %4551 = vmatprep.mubr.f32.mxu0 0.0
    %4552 = vmatmul.mubr.f32.gmra.mxu0 %v4439
    %v4553 = vpop.f32.mrf.mxu0
    %v4554 = vadd.f32 0.0, %v4553
    %v4555 = vpop.f32.mrf.mxu0
    %4556 = vmatprep.mubr.f32.mxu0 0.0
    %4557 = vmatmul.mubr.f32.gmra.mxu0 %v4442
    %v4558 = vpop.f32.mrf.mxu0
    %v4559 = vadd.f32 0.0, %v4558
    %v4560 = vpop.f32.mrf.mxu0
    %4561 = vmatprep.mubr.f32.mxu0 0.0
    %4562 = vmatmul.mubr.f32.gmra.mxu0 %v4445
    %v4563 = vpop.f32.mrf.mxu0
    %v4564 = vadd.f32 0.0, %v4563
    %v4565 = vpop.f32.mrf.mxu0
    %4566 = vmatprep.mubr.f32.mxu0 0.0
    %4567 = vmatmul.mubr.f32.gmra.mxu0 %v4448
    %v4568 = vpop.f32.mrf.mxu0
    %v4569 = vadd.f32 0.0, %v4568
    %v4570 = vpop.f32.mrf.mxu0
    %4571 = vmatprep.mubr.f32.mxu0 0.0
    %4572 = vmatmul.mubr.f32.gmra.mxu0 %v4451
    %v4573 = vpop.f32.mrf.mxu0
    %v4574 = vadd.f32 0.0, %v4573
    %v4575 = vpop.f32.mrf.mxu0
    %4576 = vmatprep.mubr.f32.mxu0 0.0
    %4577 = vmatmul.mubr.f32.gmra.mxu0 %v4454
    %v4578 = vpop.f32.mrf.mxu0
    %v4579 = vadd.f32 0.0, %v4578
    %v4580 = vpop.f32.mrf.mxu0
    %4581 = vmatprep.mubr.f32.mxu0 0.0
    %4582 = vmatmul.mubr.f32.gmra.mxu0 %v4457
    %v4583 = vpop.f32.mrf.mxu0
    %v4584 = vadd.f32 0.0, %v4583
    %v4585 = vpop.f32.mrf.mxu0
    %4586 = vmatprep.mubr.f32.mxu0 0.0
    %4587 = vmatmul.mubr.f32.gmra.mxu0 %v4460
    %v4588 = vpop.f32.mrf.mxu0
    %v4589 = vadd.f32 0.0, %v4588
    %v4590 = vpop.f32.mrf.mxu0
    %4591 = vmatprep.mubr.f32.mxu0 0.0
    %4592 = vmatmul.mubr.f32.gmra.mxu0 %v4463
    %v4593 = vpop.f32.mrf.mxu0
    %v4594 = vadd.f32 0.0, %v4593
    %v4595 = vpop.f32.mrf.mxu0
    %4596 = vmatprep.mubr.f32.mxu0 0.0
    %4597 = vmatmul.mubr.f32.gmra.mxu0 %v4466
    %v4598 = vpop.f32.mrf.mxu0
    %v4599 = vadd.f32 0.0, %v4598
    %v4600 = vpop.f32.mrf.mxu0
    %4601 = vdwg.mxu0
    %v4602 = vrcp.pop %v4392
    %v4603 = vrcp.pop %v4395
    %v4604 = vrcp.pop %v4398
    %v4605 = vrcp.pop %v4401
    %v4606 = vrcp.pop %v4404
    %v4607 = vrcp.pop %v4407
    %v4608 = vrcp.pop %v4410
    %v4609 = vrcp.pop %v4413
    %v4610 = vrcp.pop %v4416
    %v4611 = vrcp.pop %v4419
    %v4612 = vrcp.pop %v4422
    %v4613 = vrcp.pop %v4425
    %v4614 = vrcp.pop %v4428
    %v4615 = vmul.f32 %v4539, %v4602
    %v4616 = vmul.f32 %v4544, %v4603
    %v4617 = vmul.f32 %v4549, %v4604
    %v4618 = vmul.f32 %v4554, %v4605
    %v4619 = vmul.f32 %v4559, %v4606
    %v4620 = vmul.f32 %v4564, %v4607
    %v4621 = vmul.f32 %v4569, %v4608
    %v4622 = vmul.f32 %v4574, %v4609
    %v4623 = vmul.f32 %v4579, %v4610
    %v4624 = vmul.f32 %v4584, %v4611
    %v4625 = vmul.f32 %v4589, %v4612
    %v4626 = vmul.f32 %v4594, %v4613
    %v4627 = vmul.f32 %v4599, %v4614
    %s4628 = smul.u32 %s4050, 104
    %s4629 = scalar_lea.vmem %s3, %s4628
    %4630 = vst.msk [vmem:[%s4629] sm:$0xff] %vm1963, %v4615
    %4631 = vst.msk [vmem:[%s4629 + $0x8] sm:$0xff] %vm1963, %v4616
    %4632 = vst.msk [vmem:[%s4629 + $0x10] sm:$0xff] %vm1963, %v4617
    %4633 = vst.msk [vmem:[%s4629 + $0x18] sm:$0xff] %vm1963, %v4618
    %4634 = vst.msk [vmem:[%s4629 + $0x20] sm:$0xff] %vm1963, %v4619
    %4635 = vst.msk [vmem:[%s4629 + $0x28] sm:$0xff] %vm1963, %v4620
    %4636 = vst.msk [vmem:[%s4629 + $0x30] sm:$0xff] %vm1963, %v4621
    %4637 = vst.msk [vmem:[%s4629 + $0x38] sm:$0xff] %vm1963, %v4622
    %4638 = vst.msk [vmem:[%s4629 + $0x40] sm:$0xff] %vm1963, %v4623
    %4639 = vst.msk [vmem:[%s4629 + $0x48] sm:$0xff] %vm1963, %v4624
    %4640 = vst.msk [vmem:[%s4629 + $0x50] sm:$0xff] %vm1963, %v4625
    %4641 = vst.msk [vmem:[%s4629 + $0x58] sm:$0xff] %vm1963, %v4626
    %vm4642 = vcmask 125952
    %4643 = vst.msk [vmem:[%s4629 + $0x60] sm:$0xf] %vm4642, %v4627
    %s4644 = sadd.s32 %s4050, 1
    %s4645 = smul.u32 %s4644, 104
    %s4646 = scalar_lea.vmem [#allocation2], %s4645
    %v4647 = vld [vmem:[%s4646] sm:$0xff]
    %v4648 = vld [vmem:[%s4646 + $0x8] sm:$0xff]
    %v4649 = vld [vmem:[%s4646 + $0x10] sm:$0xff]
    %v4650 = vld [vmem:[%s4646 + $0x18] sm:$0xff]
    %v4651 = vld [vmem:[%s4646 + $0x20] sm:$0xff]
    %v4652 = vld [vmem:[%s4646 + $0x28] sm:$0xff]
    %v4653 = vld [vmem:[%s4646 + $0x30] sm:$0xff]
    %v4654 = vld [vmem:[%s4646 + $0x38] sm:$0xff]
    %v4655 = vld [vmem:[%s4646 + $0x40] sm:$0xff]
    %v4656 = vld [vmem:[%s4646 + $0x48] sm:$0xff]
    %v4657 = vld [vmem:[%s4646 + $0x50] sm:$0xff]
    %v4658 = vld [vmem:[%s4646 + $0x58] sm:$0xff]
    %v4659 = vld [vmem:[%s4646 + $0x60] sm:$0xf]
    %s4660 = scalar_lea.vmem [#allocation3], %s4645
    %v4661 = vld [vmem:[%s4660] sm:$0xff]
    %v4662 = vld [vmem:[%s4660 + $0x8] sm:$0xff]
    %v4663 = vld [vmem:[%s4660 + $0x10] sm:$0xff]
    %v4664 = vld [vmem:[%s4660 + $0x18] sm:$0xff]
    %v4665 = vld [vmem:[%s4660 + $0x20] sm:$0xff]
    %v4666 = vld [vmem:[%s4660 + $0x28] sm:$0xff]
    %v4667 = vld [vmem:[%s4660 + $0x30] sm:$0xff]
    %v4668 = vld [vmem:[%s4660 + $0x38] sm:$0xff]
    %v4669 = vld [vmem:[%s4660 + $0x40] sm:$0xff]
    %v4670 = vld [vmem:[%s4660 + $0x48] sm:$0xff]
    %v4671 = vld [vmem:[%s4660 + $0x50] sm:$0xff]
    %v4672 = vld [vmem:[%s4660 + $0x58] sm:$0xff]
    %v4673 = vld [vmem:[%s4660 + $0x60] sm:$0xf]
    %s4674 = scalar_lea.vmem [#allocation4], %s4645
    %v4675 = vld [vmem:[%s4674] sm:$0xff]
    %v4676 = vld [vmem:[%s4674 + $0x8] sm:$0xff]
    %v4677 = vld [vmem:[%s4674 + $0x10] sm:$0xff]
    %v4678 = vld [vmem:[%s4674 + $0x18] sm:$0xff]
    %v4679 = vld [vmem:[%s4674 + $0x20] sm:$0xff]
    %v4680 = vld [vmem:[%s4674 + $0x28] sm:$0xff]
    %v4681 = vld [vmem:[%s4674 + $0x30] sm:$0xff]
    %v4682 = vld [vmem:[%s4674 + $0x38] sm:$0xff]
    %v4683 = vld [vmem:[%s4674 + $0x40] sm:$0xff]
    %v4684 = vld [vmem:[%s4674 + $0x48] sm:$0xff]
    %v4685 = vld [vmem:[%s4674 + $0x50] sm:$0xff]
    %v4686 = vld [vmem:[%s4674 + $0x58] sm:$0xff]
    %v4687 = vld [vmem:[%s4674 + $0x60] sm:$0xf]
    %s4688 = scalar_lea.vmem %s2, %s4644
    %v4689 = vld [vmem:[%s4688] sm:$0x1]
    %v4691 = vlaneseq
    %v4692 = vshrl.u32 %v4691, 7
    %v4693 = vsub.s32 0, %v4692
    %v4694 = vrot.slane %v4689, %v4693
    %v4697 = vsel %vm1963, %v4647, 0
    %v4700 = vsel %vm1963, %v4648, 0
    %v4703 = vsel %vm1963, %v4649, 0
    %v4706 = vsel %vm1963, %v4650, 0
    %v4709 = vsel %vm1963, %v4651, 0
    %v4712 = vsel %vm1963, %v4652, 0
    %v4715 = vsel %vm1963, %v4653, 0
    %v4718 = vsel %vm1963, %v4654, 0
    %v4721 = vsel %vm1963, %v4655, 0
    %v4724 = vsel %vm1963, %v4656, 0
    %v4727 = vsel %vm1963, %v4657, 0
    %v4730 = vsel %vm1963, %v4658, 0
    %v4733 = vsel %vm1963, %v4659, 0
    %v4736 = vsel %vm1963, %v4661, 0
    %v4739 = vsel %vm1963, %v4662, 0
    %v4742 = vsel %vm1963, %v4663, 0
    %v4745 = vsel %vm1963, %v4664, 0
    %v4748 = vsel %vm1963, %v4665, 0
    %v4751 = vsel %vm1963, %v4666, 0
    %v4754 = vsel %vm1963, %v4667, 0
    %v4757 = vsel %vm1963, %v4668, 0
    %v4760 = vsel %vm1963, %v4669, 0
    %v4763 = vsel %vm1963, %v4670, 0
    %v4766 = vsel %vm1963, %v4671, 0
    %v4769 = vsel %vm1963, %v4672, 0
    %v4772 = vsel %vm1963, %v4673, 0
    %4774 = vmatprep.subr.mxu0 0.0
    %4775 = vmatpush1.xpose.msra.mxu0 0.0
    %4776 = vmatprep.subr.mxu0 0.0
    %4777 = vmatpush1.xpose.msra.mxu0 0.0
    %4778 = vmatprep.subr.mxu0 0.0
    %4779 = vmatpush1.xpose.msra.mxu0 0.0
    %4780 = vmatprep.subr.mxu0 0.0
    %4781 = vmatpush1.xpose.msra.mxu0 %v4772
    %4782 = vmatprep.subr.mxu0 0.0
    %4783 = vmatpush1.xpose.msra.mxu0 %v4769
    %4784 = vmatprep.subr.mxu0 0.0
    %4785 = vmatpush1.xpose.msra.mxu0 %v4766
    %4786 = vmatprep.subr.mxu0 0.0
    %4787 = vmatpush1.xpose.msra.mxu0 %v4763
    %4788 = vmatprep.subr.mxu0 0.0
    %4789 = vmatpush1.xpose.msra.mxu0 %v4760
    %4790 = vmatprep.subr.mxu0 0.0
    %4791 = vmatpush1.xpose.msra.mxu0 %v4757
    %4792 = vmatprep.subr.mxu0 0.0
    %4793 = vmatpush1.xpose.msra.mxu0 %v4754
    %4794 = vmatprep.subr.mxu0 0.0
    %4795 = vmatpush1.xpose.msra.mxu0 %v4751
    %4796 = vmatprep.subr.mxu0 0.0
    %4797 = vmatpush1.xpose.msra.mxu0 %v4748
    %4798 = vmatprep.subr.mxu0 0.0
    %4799 = vmatpush1.xpose.msra.mxu0 %v4745
    %4800 = vmatprep.subr.mxu0 0.0
    %4801 = vmatpush1.xpose.msra.mxu0 %v4742
    %4802 = vmatprep.subr.mxu0 0.0
    %4803 = vmatpush1.xpose.msra.mxu0 %v4739
    %4804 = vmatprep.subr.mxu0 0.0
    %4805 = vmatpush1.xpose.msra.mxu0 %v4736
    %4806 = vmatprep.subr.mxu0 0.0
    %4807 = vmatpush2.xpose.msra.mxu0 0.0
    %4808 = vmatprep.subr.mxu0 0.0
    %4809 = vmatpush2.xpose.msra.mxu0 0.0
    %4810 = vmatprep.subr.mxu0 0.0
    %4811 = vmatpush2.xpose.msra.mxu0 0.0
    %4812 = vmatprep.subr.mxu0 0.0
    %4813 = vmatpush2.xpose.msra.mxu0 0.0
    %4814 = vmatprep.subr.mxu0 0.0
    %4815 = vmatpush2.xpose.msra.mxu0 0.0
    %4816 = vmatprep.subr.mxu0 0.0
    %4817 = vmatpush2.xpose.msra.mxu0 0.0
    %4818 = vmatprep.subr.mxu0 0.0
    %4819 = vmatpush2.xpose.msra.mxu0 0.0
    %4820 = vmatprep.subr.mxu0 0.0
    %4821 = vmatpush2.xpose.msra.mxu0 0.0
    %4822 = vmatprep.subr.mxu0 0.0
    %4823 = vmatpush2.xpose.msra.mxu0 0.0
    %4824 = vmatprep.subr.mxu0 0.0
    %4825 = vmatpush2.xpose.msra.mxu0 0.0
    %4826 = vmatprep.subr.mxu0 0.0
    %4827 = vmatpush2.xpose.msra.mxu0 0.0
    %4828 = vmatprep.subr.mxu0 0.0
    %4829 = vmatpush2.xpose.msra.mxu0 0.0
    %4830 = vmatprep.subr.mxu0 0.0
    %4831 = vmatpush2.xpose.msra.mxu0 0.0
    %4832 = vmatprep.subr.mxu0 0.0
    %4833 = vmatpush2.xpose.msra.mxu0 0.0
    %4834 = vmatprep.subr.mxu0 0.0
    %4835 = vmatpush2.xpose.msra.mxu0 0.0
    %4836 = vmatprep.subr.mxu0 0.0
    %4837 = vmatpush2.xpose.msra.mxu0 0.0
    %4838 = vmatprep.mubr.f32.mxu0 0.0
    %4839 = vmatmul.mubr.f32.gmra.mxu0 %v4697
    %v4840 = vpop.f32.mrf.mxu0
    %v4841 = vadd.f32 %v4694, %v4840
    %v4842 = vpop.f32.mrf.mxu0
    %4843 = vmatprep.mubr.f32.mxu0 0.0
    %4844 = vmatmul.mubr.f32.gmra.mxu0 %v4700
    %v4845 = vpop.f32.mrf.mxu0
    %v4846 = vadd.f32 %v4694, %v4845
    %v4847 = vpop.f32.mrf.mxu0
    %4848 = vmatprep.mubr.f32.mxu0 0.0
    %4849 = vmatmul.mubr.f32.gmra.mxu0 %v4703
    %v4850 = vpop.f32.mrf.mxu0
    %v4851 = vadd.f32 %v4694, %v4850
    %v4852 = vpop.f32.mrf.mxu0
    %4853 = vmatprep.mubr.f32.mxu0 0.0
    %4854 = vmatmul.mubr.f32.gmra.mxu0 %v4706
    %v4855 = vpop.f32.mrf.mxu0
    %v4856 = vadd.f32 %v4694, %v4855
    %v4857 = vpop.f32.mrf.mxu0
    %4858 = vmatprep.mubr.f32.mxu0 0.0
    %4859 = vmatmul.mubr.f32.gmra.mxu0 %v4709
    %v4860 = vpop.f32.mrf.mxu0
    %v4861 = vadd.f32 %v4694, %v4860
    %v4862 = vpop.f32.mrf.mxu0
    %4863 = vmatprep.mubr.f32.mxu0 0.0
    %4864 = vmatmul.mubr.f32.gmra.mxu0 %v4712
    %v4865 = vpop.f32.mrf.mxu0
    %v4866 = vadd.f32 %v4694, %v4865
    %v4867 = vpop.f32.mrf.mxu0
    %4868 = vmatprep.mubr.f32.mxu0 0.0
    %4869 = vmatmul.mubr.f32.gmra.mxu0 %v4715
    %v4870 = vpop.f32.mrf.mxu0
    %v4871 = vadd.f32 %v4694, %v4870
    %v4872 = vpop.f32.mrf.mxu0
    %4873 = vmatprep.mubr.f32.mxu0 0.0
    %4874 = vmatmul.mubr.f32.gmra.mxu0 %v4718
    %v4875 = vpop.f32.mrf.mxu0
    %v4876 = vadd.f32 %v4694, %v4875
    %v4877 = vpop.f32.mrf.mxu0
    %4878 = vmatprep.mubr.f32.mxu0 0.0
    %4879 = vmatmul.mubr.f32.gmra.mxu0 %v4721
    %v4880 = vpop.f32.mrf.mxu0
    %v4881 = vadd.f32 %v4694, %v4880
    %v4882 = vpop.f32.mrf.mxu0
    %4883 = vmatprep.mubr.f32.mxu0 0.0
    %4884 = vmatmul.mubr.f32.gmra.mxu0 %v4724
    %v4885 = vpop.f32.mrf.mxu0
    %v4886 = vadd.f32 %v4694, %v4885
    %v4887 = vpop.f32.mrf.mxu0
    %4888 = vmatprep.mubr.f32.mxu0 0.0
    %4889 = vmatmul.mubr.f32.gmra.mxu0 %v4727
    %v4890 = vpop.f32.mrf.mxu0
    %v4891 = vadd.f32 %v4694, %v4890
    %v4892 = vpop.f32.mrf.mxu0
    %4893 = vmatprep.mubr.f32.mxu0 0.0
    %4894 = vmatmul.mubr.f32.gmra.mxu0 %v4730
    %v4895 = vpop.f32.mrf.mxu0
    %v4896 = vadd.f32 %v4694, %v4895
    %v4897 = vpop.f32.mrf.mxu0
    %4898 = vmatprep.mubr.f32.mxu0 0.0
    %4899 = vmatmul.mubr.f32.gmra.mxu0 %v4733
    %v4900 = vpop.f32.mrf.mxu0
    %v4901 = vadd.f32 %v4694, %v4900
    %v4902 = vpop.f32.mrf.mxu0
    %4903 = vdwg.mxu0
    %v4904 = vsel %vm4310, %v4841, -inf
    %4905 = vmax.xlane.f32.xlu0 %v4904
    %v4906 = vpop.xlane.xlu0 %4905
    %v4907 = vsel %vm4310, %v4846, -inf
    %4908 = vmax.xlane.f32.xlu0 %v4907
    %v4909 = vpop.xlane.xlu0 %4908
    %v4910 = vsel %vm4310, %v4851, -inf
    %4911 = vmax.xlane.f32.xlu0 %v4910
    %v4912 = vpop.xlane.xlu0 %4911
    %v4913 = vsel %vm4310, %v4856, -inf
    %4914 = vmax.xlane.f32.xlu0 %v4913
    %v4915 = vpop.xlane.xlu0 %4914
    %v4916 = vsel %vm4310, %v4861, -inf
    %4917 = vmax.xlane.f32.xlu0 %v4916
    %v4918 = vpop.xlane.xlu0 %4917
    %v4919 = vsel %vm4310, %v4866, -inf
    %4920 = vmax.xlane.f32.xlu0 %v4919
    %v4921 = vpop.xlane.xlu0 %4920
    %v4922 = vsel %vm4310, %v4871, -inf
    %4923 = vmax.xlane.f32.xlu0 %v4922
    %v4924 = vpop.xlane.xlu0 %4923
    %v4925 = vsel %vm4310, %v4876, -inf
    %4926 = vmax.xlane.f32.xlu0 %v4925
    %v4927 = vpop.xlane.xlu0 %4926
    %v4928 = vsel %vm4310, %v4881, -inf
    %4929 = vmax.xlane.f32.xlu0 %v4928
    %v4930 = vpop.xlane.xlu0 %4929
    %v4931 = vsel %vm4310, %v4886, -inf
    %4932 = vmax.xlane.f32.xlu0 %v4931
    %v4933 = vpop.xlane.xlu0 %4932
    %v4934 = vsel %vm4310, %v4891, -inf
    %4935 = vmax.xlane.f32.xlu0 %v4934
    %v4936 = vpop.xlane.xlu0 %4935
    %v4937 = vsel %vm4310, %v4896, -inf
    %4938 = vmax.xlane.f32.xlu0 %v4937
    %v4939 = vpop.xlane.xlu0 %4938
    %v4940 = vsel %vm4347, %v4901, -inf
    %4941 = vmax.xlane.f32.xlu0 %v4940
    %v4942 = vpop.xlane.xlu0 %4941
    %v4943 = vsub.f32 %v4841, %v4906
    %v4944 = vsub.f32 %v4846, %v4909
    %v4945 = vsub.f32 %v4851, %v4912
    %v4946 = vsub.f32 %v4856, %v4915
    %v4947 = vsub.f32 %v4861, %v4918
    %v4948 = vsub.f32 %v4866, %v4921
    %v4949 = vsub.f32 %v4871, %v4924
    %v4950 = vsub.f32 %v4876, %v4927
    %v4951 = vsub.f32 %v4881, %v4930
    %v4952 = vsub.f32 %v4886, %v4933
    %v4953 = vsub.f32 %v4891, %v4936
    %v4954 = vsub.f32 %v4896, %v4939
    %v4955 = vsub.f32 %v4901, %v4942
    %v4956 = vmul.f32 %v4943, 1.442695
    %v4957 = vpow.pop %v4956
    %v4958 = vmul.f32 %v4944, 1.442695
    %v4959 = vpow.pop %v4958
    %v4960 = vmul.f32 %v4945, 1.442695
    %v4961 = vpow.pop %v4960
    %v4962 = vmul.f32 %v4946, 1.442695
    %v4963 = vpow.pop %v4962
    %v4964 = vmul.f32 %v4947, 1.442695
    %v4965 = vpow.pop %v4964
    %v4966 = vmul.f32 %v4948, 1.442695
    %v4967 = vpow.pop %v4966
    %v4968 = vmul.f32 %v4949, 1.442695
    %v4969 = vpow.pop %v4968
    %v4970 = vmul.f32 %v4950, 1.442695
    %v4971 = vpow.pop %v4970
    %v4972 = vmul.f32 %v4951, 1.442695
    %v4973 = vpow.pop %v4972
    %v4974 = vmul.f32 %v4952, 1.442695
    %v4975 = vpow.pop %v4974
    %v4976 = vmul.f32 %v4953, 1.442695
    %v4977 = vpow.pop %v4976
    %v4978 = vmul.f32 %v4954, 1.442695
    %v4979 = vpow.pop %v4978
    %v4980 = vmul.f32 %v4955, 1.442695
    %v4981 = vpow.pop %v4980
    %v4982 = vsel %vm4310, %v4957, 0.0
    %4983 = vadd.xlane.f32.xlu0 %v4982
    %v4984 = vpop.xlane.xlu0 %4983
    %v4985 = vsel %vm4310, %v4959, 0.0
    %4986 = vadd.xlane.f32.xlu0 %v4985
    %v4987 = vpop.xlane.xlu0 %4986
    %v4988 = vsel %vm4310, %v4961, 0.0
    %4989 = vadd.xlane.f32.xlu0 %v4988
    %v4990 = vpop.xlane.xlu0 %4989
    %v4991 = vsel %vm4310, %v4963, 0.0
    %4992 = vadd.xlane.f32.xlu0 %v4991
    %v4993 = vpop.xlane.xlu0 %4992
    %v4994 = vsel %vm4310, %v4965, 0.0
    %4995 = vadd.xlane.f32.xlu0 %v4994
    %v4996 = vpop.xlane.xlu0 %4995
    %v4997 = vsel %vm4310, %v4967, 0.0
    %4998 = vadd.xlane.f32.xlu0 %v4997
    %v4999 = vpop.xlane.xlu0 %4998
    %v5000 = vsel %vm4310, %v4969, 0.0
    %5001 = vadd.xlane.f32.xlu0 %v5000
    %v5002 = vpop.xlane.xlu0 %5001
    %v5003 = vsel %vm4310, %v4971, 0.0
    %5004 = vadd.xlane.f32.xlu0 %v5003
    %v5005 = vpop.xlane.xlu0 %5004
    %v5006 = vsel %vm4310, %v4973, 0.0
    %5007 = vadd.xlane.f32.xlu0 %v5006
    %v5008 = vpop.xlane.xlu0 %5007
    %v5009 = vsel %vm4310, %v4975, 0.0
    %5010 = vadd.xlane.f32.xlu0 %v5009
    %v5011 = vpop.xlane.xlu0 %5010
    %v5012 = vsel %vm4310, %v4977, 0.0
    %5013 = vadd.xlane.f32.xlu0 %v5012
    %v5014 = vpop.xlane.xlu0 %5013
    %v5015 = vsel %vm4310, %v4979, 0.0
    %5016 = vadd.xlane.f32.xlu0 %v5015
    %v5017 = vpop.xlane.xlu0 %5016
    %v5018 = vsel %vm4347, %v4981, 0.0
    %5019 = vadd.xlane.f32.xlu0 %v5018
    %v5020 = vpop.xlane.xlu0 %5019
    %v5022 = vsel %vm4310, %v4957, 0
    %v5025 = vsel %vm4310, %v4959, 0
    %v5028 = vsel %vm4310, %v4961, 0
    %v5031 = vsel %vm4310, %v4963, 0
    %v5034 = vsel %vm4310, %v4965, 0
    %v5037 = vsel %vm4310, %v4967, 0
    %v5040 = vsel %vm4310, %v4969, 0
    %v5043 = vsel %vm4310, %v4971, 0
    %v5046 = vsel %vm4310, %v4973, 0
    %v5049 = vsel %vm4310, %v4975, 0
    %v5052 = vsel %vm4310, %v4977, 0
    %v5055 = vsel %vm4310, %v4979, 0
    %v5058 = vsel %vm4310, %v4981, 0
    %v5061 = vsel %vm4468, %v4687, 0
    %5063 = vmatprep.subr.mxu0 0.0
    %5064 = vmatpush1.msra.mxu0 0.0
    %5065 = vmatprep.subr.mxu0 0.0
    %5066 = vmatpush1.msra.mxu0 0.0
    %5067 = vmatprep.subr.mxu0 0.0
    %5068 = vmatpush1.msra.mxu0 0.0
    %5069 = vmatprep.subr.mxu0 0.0
    %5070 = vmatpush1.msra.mxu0 %v5061
    %5071 = vmatprep.subr.mxu0 0.0
    %5072 = vmatpush1.msra.mxu0 %v4686
    %5073 = vmatprep.subr.mxu0 0.0
    %5074 = vmatpush1.msra.mxu0 %v4685
    %5075 = vmatprep.subr.mxu0 0.0
    %5076 = vmatpush1.msra.mxu0 %v4684
    %5077 = vmatprep.subr.mxu0 0.0
    %5078 = vmatpush1.msra.mxu0 %v4683
    %5079 = vmatprep.subr.mxu0 0.0
    %5080 = vmatpush1.msra.mxu0 %v4682
    %5081 = vmatprep.subr.mxu0 0.0
    %5082 = vmatpush1.msra.mxu0 %v4681
    %5083 = vmatprep.subr.mxu0 0.0
    %5084 = vmatpush1.msra.mxu0 %v4680
    %5085 = vmatprep.subr.mxu0 0.0
    %5086 = vmatpush1.msra.mxu0 %v4679
    %5087 = vmatprep.subr.mxu0 0.0
    %5088 = vmatpush1.msra.mxu0 %v4678
    %5089 = vmatprep.subr.mxu0 0.0
    %5090 = vmatpush1.msra.mxu0 %v4677
    %5091 = vmatprep.subr.mxu0 0.0
    %5092 = vmatpush1.msra.mxu0 %v4676
    %5093 = vmatprep.subr.mxu0 0.0
    %5094 = vmatpush1.msra.mxu0 %v4675
    %5095 = vmatprep.subr.mxu0 0.0
    %5096 = vmatpush2.msra.mxu0 0.0
    %5097 = vmatprep.subr.mxu0 0.0
    %5098 = vmatpush2.msra.mxu0 0.0
    %5099 = vmatprep.subr.mxu0 0.0
    %5100 = vmatpush2.msra.mxu0 0.0
    %5101 = vmatprep.subr.mxu0 0.0
    %5102 = vmatpush2.msra.mxu0 0.0
    %5103 = vmatprep.subr.mxu0 0.0
    %5104 = vmatpush2.msra.mxu0 0.0
    %5105 = vmatprep.subr.mxu0 0.0
    %5106 = vmatpush2.msra.mxu0 0.0
    %5107 = vmatprep.subr.mxu0 0.0
    %5108 = vmatpush2.msra.mxu0 0.0
    %5109 = vmatprep.subr.mxu0 0.0
    %5110 = vmatpush2.msra.mxu0 0.0
    %5111 = vmatprep.subr.mxu0 0.0
    %5112 = vmatpush2.msra.mxu0 0.0
    %5113 = vmatprep.subr.mxu0 0.0
    %5114 = vmatpush2.msra.mxu0 0.0
    %5115 = vmatprep.subr.mxu0 0.0
    %5116 = vmatpush2.msra.mxu0 0.0
    %5117 = vmatprep.subr.mxu0 0.0
    %5118 = vmatpush2.msra.mxu0 0.0
    %5119 = vmatprep.subr.mxu0 0.0
    %5120 = vmatpush2.msra.mxu0 0.0
    %5121 = vmatprep.subr.mxu0 0.0
    %5122 = vmatpush2.msra.mxu0 0.0
    %5123 = vmatprep.subr.mxu0 0.0
    %5124 = vmatpush2.msra.mxu0 0.0
    %5125 = vmatprep.subr.mxu0 0.0
    %5126 = vmatpush2.msra.mxu0 0.0
    %5127 = vmatprep.mubr.f32.mxu0 0.0
    %5128 = vmatmul.mubr.f32.gmra.mxu0 %v5022
    %v5129 = vpop.f32.mrf.mxu0
    %v5130 = vadd.f32 0.0, %v5129
    %v5131 = vpop.f32.mrf.mxu0
    %5132 = vmatprep.mubr.f32.mxu0 0.0
    %5133 = vmatmul.mubr.f32.gmra.mxu0 %v5025
    %v5134 = vpop.f32.mrf.mxu0
    %v5135 = vadd.f32 0.0, %v5134
    %v5136 = vpop.f32.mrf.mxu0
    %5137 = vmatprep.mubr.f32.mxu0 0.0
    %5138 = vmatmul.mubr.f32.gmra.mxu0 %v5028
    %v5139 = vpop.f32.mrf.mxu0
    %v5140 = vadd.f32 0.0, %v5139
    %v5141 = vpop.f32.mrf.mxu0
    %5142 = vmatprep.mubr.f32.mxu0 0.0
    %5143 = vmatmul.mubr.f32.gmra.mxu0 %v5031
    %v5144 = vpop.f32.mrf.mxu0
    %v5145 = vadd.f32 0.0, %v5144
    %v5146 = vpop.f32.mrf.mxu0
    %5147 = vmatprep.mubr.f32.mxu0 0.0
    %5148 = vmatmul.mubr.f32.gmra.mxu0 %v5034
    %v5149 = vpop.f32.mrf.mxu0
    %v5150 = vadd.f32 0.0, %v5149
    %v5151 = vpop.f32.mrf.mxu0
    %5152 = vmatprep.mubr.f32.mxu0 0.0
    %5153 = vmatmul.mubr.f32.gmra.mxu0 %v5037
    %v5154 = vpop.f32.mrf.mxu0
    %v5155 = vadd.f32 0.0, %v5154
    %v5156 = vpop.f32.mrf.mxu0
    %5157 = vmatprep.mubr.f32.mxu0 0.0
    %5158 = vmatmul.mubr.f32.gmra.mxu0 %v5040
    %v5159 = vpop.f32.mrf.mxu0
    %v5160 = vadd.f32 0.0, %v5159
    %v5161 = vpop.f32.mrf.mxu0
    %5162 = vmatprep.mubr.f32.mxu0 0.0
    %5163 = vmatmul.mubr.f32.gmra.mxu0 %v5043
    %v5164 = vpop.f32.mrf.mxu0
    %v5165 = vadd.f32 0.0, %v5164
    %v5166 = vpop.f32.mrf.mxu0
    %5167 = vmatprep.mubr.f32.mxu0 0.0
    %5168 = vmatmul.mubr.f32.gmra.mxu0 %v5046
    %v5169 = vpop.f32.mrf.mxu0
    %v5170 = vadd.f32 0.0, %v5169
    %v5171 = vpop.f32.mrf.mxu0
    %5172 = vmatprep.mubr.f32.mxu0 0.0
    %5173 = vmatmul.mubr.f32.gmra.mxu0 %v5049
    %v5174 = vpop.f32.mrf.mxu0
    %v5175 = vadd.f32 0.0, %v5174
    %v5176 = vpop.f32.mrf.mxu0
    %5177 = vmatprep.mubr.f32.mxu0 0.0
    %5178 = vmatmul.mubr.f32.gmra.mxu0 %v5052
    %v5179 = vpop.f32.mrf.mxu0
    %v5180 = vadd.f32 0.0, %v5179
    %v5181 = vpop.f32.mrf.mxu0
    %5182 = vmatprep.mubr.f32.mxu0 0.0
    %5183 = vmatmul.mubr.f32.gmra.mxu0 %v5055
    %v5184 = vpop.f32.mrf.mxu0
    %v5185 = vadd.f32 0.0, %v5184
    %v5186 = vpop.f32.mrf.mxu0
    %5187 = vmatprep.mubr.f32.mxu0 0.0
    %5188 = vmatmul.mubr.f32.gmra.mxu0 %v5058
    %v5189 = vpop.f32.mrf.mxu0
    %v5190 = vadd.f32 0.0, %v5189
    %v5191 = vpop.f32.mrf.mxu0
    %5192 = vdwg.mxu0
    %v5193 = vrcp.pop %v4984
    %v5194 = vrcp.pop %v4987
    %v5195 = vrcp.pop %v4990
    %v5196 = vrcp.pop %v4993
    %v5197 = vrcp.pop %v4996
    %v5198 = vrcp.pop %v4999
    %v5199 = vrcp.pop %v5002
    %v5200 = vrcp.pop %v5005
    %v5201 = vrcp.pop %v5008
    %v5202 = vrcp.pop %v5011
    %v5203 = vrcp.pop %v5014
    %v5204 = vrcp.pop %v5017
    %v5205 = vrcp.pop %v5020
    %v5206 = vmul.f32 %v5130, %v5193
    %v5207 = vmul.f32 %v5135, %v5194
    %v5208 = vmul.f32 %v5140, %v5195
    %v5209 = vmul.f32 %v5145, %v5196
    %v5210 = vmul.f32 %v5150, %v5197
    %v5211 = vmul.f32 %v5155, %v5198
    %v5212 = vmul.f32 %v5160, %v5199
    %v5213 = vmul.f32 %v5165, %v5200
    %v5214 = vmul.f32 %v5170, %v5201
    %v5215 = vmul.f32 %v5175, %v5202
    %v5216 = vmul.f32 %v5180, %v5203
    %v5217 = vmul.f32 %v5185, %v5204
    %v5218 = vmul.f32 %v5190, %v5205
    %s5219 = scalar_lea.vmem %s3, %s4645
    %5220 = vst.msk [vmem:[%s5219] sm:$0xff] %vm1963, %v5206
    %5221 = vst.msk [vmem:[%s5219 + $0x8] sm:$0xff] %vm1963, %v5207
    %5222 = vst.msk [vmem:[%s5219 + $0x10] sm:$0xff] %vm1963, %v5208
    %5223 = vst.msk [vmem:[%s5219 + $0x18] sm:$0xff] %vm1963, %v5209
    %5224 = vst.msk [vmem:[%s5219 + $0x20] sm:$0xff] %vm1963, %v5210
    %5225 = vst.msk [vmem:[%s5219 + $0x28] sm:$0xff] %vm1963, %v5211
    %5226 = vst.msk [vmem:[%s5219 + $0x30] sm:$0xff] %vm1963, %v5212
    %5227 = vst.msk [vmem:[%s5219 + $0x38] sm:$0xff] %vm1963, %v5213
    %5228 = vst.msk [vmem:[%s5219 + $0x40] sm:$0xff] %vm1963, %v5214
    %5229 = vst.msk [vmem:[%s5219 + $0x48] sm:$0xff] %vm1963, %v5215
    %5230 = vst.msk [vmem:[%s5219 + $0x50] sm:$0xff] %vm1963, %v5216
    %5231 = vst.msk [vmem:[%s5219 + $0x58] sm:$0xff] %vm1963, %v5217
    %5232 = vst.msk [vmem:[%s5219 + $0x60] sm:$0xf] %vm4642, %v5218
  $region18: #{tpu_custom_call.1} parent=0 // loop_footer
    %s4049 = sadd.s32 1, %s4045
  $region19: #{tpu_custom_call.1} parent=0 // loop_footer_branch
    %4044 = sbr.rel target = $region15
  $region20: #{tpu_custom_call.1} parent=0 // loop_exit
    _
  // Predicated region
  $region21: #{tpu_custom_call.1} parent=0 // pred_check
    _
  $region22: #{tpu_custom_call.1} parent=0 // pred_check_branch
    %5234 = sbr.rel (0) target = $region24
  $region23: #{tpu_custom_call.1} parent=0 // pred_region
    _
  $region24: #{tpu_custom_call.1} parent=0 // pred_fallthru
    _
  // Predicated region
  $region25: #{tpu_custom_call.1} parent=0 // pred_check
    _
  $region26: #{tpu_custom_call.1} parent=0 // pred_check_branch
    %5236 = sbr.rel (0) target = $region28
  $region27: #{tpu_custom_call.1} parent=0 // pred_region
    _
  $region28: #{tpu_custom_call.1} parent=0 // pred_fallthru
    _

</llo_original>
